<compile_context>
chip_gen: v6e
topology: v6e:2x2x1
jax: 0.10.0
libtpu: 0.0.40
codegen_flags: <defaults>
</compile_context>

<pallas_src>
import numpy as np
import jax
import jax.numpy as jnp
from jax.experimental import pallas as pl
from jax.experimental.pallas import tpu as pltpu

# ---------------- problem configuration (mirrors ising / args) ---------------
N_GRID        = 8            # args.n  -> n x n Ising grid
STATE_DIM     = 32           # args.state_dim (per-R0-region embedding dim)
HIDDEN_DIM    = 32           # hidden width of GeneralizedInferenceNetwork MLP
R0_ELMT_SIZE  = 4            # 2x2 plaquette -> mlp_out_dim = 2**4 = 16
MLP_OUT       = 2 ** R0_ELMT_SIZE
AGREEMENT_PEN = 10.0         # args.agreement_pen
PAD_LANES     = 8            # lane padding for the tiny 4-/2-state tensors

# big-endian bit table for a 4-node plaquette: BIT[k, s] = bit of member k in state s
BIT4 = np.zeros((4, 16), np.float32)
for k in range(4):
    for s in range(16):
        BIT4[k, s] = (s >> (3 - k)) & 1


def _pad8(n):
    return ((n + 7) // 8) * 8


def _m16to4(pu, pv):
    """Marginalisation matrix: 16-state plaquette -> 4-state pair (2*bit_u + bit_v)."""
    M = np.zeros((16, 4), np.float32)
    for s in range(16):
        M[s, int(2 * BIT4[pu, s] + BIT4[pv, s])] = 1.0
    return M


def _m4to2(p):
    """Marginalisation matrix: 4-state edge -> 2-state node (p = position in edge)."""
    M = np.zeros((4, 2), np.float32)
    for s in range(4):
        M[s, (s >> (1 - p)) & 1] = 1.0
    return M


# ------------------------- region graph construction -------------------------
# (replaces ising.generate_region_graph() — plain numpy glue, no networkx)
def build_region_graph(n):
    n2 = n * n
    nid = lambda i, j: i * n + j

    plaq = []
    for i in range(n - 1):
        for j in range(n - 1):
            plaq.append([nid(i, j), nid(i, j + 1), nid(i + 1, j), nid(i + 1, j + 1)])
    plaq = np.array(plaq, np.int32)                    # (R0, 4)
    R0 = plaq.shape[0]

    edges = []                                         # binary_idx
    for i in range(n):
        for j in range(n):
            if j + 1 < n: edges.append((nid(i, j), nid(i, j + 1)))
            if i + 1 < n: edges.append((nid(i, j), nid(i + 1, j)))
    edges = np.array(edges, np.int32)                  # (E, 2)
    E = edges.shape[0]

    node_count = np.zeros(n2, np.int32)
    for r in range(R0):
        for k in range(4):
            node_count[plaq[r, k]] += 1

    # edge -> containing plaquettes (with positions)
    cont_by_edge = {}
    for e in range(E):
        u, v = int(edges[e, 0]), int(edges[e, 1])
        for r in range(R0):
            mem = [int(m) for m in plaq[r]]
            if u in mem and v in mem:
                cont_by_edge.setdefault(e, []).append((r, mem.index(u), mem.index(v)))
    edge_count = np.array([len(cont_by_edge[e]) for e in range(E)], np.int32)

    # flattened containment arrays for read_marginals (binary marginals)
    cont_e, cont_r, cont_M, cont_w = [], [], [], []
    for e in range(E):
        for (r, pu, pv) in cont_by_edge[e]:
            cont_e.append(e); cont_r.append(r)
            cont_M.append(_m16to4(pu, pv)); cont_w.append(1.0 / edge_count[e])

    # R1 regions: edges shared by exactly two plaquettes
    r1_edge_ids = [e for e in range(E) if edge_count[e] == 2]
    R1 = len(r1_edge_ids)
    r1_parents = np.zeros((R1, 2), np.int32)
    r1_M = np.zeros((R1, 2, 16, 4), np.float32)
    node_in_r1 = {}
    for i, e in enumerate(r1_edge_ids):
        lst = cont_by_edge[e]
        for p in range(2):
            r, pu, pv = lst[p]
            r1_parents[i, p] = r
            r1_M[i, p] = _m16to4(pu, pv)
        u, v = int(edges[e, 0]), int(edges[e, 1])
        node_in_r1.setdefault(u, []).append((i, 0))
        node_in_r1.setdefault(v, []).append((i, 1))

    # R2 regions: interior nodes (contained in 4 shared edges)
    r2_nodes = sorted(v for v, lst in node_in_r1.items() if len(lst) >= 2)
    R2 = len(r2_nodes)
    r2_parents = np.zeros((R2, 4), np.int32)
    r2_M = np.zeros((R2, 4, 4, 2), np.float32)
    for i, v in enumerate(r2_nodes):
        lst = node_in_r1[v]
        assert len(lst) == 4
        for p, (r1i, pos) in enumerate(lst):
            r2_parents[i, p] = r1i
            r2_M[i, p] = _m4to2(pos)

    return dict(
        n=n, n2=n2, R0=R0, R1=R1, R2=R2, num_edges=E,
        plaq=plaq, edges=edges, node_count=node_count, edge_count=edge_count,
        cont_e=np.array(cont_e, np.int32), cont_r=np.array(cont_r, np.int32),
        cont_M=np.stack(cont_M), cont_w=np.array(cont_w, np.float32),
        r1_parents=r1_parents, r1_M=r1_M, r2_parents=r2_parents, r2_M=r2_M,
    )


def build_log_phi(rg, theta, J_vals):
    """log_phi for each R0 region; node/edge factors split over containing regions."""
    plaq, edges = rg["plaq"], rg["edges"]
    J_map, ecnt_map = {}, {}
    for e in range(rg["num_edges"]):
        key = (int(edges[e, 0]), int(edges[e, 1]))
        J_map[key] = float(J_vals[e])
        ecnt_map[key] = int(rg["edge_count"][e])
    x = 2.0 * BIT4 - 1.0                               # spins in {-1,+1}
    log_phi = np.zeros((rg["R0"], 16), np.float32)
    for r in range(rg["R0"]):
        for k in range(4):
            node = int(plaq[r, k])
            log_phi[r] += theta[node] * x[k] / rg["node_count"][node]
        for (ku, kv) in [(0, 1), (2, 3), (0, 2), (1, 3)]:
            u, v = int(plaq[r, ku]), int(plaq[r, kv])
            key = (min(u, v), max(u, v))
            log_phi[r] += J_map[key] * x[ku] * x[kv] / ecnt_map[key]
    return log_phi


# -------------- host precomputation: fold gathers into constant matmuls --------------
def build_fused_operands(rg, log_phi0):
    """Bake region-graph gathers + per-(region,parent) marginalisations into
    constant 0/1 select-and-marginalise matrices so the kernel only does matmuls."""
    R0, R1, R2 = rg["R0"], rg["R1"], rg["R2"]
    R0P, R1P, R2P = _pad8(R0), _pad8(R1), _pad8(R2)

    def type_id(M, types):
        for t, Mt in enumerate(types):
            if np.array_equal(M, Mt):
                return t
        types.append(np.array(M, np.float32))
        return len(types) - 1

    # ---- level 1 (shared edges, 2 parents each, 16 -> 4 marginalisation) ----
    m1_types = []
    t1_idx = np.zeros((R1, 2), np.int32)
    for i in range(R1):
        for p in range(2):
            t1_idx[i, p] = type_id(rg["r1_M"][i, p], m1_types)
    T1 = len(m1_types)
    sel1 = [np.zeros((2 * R1P, R0P), np.float32) for _ in range(T1)]
    for i in range(R1):
        for p in range(2):
            sel1[t1_idx[i, p]][p * R1P + i, rg["r1_parents"][i, p]] = 1.0
    m1_pad = []
    for M in m1_types:                                  # (16,4) -> (16, PAD_LANES)
        Mp = np.zeros((MLP_OUT, PAD_LANES), np.float32)
        Mp[:, :4] = M
        m1_pad.append(Mp)

    # ---- level 2 (interior nodes, 4 parents each, 4 -> 2 marginalisation) ----
    m2_types = []
    t2_idx = np.zeros((R2, 4), np.int32)
    for i in range(R2):
        for p in range(4):
            t2_idx[i, p] = type_id(rg["r2_M"][i, p], m2_types)
    T2 = len(m2_types)
    sel2 = [np.zeros((4 * R2P, R1P), np.float32) for _ in range(T2)]
    for i in range(R2):
        for p in range(4):
            sel2[t2_idx[i, p]][p * R2P + i, rg["r2_parents"][i, p]] = 1.0
    m2_pad = []
    for M in m2_types:                                  # (4,2) -> (PAD_LANES, PAD_LANES)
        Mp = np.zeros((PAD_LANES, PAD_LANES), np.float32)
        Mp[:4, :2] = M
        m2_pad.append(Mp)

    mask0 = np.zeros((R0P, 1), np.float32)
    mask0[:R0] = 1.0
    logphi_p = np.zeros((R0P, MLP_OUT), np.float32)
    logphi_p[:R0] = log_phi0

    consts = dict(
        logphi=jnp.asarray(logphi_p), mask0=jnp.asarray(mask0),
        m1=tuple(jnp.asarray(m) for m in m1_pad),
        s1=tuple(jnp.asarray(s) for s in sel1),
        m2=tuple(jnp.asarray(m) for m in m2_pad),
        s2=tuple(jnp.asarray(s) for s in sel2),
    )
    dims = dict(R0=R0, R1=R1, R2=R2, R0P=R0P, R1P=R1P, R2P=R2P, T1=T1, T2=T2)
    return consts, dims


# ------------------------------- fused Pallas kernel -------------------------------
def make_fused_forward(dims):
    R0P, R1P, R2P = dims["R0P"], dims["R1P"], dims["R2P"]
    T1, T2 = dims["T1"], dims["T2"]

    def kernel(*refs):
        (emb_ref, w1_ref, bias1_ref, w2_ref, bias2_ref, wo_ref, biaso_ref,
         logphi_ref, mask0_ref) = refs[:9]
        pos = 9
        m1_refs = refs[pos:pos + T1]; pos += T1
        s1_refs = refs[pos:pos + T1]; pos += T1
        m2_refs = refs[pos:pos + T2]; pos += T2
        s2_refs = refs[pos:pos + T2]; pos += T2
        b0_ref, scal_ref = refs[pos], refs[pos + 1]

        # ---- per-R0-region inference-net MLP (2 hidden layers, ReLU) + softmax ----
        h = jnp.dot(emb_ref[...], w1_ref[...], preferred_element_type=jnp.float32) + bias1_ref[...]
        h = jnp.maximum(h, 0.0)
        h = jnp.dot(h, w2_ref[...], preferred_element_type=jnp.float32) + bias2_ref[...]
        h = jnp.maximum(h, 0.0)
        logits = jnp.dot(h, wo_ref[...], preferred_element_type=jnp.float32) + biaso_ref[...]
        logits = logits - jnp.max(logits, axis=-1, keepdims=True)
        z = jnp.exp(logits)
        b0 = z * pl.reciprocal(jnp.sum(z, axis=-1, keepdims=True), approx=True)
        b0_ref[...] = b0

        # ---- Kikuchi energy: R0 term (counting number +1, padded rows masked) ----
        logb0 = jnp.log(jnp.maximum(b0, 1e-8))
        e0 = jnp.sum(mask0_ref[...] * b0 * (logb0 - logphi_ref[...]))

        # ---- level-1 children (shared edges): parent marginals via constant
        #      select-and-marginalise matmuls (graph gather baked on the host) ----
        pm1 = jnp.zeros((2 * R1P, PAD_LANES), jnp.float32)
        for t in range(T1):
            q = jnp.dot(b0, m1_refs[t][...], preferred_element_type=jnp.float32)
            pm1 = pm1 + jnp.dot(s1_refs[t][...], q, preferred_element_type=jnp.float32)
        pm1_0 = pm1[:R1P]
        pm1_1 = pm1[R1P:]
        b1 = 0.5 * (pm1_0 + pm1_1)                       # child belief = mean over parents
        e1 = -jnp.sum(b1 * jnp.log(jnp.maximum(b1, 1e-8)))          # counting number -1
        # TODO(synk): per-pair squared-L2 consistency (unweighted), matching the
        # previous implementation; verify against the torch encoder's exact penalty.
        consist = jnp.sum((pm1_0 - b1) ** 2) + jnp.sum((pm1_1 - b1) ** 2)

        # ---- level-2 children (interior nodes) ----
        pm2 = jnp.zeros((4 * R2P, PAD_LANES), jnp.float32)
        for t in range(T2):
            q2 = jnp.dot(b1, m2_refs[t][...], preferred_element_type=jnp.float32)
            pm2 = pm2 + jnp.dot(s2_refs[t][...], q2, preferred_element_type=jnp.float32)
        b2 = 0.25 * (pm2[:R2P] + pm2[R2P:2 * R2P] + pm2[2 * R2P:3 * R2P] + pm2[3 * R2P:])
        e2 = jnp.sum(b2 * jnp.log(jnp.maximum(b2, 1e-8)))           # counting number +1
        for p in range(4):
            consist = consist + jnp.sum((pm2[p * R2P:(p + 1) * R2P] - b2) ** 2)

        energy = e0 + e1 + e2

        # pack both scalars into one lane-dense (1, 128) output
        lane = jax.lax.broadcasted_iota(jnp.int32, (1, 128), 1)
        scal_ref[...] = jnp.where(lane == 0, energy,
                                  jnp.where(lane == 1, consist, 0.0))

    def full2d(shape):
        return pl.BlockSpec(shape, lambda i: (0, 0))

    def call(params, consts):
        args = (params["emb"], params["w1"], params["b1"], params["w2"],
                params["b2"], params["wo"], params["bo"],
                consts["logphi"], consts["mask0"],
                *consts["m1"], *consts["s1"], *consts["m2"], *consts["s2"])
        in_specs = [full2d(tuple(a.shape)) for a in args]
        return pl.pallas_call(
            kernel,
            out_shape=(jax.ShapeDtypeStruct((R0P, MLP_OUT), jnp.float32),
                       jax.ShapeDtypeStruct((1, 128), jnp.float32)),
            grid_spec=pltpu.PrefetchScalarGridSpec(
                num_scalar_prefetch=0,
                grid=(1,),                               # single grid step: all in VMEM
                in_specs=in_specs,
                out_specs=[full2d((R0P, MLP_OUT)), full2d((1, 128))],
            ),
            compiler_params=pltpu.CompilerParams(
                dimension_semantics=("arbitrary",)),
        )(*args)

    return call


# --------------------------- marginal read-out (JAX glue) ---------------------------
def read_marginals(b0, graph, n2, num_edges):
    # unary marginals P(x_i = 1), averaged over containing plaquettes
    p1 = b0 @ graph["bit_tab"].T                                    # (R0, 4)
    w = 1.0 / graph["node_count"][graph["plaq"]]
    unary = jnp.zeros(n2, jnp.float32).at[graph["plaq"].reshape(-1)].add((p1 * w).reshape(-1))
    # binary 2x2 marginals for every grid edge, averaged over containments
    pm_e = jnp.einsum("cs,csk->ck", b0[graph["cont_r"]], graph["cont_M"]) * graph["cont_w"][:, None]
    binary = jnp.zeros((num_edges, 4), jnp.float32).at[graph["cont_e"]].add(pm_e)
    return unary, binary.reshape(-1, 2, 2)


# ------------------------------------ main ------------------------------------
if __name__ == "__main__":
    key = jax.random.PRNGKey(0)
    k_th, k_J, k_emb, k_w1, k_w2, k_wo = jax.random.split(key, 6)

    rg = build_region_graph(N_GRID)
    theta = 0.1 * np.asarray(jax.random.normal(k_th, (N_GRID * N_GRID,)), np.float32)
    J_vals = 0.1 * np.asarray(jax.random.normal(k_J, (rg["num_edges"],)), np.float32)
    log_phi0 = build_log_phi(rg, theta, J_vals)

    consts, dims = build_fused_operands(rg, log_phi0)
    fused_call = make_fused_forward(dims)
    R0, R0P = dims["R0"], dims["R0P"]

    # deterministic parameter init (synthetic; GeneralizedInferenceNetwork shapes)
    emb = 0.1 * jax.random.normal(k_emb, (R0, STATE_DIM), jnp.float32)
    params = dict(
        emb=jnp.pad(emb, ((0, R0P - R0), (0, 0))),
        w1=jax.random.normal(k_w1, (STATE_DIM, HIDDEN_DIM), jnp.float32) / np.sqrt(STATE_DIM),
        b1=jnp.zeros((1, HIDDEN_DIM), jnp.float32),
        w2=jax.random.normal(k_w2, (HIDDEN_DIM, HIDDEN_DIM), jnp.float32) / np.sqrt(HIDDEN_DIM),
        b2=jnp.zeros((1, HIDDEN_DIM), jnp.float32),
        wo=jax.random.normal(k_wo, (HIDDEN_DIM, MLP_OUT), jnp.float32) / np.sqrt(HIDDEN_DIM),
        bo=jnp.zeros((1, MLP_OUT), jnp.float32),
    )

    graph = dict(
        plaq=jnp.asarray(rg["plaq"]),
        node_count=jnp.asarray(rg["node_count"], jnp.float32),
        cont_e=jnp.asarray(rg["cont_e"]), cont_r=jnp.asarray(rg["cont_r"]),
        cont_M=jnp.asarray(rg["cont_M"]), cont_w=jnp.asarray(rg["cont_w"]),
        bit_tab=jnp.asarray(BIT4),
    )
    n2, num_edges = rg["n2"], rg["num_edges"]

    # ---- forward(learn_model=False) ----
    # TODO(synk): the inner enc_iters loop (loss.backward() + Adam optimizer.step()
    # with data-dependent early stopping) has no Pallas equivalent; the encoder is
    # evaluated with fixed, deterministically initialised parameters instead.
    unary_marginals_enc = jnp.full((n2,), 0.5, jnp.float32)
    binary_marginals_enc = jnp.full((num_edges, 2, 2), 0.25, jnp.float32)

    @jax.jit
    def run(params, consts, graph, unary_prev, binary_prev):
        b0_full, scal = fused_call(params, consts)       # single fused kernel launch
        kikuchi_energy = scal[0, 0]
        consist_error = scal[0, 1]
        b0 = b0_full[:R0]
        loss = kikuchi_energy + AGREEMENT_PEN * consist_error
        unary_new, binary_new = read_marginals(b0, graph, n2, num_edges)
        delta = (jnp.sqrt(jnp.sum((unary_new - unary_prev) ** 2))
                 + jnp.sqrt(jnp.sum((binary_new[:, 1, 1] - binary_prev[:, 1, 1]) ** 2)))
        return kikuchi_energy, consist_error, loss, delta, unary_new, binary_new, b0

    (kikuchi_energy, consist_error, loss, delta,
     unary_marginals_enc, binary_marginals_enc, b0) = run(
        params, consts, graph, unary_marginals_enc, binary_marginals_enc)

    out = (-kikuchi_energy, unary_marginals_enc, binary_marginals_enc)
    jax.block_until_ready(out)
    jax.block_until_ready((loss, delta))

    # ---- pure-JAX reference of the same forward (sanity / regression check) ----
    def reference(params, rg, log_phi0):
        e = params["emb"][:rg["R0"]]
        h = jnp.maximum(e @ params["w1"] + params["b1"], 0.0)
        h = jnp.maximum(h @ params["w2"] + params["b2"], 0.0)
        b0r = jax.nn.softmax(h @ params["wo"] + params["bo"], axis=-1)
        pm1 = jnp.einsum("rps,rpsk->rpk", b0r[jnp.asarray(rg["r1_parents"])],
                         jnp.asarray(rg["r1_M"]))
        b1r = pm1.mean(1)
        pm2 = jnp.einsum("rps,rpsk->rpk", b1r[jnp.asarray(rg["r2_parents"])],
                         jnp.asarray(rg["r2_M"]))
        b2r = pm2.mean(1)
        lp = jnp.asarray(log_phi0)
        e0 = jnp.sum(b0r * (jnp.log(jnp.maximum(b0r, 1e-8)) - lp))
        e1 = -jnp.sum(b1r * jnp.log(jnp.maximum(b1r, 1e-8)))
        e2 = jnp.sum(b2r * jnp.log(jnp.maximum(b2r, 1e-8)))
        c = jnp.sum((pm1 - b1r[:, None, :]) ** 2) + jnp.sum((pm2 - b2r[:, None, :]) ** 2)
        return e0 + e1 + e2, c

    e_ref, c_ref = reference(params, rg, log_phi0)
    assert np.allclose(np.asarray(kikuchi_energy), np.asarray(e_ref), rtol=5e-2, atol=5e-2), \
        (float(kikuchi_energy), float(e_ref))
    assert np.allclose(np.asarray(consist_error), np.asarray(c_ref), rtol=5e-2, atol=5e-2), \
        (float(consist_error), float(c_ref))

    # basic sanity: beliefs are distributions, marginals in [0,1], energy finite
    assert np.all(np.isfinite(np.asarray(out[0])))
    assert np.allclose(np.asarray(b0).sum(-1), 1.0, atol=1e-2)
    assert np.all((np.asarray(out[1]) >= -1e-5) & (np.asarray(out[1]) <= 1 + 1e-5))
    print("KERNEL_OK")
</pallas_src>

<mosaic_0001>
module attributes {stable_mosaic.version = 11 : i64} {
  func.func @kernel(%arg0: i32, %arg1: memref<56x32xf32, #tpu.memory_space<vmem>>, %arg2: memref<32x32xf32, #tpu.memory_space<vmem>>, %arg3: memref<1x32xf32, #tpu.memory_space<vmem>>, %arg4: memref<32x32xf32, #tpu.memory_space<vmem>>, %arg5: memref<1x32xf32, #tpu.memory_space<vmem>>, %arg6: memref<32x16xf32, #tpu.memory_space<vmem>>, %arg7: memref<1x16xf32, #tpu.memory_space<vmem>>, %arg8: memref<56x16xf32, #tpu.memory_space<vmem>>, %arg9: memref<56x1xf32, #tpu.memory_space<vmem>>, %arg10: memref<16x8xf32, #tpu.memory_space<vmem>>, %arg11: memref<16x8xf32, #tpu.memory_space<vmem>>, %arg12: memref<16x8xf32, #tpu.memory_space<vmem>>, %arg13: memref<16x8xf32, #tpu.memory_space<vmem>>, %arg14: memref<176x56xf32, #tpu.memory_space<vmem>>, %arg15: memref<176x56xf32, #tpu.memory_space<vmem>>, %arg16: memref<176x56xf32, #tpu.memory_space<vmem>>, %arg17: memref<176x56xf32, #tpu.memory_space<vmem>>, %arg18: memref<8x8xf32, #tpu.memory_space<vmem>>, %arg19: memref<8x8xf32, #tpu.memory_space<vmem>>, %arg20: memref<160x88xf32, #tpu.memory_space<vmem>>, %arg21: memref<160x88xf32, #tpu.memory_space<vmem>>, %arg22: memref<56x16xf32, #tpu.memory_space<vmem>>, %arg23: memref<1x128xf32, #tpu.memory_space<vmem>>) attributes {dimension_semantics = [#tpu.dimension_semantics<arbitrary>], iteration_bounds = array<i64: 1>, scalar_prefetch = 0 : i64, scratch_operands = 0 : i64, tpu.core_type = #tpu.core_type<tc>, window_params = [{pipeline_mode = #tpu.pipeline_mode<synchronous>, transform_indices = @transform_0, window_bounds = array<i64: 56, 32>}, {pipeline_mode = #tpu.pipeline_mode<synchronous>, transform_indices = @transform_1, window_bounds = array<i64: 32, 32>}, {pipeline_mode = #tpu.pipeline_mode<synchronous>, transform_indices = @transform_2, window_bounds = array<i64: 1, 32>}, {pipeline_mode = #tpu.pipeline_mode<synchronous>, transform_indices = @transform_3, window_bounds = array<i64: 32, 32>}, {pipeline_mode = #tpu.pipeline_mode<synchronous>, transform_indices = @transform_4, window_bounds = array<i64: 1, 32>}, {pipeline_mode = #tpu.pipeline_mode<synchronous>, transform_indices = @transform_5, window_bounds = array<i64: 32, 16>}, {pipeline_mode = #tpu.pipeline_mode<synchronous>, transform_indices = @transform_6, window_bounds = array<i64: 1, 16>}, {pipeline_mode = #tpu.pipeline_mode<synchronous>, transform_indices = @transform_7, window_bounds = array<i64: 56, 16>}, {pipeline_mode = #tpu.pipeline_mode<synchronous>, transform_indices = @transform_8, window_bounds = array<i64: 56, 1>}, {pipeline_mode = #tpu.pipeline_mode<synchronous>, transform_indices = @transform_9, window_bounds = array<i64: 16, 8>}, {pipeline_mode = #tpu.pipeline_mode<synchronous>, transform_indices = @transform_10, window_bounds = array<i64: 16, 8>}, {pipeline_mode = #tpu.pipeline_mode<synchronous>, transform_indices = @transform_11, window_bounds = array<i64: 16, 8>}, {pipeline_mode = #tpu.pipeline_mode<synchronous>, transform_indices = @transform_12, window_bounds = array<i64: 16, 8>}, {pipeline_mode = #tpu.pipeline_mode<synchronous>, transform_indices = @transform_13, window_bounds = array<i64: 176, 56>}, {pipeline_mode = #tpu.pipeline_mode<synchronous>, transform_indices = @transform_14, window_bounds = array<i64: 176, 56>}, {pipeline_mode = #tpu.pipeline_mode<synchronous>, transform_indices = @transform_15, window_bounds = array<i64: 176, 56>}, {pipeline_mode = #tpu.pipeline_mode<synchronous>, transform_indices = @transform_16, window_bounds = array<i64: 176, 56>}, {pipeline_mode = #tpu.pipeline_mode<synchronous>, transform_indices = @transform_17, window_bounds = array<i64: 8, 8>}, {pipeline_mode = #tpu.pipeline_mode<synchronous>, transform_indices = @transform_18, window_bounds = array<i64: 8, 8>}, {pipeline_mode = #tpu.pipeline_mode<synchronous>, transform_indices = @transform_19, window_bounds = array<i64: 160, 88>}, {pipeline_mode = #tpu.pipeline_mode<synchronous>, transform_indices = @transform_20, window_bounds = array<i64: 160, 88>}, {pipeline_mode = #tpu.pipeline_mode<synchronous>, transform_indices = @transform_21, window_bounds = array<i64: 56, 16>}, {pipeline_mode = #tpu.pipeline_mode<synchronous>, transform_indices = @transform_22, window_bounds = array<i64: 1, 128>}]} {
    %c0 = arith.constant 0 : index
    %c0_0 = arith.constant 0 : index
    %0 = vector.load %arg1[%c0, %c0_0] : memref<56x32xf32, #tpu.memory_space<vmem>>, vector<56x32xf32>
    %c0_1 = arith.constant 0 : index
    %c0_2 = arith.constant 0 : index
    %1 = vector.load %arg2[%c0_1, %c0_2] : memref<32x32xf32, #tpu.memory_space<vmem>>, vector<32x32xf32>
    %cst = arith.constant dense<0.000000e+00> : vector<56x32xf32>
    %2 = tpu.matmul %0, %1, %cst {dimension_numbers = #tpu.dot_dimension_numbers<[1], [0], [0], [1], [0, 0, 1, 1], [], []>} : vector<56x32xf32>, vector<32x32xf32>, vector<56x32xf32> -> vector<56x32xf32>
    %c0_3 = arith.constant 0 : index
    %c0_4 = arith.constant 0 : index
    %3 = vector.load %arg3[%c0_3, %c0_4] : memref<1x32xf32, #tpu.memory_space<vmem>>, vector<1x32xf32>
    %4 = vector.broadcast %3 : vector<1x32xf32> to vector<56x32xf32>
    %5 = arith.addf %2, %4 : vector<56x32xf32>
    %cst_5 = arith.constant 0.000000e+00 : f32
    %6 = vector.broadcast %cst_5 : f32 to vector<56x32xf32>
    %7 = arith.maximumf %5, %6 : vector<56x32xf32>
    %c0_6 = arith.constant 0 : index
    %c0_7 = arith.constant 0 : index
    %8 = vector.load %arg4[%c0_6, %c0_7] : memref<32x32xf32, #tpu.memory_space<vmem>>, vector<32x32xf32>
    %cst_8 = arith.constant dense<0.000000e+00> : vector<56x32xf32>
    %9 = tpu.matmul %7, %8, %cst_8 {dimension_numbers = #tpu.dot_dimension_numbers<[1], [0], [0], [1], [0, 0, 1, 1], [], []>} : vector<56x32xf32>, vector<32x32xf32>, vector<56x32xf32> -> vector<56x32xf32>
    %c0_9 = arith.constant 0 : index
    %c0_10 = arith.constant 0 : index
    %10 = vector.load %arg5[%c0_9, %c0_10] : memref<1x32xf32, #tpu.memory_space<vmem>>, vector<1x32xf32>
    %11 = vector.broadcast %10 : vector<1x32xf32> to vector<56x32xf32>
    %12 = arith.addf %9, %11 : vector<56x32xf32>
    %cst_11 = arith.constant 0.000000e+00 : f32
    %13 = vector.broadcast %cst_11 : f32 to vector<56x32xf32>
    %14 = arith.maximumf %12, %13 : vector<56x32xf32>
    %c0_12 = arith.constant 0 : index
    %c0_13 = arith.constant 0 : index
    %15 = vector.load %arg6[%c0_12, %c0_13] : memref<32x16xf32, #tpu.memory_space<vmem>>, vector<32x16xf32>
    %cst_14 = arith.constant dense<0.000000e+00> : vector<56x16xf32>
    %16 = tpu.matmul %14, %15, %cst_14 {dimension_numbers = #tpu.dot_dimension_numbers<[1], [0], [0], [1], [0, 0, 1, 1], [], []>} : vector<56x32xf32>, vector<32x16xf32>, vector<56x16xf32> -> vector<56x16xf32>
    %c0_15 = arith.constant 0 : index
    %c0_16 = arith.constant 0 : index
    %17 = vector.load %arg7[%c0_15, %c0_16] : memref<1x16xf32, #tpu.memory_space<vmem>>, vector<1x16xf32>
    %18 = vector.broadcast %17 : vector<1x16xf32> to vector<56x16xf32>
    %19 = arith.addf %16, %18 : vector<56x16xf32>
    %cst_17 = arith.constant dense<0xFF800000> : vector<56xf32>
    %20 = vector.multi_reduction <maximumf>, %19, %cst_17 [1] : vector<56x16xf32> to vector<56xf32>
    %21 = vector.shape_cast %20 : vector<56xf32> to vector<56x1xf32>
    %22 = vector.broadcast %21 : vector<56x1xf32> to vector<56x16xf32>
    %23 = arith.subf %19, %22 : vector<56x16xf32>
    %24 = math.exp %23 : vector<56x16xf32>
    %cst_18 = arith.constant dense<0.000000e+00> : vector<56xf32>
    %25 = vector.multi_reduction <add>, %24, %cst_18 [1] : vector<56x16xf32> to vector<56xf32>
    %26 = vector.shape_cast %25 : vector<56xf32> to vector<56x1xf32>
    %27 = tpu.reciprocal %26 {approx = true} : vector<56x1xf32> -> vector<56x1xf32>
    %28 = vector.broadcast %27 : vector<56x1xf32> to vector<56x16xf32>
    %29 = arith.mulf %24, %28 : vector<56x16xf32>
    %c0_19 = arith.constant 0 : index
    %c0_20 = arith.constant 0 : index
    %30 = vector.load %arg22[%c0_19, %c0_20] : memref<56x16xf32, #tpu.memory_space<vmem>>, vector<56x16xf32>
    tpu.vector_store %arg22[%c0_19, %c0_20], %29 {strides = array<i32>} : memref<56x16xf32, #tpu.memory_space<vmem>>, vector<56x16xf32>,
    %cst_21 = arith.constant 9.99999993E-9 : f32
    %31 = vector.broadcast %cst_21 : f32 to vector<56x16xf32>
    %32 = arith.maximumf %29, %31 : vector<56x16xf32>
    %33 = math.log %32 : vector<56x16xf32>
    %c0_22 = arith.constant 0 : index
    %c0_23 = arith.constant 0 : index
    %34 = vector.load %arg9[%c0_22, %c0_23] : memref<56x1xf32, #tpu.memory_space<vmem>>, vector<56x1xf32>
    %35 = vector.broadcast %34 : vector<56x1xf32> to vector<56x16xf32>
    %36 = arith.mulf %35, %29 : vector<56x16xf32>
    %c0_24 = arith.constant 0 : index
    %c0_25 = arith.constant 0 : index
    %37 = vector.load %arg8[%c0_24, %c0_25] : memref<56x16xf32, #tpu.memory_space<vmem>>, vector<56x16xf32>
    %38 = arith.subf %33, %37 : vector<56x16xf32>
    %39 = arith.mulf %36, %38 : vector<56x16xf32>
    %40 = vector.shape_cast %39 : vector<56x16xf32> to vector<1x56x16xf32>
    %cst_26 = arith.constant dense<0.000000e+00> : vector<1xf32>
    %41 = vector.multi_reduction <add>, %40, %cst_26 [1, 2] : vector<1x56x16xf32> to vector<1xf32>
    %42 = vector.shape_cast %41 : vector<1xf32> to vector<1x1x1xf32>
    %43 = vector.extract %42[0, 0, 0] : f32 from vector<1x1x1xf32>
    %cst_27 = arith.constant 0.000000e+00 : f32
    %44 = vector.broadcast %cst_27 : f32 to vector<176x8xf32>
    %c0_28 = arith.constant 0 : index
    %c0_29 = arith.constant 0 : index
    %45 = vector.load %arg10[%c0_28, %c0_29] : memref<16x8xf32, #tpu.memory_space<vmem>>, vector<16x8xf32>
    %cst_30 = arith.constant dense<0.000000e+00> : vector<56x8xf32>
    %46 = tpu.matmul %29, %45, %cst_30 {dimension_numbers = #tpu.dot_dimension_numbers<[1], [0], [0], [1], [0, 0, 1, 1], [], []>} : vector<56x16xf32>, vector<16x8xf32>, vector<56x8xf32> -> vector<56x8xf32>
    %c0_31 = arith.constant 0 : index
    %c0_32 = arith.constant 0 : index
    %47 = vector.load %arg14[%c0_31, %c0_32] : memref<176x56xf32, #tpu.memory_space<vmem>>, vector<176x56xf32>
    %cst_33 = arith.constant dense<0.000000e+00> : vector<176x8xf32>
    %48 = tpu.matmul %47, %46, %cst_33 {dimension_numbers = #tpu.dot_dimension_numbers<[1], [0], [0], [1], [0, 0, 1, 1], [], []>} : vector<176x56xf32>, vector<56x8xf32>, vector<176x8xf32> -> vector<176x8xf32>
    %49 = arith.addf %44, %48 : vector<176x8xf32>
    %c0_34 = arith.constant 0 : index
    %c0_35 = arith.constant 0 : index
    %50 = vector.load %arg11[%c0_34, %c0_35] : memref<16x8xf32, #tpu.memory_space<vmem>>, vector<16x8xf32>
    %cst_36 = arith.constant dense<0.000000e+00> : vector<56x8xf32>
    %51 = tpu.matmul %29, %50, %cst_36 {dimension_numbers = #tpu.dot_dimension_numbers<[1], [0], [0], [1], [0, 0, 1, 1], [], []>} : vector<56x16xf32>, vector<16x8xf32>, vector<56x8xf32> -> vector<56x8xf32>
    %c0_37 = arith.constant 0 : index
    %c0_38 = arith.constant 0 : index
    %52 = vector.load %arg15[%c0_37, %c0_38] : memref<176x56xf32, #tpu.memory_space<vmem>>, vector<176x56xf32>
    %cst_39 = arith.constant dense<0.000000e+00> : vector<176x8xf32>
    %53 = tpu.matmul %52, %51, %cst_39 {dimension_numbers = #tpu.dot_dimension_numbers<[1], [0], [0], [1], [0, 0, 1, 1], [], []>} : vector<176x56xf32>, vector<56x8xf32>, vector<176x8xf32> -> vector<176x8xf32>
    %54 = arith.addf %49, %53 : vector<176x8xf32>
    %c0_40 = arith.constant 0 : index
    %c0_41 = arith.constant 0 : index
    %55 = vector.load %arg12[%c0_40, %c0_41] : memref<16x8xf32, #tpu.memory_space<vmem>>, vector<16x8xf32>
    %cst_42 = arith.constant dense<0.000000e+00> : vector<56x8xf32>
    %56 = tpu.matmul %29, %55, %cst_42 {dimension_numbers = #tpu.dot_dimension_numbers<[1], [0], [0], [1], [0, 0, 1, 1], [], []>} : vector<56x16xf32>, vector<16x8xf32>, vector<56x8xf32> -> vector<56x8xf32>
    %c0_43 = arith.constant 0 : index
    %c0_44 = arith.constant 0 : index
    %57 = vector.load %arg16[%c0_43, %c0_44] : memref<176x56xf32, #tpu.memory_space<vmem>>, vector<176x56xf32>
    %cst_45 = arith.constant dense<0.000000e+00> : vector<176x8xf32>
    %58 = tpu.matmul %57, %56, %cst_45 {dimension_numbers = #tpu.dot_dimension_numbers<[1], [0], [0], [1], [0, 0, 1, 1], [], []>} : vector<176x56xf32>, vector<56x8xf32>, vector<176x8xf32> -> vector<176x8xf32>
    %59 = arith.addf %54, %58 : vector<176x8xf32>
    %c0_46 = arith.constant 0 : index
    %c0_47 = arith.constant 0 : index
    %60 = vector.load %arg13[%c0_46, %c0_47] : memref<16x8xf32, #tpu.memory_space<vmem>>, vector<16x8xf32>
    %cst_48 = arith.constant dense<0.000000e+00> : vector<56x8xf32>
    %61 = tpu.matmul %29, %60, %cst_48 {dimension_numbers = #tpu.dot_dimension_numbers<[1], [0], [0], [1], [0, 0, 1, 1], [], []>} : vector<56x16xf32>, vector<16x8xf32>, vector<56x8xf32> -> vector<56x8xf32>
    %c0_49 = arith.constant 0 : index
    %c0_50 = arith.constant 0 : index
    %62 = vector.load %arg17[%c0_49, %c0_50] : memref<176x56xf32, #tpu.memory_space<vmem>>, vector<176x56xf32>
    %cst_51 = arith.constant dense<0.000000e+00> : vector<176x8xf32>
    %63 = tpu.matmul %62, %61, %cst_51 {dimension_numbers = #tpu.dot_dimension_numbers<[1], [0], [0], [1], [0, 0, 1, 1], [], []>} : vector<176x56xf32>, vector<56x8xf32>, vector<176x8xf32> -> vector<176x8xf32>
    %64 = arith.addf %59, %63 : vector<176x8xf32>
    %65 = vector.extract_strided_slice %64 {offsets = [0, 0], sizes = [88, 8], strides = [1, 1]} : vector<176x8xf32> to vector<88x8xf32>
    %66 = vector.extract_strided_slice %64 {offsets = [88, 0], sizes = [88, 8], strides = [1, 1]} : vector<176x8xf32> to vector<88x8xf32>
    %67 = arith.addf %65, %66 : vector<88x8xf32>
    %cst_52 = arith.constant 5.000000e-01 : f32
    %68 = vector.broadcast %cst_52 : f32 to vector<88x8xf32>
    %69 = arith.mulf %68, %67 : vector<88x8xf32>
    %cst_53 = arith.constant 9.99999993E-9 : f32
    %70 = vector.broadcast %cst_53 : f32 to vector<88x8xf32>
    %71 = arith.maximumf %69, %70 : vector<88x8xf32>
    %72 = math.log %71 : vector<88x8xf32>
    %73 = arith.mulf %69, %72 : vector<88x8xf32>
    %74 = vector.shape_cast %73 : vector<88x8xf32> to vector<1x88x8xf32>
    %cst_54 = arith.constant dense<0.000000e+00> : vector<1xf32>
    %75 = vector.multi_reduction <add>, %74, %cst_54 [1, 2] : vector<1x88x8xf32> to vector<1xf32>
    %76 = vector.shape_cast %75 : vector<1xf32> to vector<1x1x1xf32>
    %77 = vector.extract %76[0, 0, 0] : f32 from vector<1x1x1xf32>
    %cst_55 = arith.constant 0.000000e+00 : f32
    %78 = arith.subf %cst_55, %77 : f32
    %79 = arith.subf %65, %69 : vector<88x8xf32>
    %80 = arith.mulf %79, %79 : vector<88x8xf32>
    %81 = vector.shape_cast %80 : vector<88x8xf32> to vector<1x88x8xf32>
    %cst_56 = arith.constant dense<0.000000e+00> : vector<1xf32>
    %82 = vector.multi_reduction <add>, %81, %cst_56 [1, 2] : vector<1x88x8xf32> to vector<1xf32>
    %83 = vector.shape_cast %82 : vector<1xf32> to vector<1x1x1xf32>
    %84 = vector.extract %83[0, 0, 0] : f32 from vector<1x1x1xf32>
    %85 = arith.subf %66, %69 : vector<88x8xf32>
    %86 = arith.mulf %85, %85 : vector<88x8xf32>
    %87 = vector.shape_cast %86 : vector<88x8xf32> to vector<1x88x8xf32>
    %cst_57 = arith.constant dense<0.000000e+00> : vector<1xf32>
    %88 = vector.multi_reduction <add>, %87, %cst_57 [1, 2] : vector<1x88x8xf32> to vector<1xf32>
    %89 = vector.shape_cast %88 : vector<1xf32> to vector<1x1x1xf32>
    %90 = vector.extract %89[0, 0, 0] : f32 from vector<1x1x1xf32>
    %91 = arith.addf %84, %90 : f32
    %cst_58 = arith.constant 0.000000e+00 : f32
    %92 = vector.broadcast %cst_58 : f32 to vector<160x8xf32>
    %c0_59 = arith.constant 0 : index
    %c0_60 = arith.constant 0 : index
    %93 = vector.load %arg18[%c0_59, %c0_60] : memref<8x8xf32, #tpu.memory_space<vmem>>, vector<8x8xf32>
    %cst_61 = arith.constant dense<0.000000e+00> : vector<88x8xf32>
    %94 = tpu.matmul %69, %93, %cst_61 {dimension_numbers = #tpu.dot_dimension_numbers<[1], [0], [0], [1], [0, 0, 1, 1], [], []>} : vector<88x8xf32>, vector<8x8xf32>, vector<88x8xf32> -> vector<88x8xf32>
    %c0_62 = arith.constant 0 : index
    %c0_63 = arith.constant 0 : index
    %95 = vector.load %arg20[%c0_62, %c0_63] : memref<160x88xf32, #tpu.memory_space<vmem>>, vector<160x88xf32>
    %cst_64 = arith.constant dense<0.000000e+00> : vector<160x8xf32>
    %96 = tpu.matmul %95, %94, %cst_64 {dimension_numbers = #tpu.dot_dimension_numbers<[1], [0], [0], [1], [0, 0, 1, 1], [], []>} : vector<160x88xf32>, vector<88x8xf32>, vector<160x8xf32> -> vector<160x8xf32>
    %97 = arith.addf %92, %96 : vector<160x8xf32>
    %c0_65 = arith.constant 0 : index
    %c0_66 = arith.constant 0 : index
    %98 = vector.load %arg19[%c0_65, %c0_66] : memref<8x8xf32, #tpu.memory_space<vmem>>, vector<8x8xf32>
    %cst_67 = arith.constant dense<0.000000e+00> : vector<88x8xf32>
    %99 = tpu.matmul %69, %98, %cst_67 {dimension_numbers = #tpu.dot_dimension_numbers<[1], [0], [0], [1], [0, 0, 1, 1], [], []>} : vector<88x8xf32>, vector<8x8xf32>, vector<88x8xf32> -> vector<88x8xf32>
    %c0_68 = arith.constant 0 : index
    %c0_69 = arith.constant 0 : index
    %100 = vector.load %arg21[%c0_68, %c0_69] : memref<160x88xf32, #tpu.memory_space<vmem>>, vector<160x88xf32>
    %cst_70 = arith.constant dense<0.000000e+00> : vector<160x8xf32>
    %101 = tpu.matmul %100, %99, %cst_70 {dimension_numbers = #tpu.dot_dimension_numbers<[1], [0], [0], [1], [0, 0, 1, 1], [], []>} : vector<160x88xf32>, vector<88x8xf32>, vector<160x8xf32> -> vector<160x8xf32>
    %102 = arith.addf %97, %101 : vector<160x8xf32>
    %103 = vector.extract_strided_slice %102 {offsets = [0, 0], sizes = [40, 8], strides = [1, 1]} : vector<160x8xf32> to vector<40x8xf32>
    %104 = vector.extract_strided_slice %102 {offsets = [40, 0], sizes = [40, 8], strides = [1, 1]} : vector<160x8xf32> to vector<40x8xf32>
    %105 = arith.addf %103, %104 : vector<40x8xf32>
    %106 = vector.extract_strided_slice %102 {offsets = [80, 0], sizes = [40, 8], strides = [1, 1]} : vector<160x8xf32> to vector<40x8xf32>
    %107 = arith.addf %105, %106 : vector<40x8xf32>
    %108 = vector.extract_strided_slice %102 {offsets = [120, 0], sizes = [40, 8], strides = [1, 1]} : vector<160x8xf32> to vector<40x8xf32>
    %109 = arith.addf %107, %108 : vector<40x8xf32>
    %cst_71 = arith.constant 2.500000e-01 : f32
    %110 = vector.broadcast %cst_71 : f32 to vector<40x8xf32>
    %111 = arith.mulf %110, %109 : vector<40x8xf32>
    %cst_72 = arith.constant 9.99999993E-9 : f32
    %112 = vector.broadcast %cst_72 : f32 to vector<40x8xf32>
    %113 = arith.maximumf %111, %112 : vector<40x8xf32>
    %114 = math.log %113 : vector<40x8xf32>
    %115 = arith.mulf %111, %114 : vector<40x8xf32>
    %116 = vector.shape_cast %115 : vector<40x8xf32> to vector<1x40x8xf32>
    %cst_73 = arith.constant dense<0.000000e+00> : vector<1xf32>
    %117 = vector.multi_reduction <add>, %116, %cst_73 [1, 2] : vector<1x40x8xf32> to vector<1xf32>
    %118 = vector.shape_cast %117 : vector<1xf32> to vector<1x1x1xf32>
    %119 = vector.extract %118[0, 0, 0] : f32 from vector<1x1x1xf32>
    %120 = vector.extract_strided_slice %102 {offsets = [0, 0], sizes = [40, 8], strides = [1, 1]} : vector<160x8xf32> to vector<40x8xf32>
    %121 = arith.subf %120, %111 : vector<40x8xf32>
    %122 = arith.mulf %121, %121 : vector<40x8xf32>
    %123 = vector.shape_cast %122 : vector<40x8xf32> to vector<1x40x8xf32>
    %cst_74 = arith.constant dense<0.000000e+00> : vector<1xf32>
    %124 = vector.multi_reduction <add>, %123, %cst_74 [1, 2] : vector<1x40x8xf32> to vector<1xf32>
    %125 = vector.shape_cast %124 : vector<1xf32> to vector<1x1x1xf32>
    %126 = vector.extract %125[0, 0, 0] : f32 from vector<1x1x1xf32>
    %127 = arith.addf %91, %126 : f32
    %128 = vector.extract_strided_slice %102 {offsets = [40, 0], sizes = [40, 8], strides = [1, 1]} : vector<160x8xf32> to vector<40x8xf32>
    %129 = arith.subf %128, %111 : vector<40x8xf32>
    %130 = arith.mulf %129, %129 : vector<40x8xf32>
    %131 = vector.shape_cast %130 : vector<40x8xf32> to vector<1x40x8xf32>
    %cst_75 = arith.constant dense<0.000000e+00> : vector<1xf32>
    %132 = vector.multi_reduction <add>, %131, %cst_75 [1, 2] : vector<1x40x8xf32> to vector<1xf32>
    %133 = vector.shape_cast %132 : vector<1xf32> to vector<1x1x1xf32>
    %134 = vector.extract %133[0, 0, 0] : f32 from vector<1x1x1xf32>
    %135 = arith.addf %127, %134 : f32
    %136 = vector.extract_strided_slice %102 {offsets = [80, 0], sizes = [40, 8], strides = [1, 1]} : vector<160x8xf32> to vector<40x8xf32>
    %137 = arith.subf %136, %111 : vector<40x8xf32>
    %138 = arith.mulf %137, %137 : vector<40x8xf32>
    %139 = vector.shape_cast %138 : vector<40x8xf32> to vector<1x40x8xf32>
    %cst_76 = arith.constant dense<0.000000e+00> : vector<1xf32>
    %140 = vector.multi_reduction <add>, %139, %cst_76 [1, 2] : vector<1x40x8xf32> to vector<1xf32>
    %141 = vector.shape_cast %140 : vector<1xf32> to vector<1x1x1xf32>
    %142 = vector.extract %141[0, 0, 0] : f32 from vector<1x1x1xf32>
    %143 = arith.addf %135, %142 : f32
    %144 = vector.extract_strided_slice %102 {offsets = [120, 0], sizes = [40, 8], strides = [1, 1]} : vector<160x8xf32> to vector<40x8xf32>
    %145 = arith.subf %144, %111 : vector<40x8xf32>
    %146 = arith.mulf %145, %145 : vector<40x8xf32>
    %147 = vector.shape_cast %146 : vector<40x8xf32> to vector<1x40x8xf32>
    %cst_77 = arith.constant dense<0.000000e+00> : vector<1xf32>
    %148 = vector.multi_reduction <add>, %147, %cst_77 [1, 2] : vector<1x40x8xf32> to vector<1xf32>
    %149 = vector.shape_cast %148 : vector<1xf32> to vector<1x1x1xf32>
    %150 = vector.extract %149[0, 0, 0] : f32 from vector<1x1x1xf32>
    %151 = arith.addf %143, %150 : f32
    %152 = arith.addf %43, %78 : f32
    %153 = arith.addf %152, %119 : f32
    %154 = tpu.iota {dimensions = array<i32: 1>} : vector<1x128xi32>
    %c0_i32 = arith.constant 0 : i32
    %155 = vector.broadcast %c0_i32 : i32 to vector<1x128xi32>
    %156 = arith.cmpi eq, %154, %155 : vector<1x128xi32>
    %c1_i32 = arith.constant 1 : i32
    %157 = vector.broadcast %c1_i32 : i32 to vector<1x128xi32>
    %158 = arith.cmpi eq, %154, %157 : vector<1x128xi32>
    %cst_78 = arith.constant 0.000000e+00 : f32
    %159 = vector.broadcast %151 : f32 to vector<1x128xf32>
    %160 = vector.broadcast %cst_78 : f32 to vector<1x128xf32>
    %161 = arith.select %158, %159, %160 : vector<1x128xi1>, vector<1x128xf32>
    %162 = vector.broadcast %153 : f32 to vector<1x128xf32>
    %163 = arith.select %156, %162, %161 : vector<1x128xi1>, vector<1x128xf32>
    %c0_79 = arith.constant 0 : index
    %c0_80 = arith.constant 0 : index
    %164 = vector.load %arg23[%c0_79, %c0_80] : memref<1x128xf32, #tpu.memory_space<vmem>>, vector<1x128xf32>
    tpu.vector_store %arg23[%c0_79, %c0_80], %163 {strides = array<i32>} : memref<1x128xf32, #tpu.memory_space<vmem>>, vector<1x128xf32>,
    return
  }
  func.func @transform_0(%arg0: i32) -> (i32, i32) {
    %c0_i32 = arith.constant 0 : i32
    %c0_i32_0 = arith.constant 0 : i32
    %c0_i32_1 = arith.constant 0 : i32
    return %c0_i32, %c0_i32_0 : i32, i32
  }
  func.func @transform_1(%arg0: i32) -> (i32, i32) {
    %c0_i32 = arith.constant 0 : i32
    %c0_i32_0 = arith.constant 0 : i32
    %c0_i32_1 = arith.constant 0 : i32
    return %c0_i32, %c0_i32_0 : i32, i32
  }
  func.func @transform_2(%arg0: i32) -> (i32, i32) {
    %c0_i32 = arith.constant 0 : i32
    %c0_i32_0 = arith.constant 0 : i32
    %c0_i32_1 = arith.constant 0 : i32
    return %c0_i32, %c0_i32_0 : i32, i32
  }
  func.func @transform_3(%arg0: i32) -> (i32, i32) {
    %c0_i32 = arith.constant 0 : i32
    %c0_i32_0 = arith.constant 0 : i32
    %c0_i32_1 = arith.constant 0 : i32
    return %c0_i32, %c0_i32_0 : i32, i32
  }
  func.func @transform_4(%arg0: i32) -> (i32, i32) {
    %c0_i32 = arith.constant 0 : i32
    %c0_i32_0 = arith.constant 0 : i32
    %c0_i32_1 = arith.constant 0 : i32
    return %c0_i32, %c0_i32_0 : i32, i32
  }
  func.func @transform_5(%arg0: i32) -> (i32, i32) {
    %c0_i32 = arith.constant 0 : i32
    %c0_i32_0 = arith.constant 0 : i32
    %c0_i32_1 = arith.constant 0 : i32
    return %c0_i32, %c0_i32_0 : i32, i32
  }
  func.func @transform_6(%arg0: i32) -> (i32, i32) {
    %c0_i32 = arith.constant 0 : i32
    %c0_i32_0 = arith.constant 0 : i32
    %c0_i32_1 = arith.constant 0 : i32
    return %c0_i32, %c0_i32_0 : i32, i32
  }
  func.func @transform_7(%arg0: i32) -> (i32, i32) {
    %c0_i32 = arith.constant 0 : i32
    %c0_i32_0 = arith.constant 0 : i32
    %c0_i32_1 = arith.constant 0 : i32
    return %c0_i32, %c0_i32_0 : i32, i32
  }
  func.func @transform_8(%arg0: i32) -> (i32, i32) {
    %c0_i32 = arith.constant 0 : i32
    %c0_i32_0 = arith.constant 0 : i32
    %c0_i32_1 = arith.constant 0 : i32
    return %c0_i32, %c0_i32_0 : i32, i32
  }
  func.func @transform_9(%arg0: i32) -> (i32, i32) {
    %c0_i32 = arith.constant 0 : i32
    %c0_i32_0 = arith.constant 0 : i32
    %c0_i32_1 = arith.constant 0 : i32
    return %c0_i32, %c0_i32_0 : i32, i32
  }
  func.func @transform_10(%arg0: i32) -> (i32, i32) {
    %c0_i32 = arith.constant 0 : i32
    %c0_i32_0 = arith.constant 0 : i32
    %c0_i32_1 = arith.constant 0 : i32
    return %c0_i32, %c0_i32_0 : i32, i32
  }
  func.func @transform_11(%arg0: i32) -> (i32, i32) {
    %c0_i32 = arith.constant 0 : i32
    %c0_i32_0 = arith.constant 0 : i32
    %c0_i32_1 = arith.constant 0 : i32
    return %c0_i32, %c0_i32_0 : i32, i32
  }
  func.func @transform_12(%arg0: i32) -> (i32, i32) {
    %c0_i32 = arith.constant 0 : i32
    %c0_i32_0 = arith.constant 0 : i32
    %c0_i32_1 = arith.constant 0 : i32
    return %c0_i32, %c0_i32_0 : i32, i32
  }
  func.func @transform_13(%arg0: i32) -> (i32, i32) {
    %c0_i32 = arith.constant 0 : i32
    %c0_i32_0 = arith.constant 0 : i32
    %c0_i32_1 = arith.constant 0 : i32
    return %c0_i32, %c0_i32_0 : i32, i32
  }
  func.func @transform_14(%arg0: i32) -> (i32, i32) {
    %c0_i32 = arith.constant 0 : i32
    %c0_i32_0 = arith.constant 0 : i32
    %c0_i32_1 = arith.constant 0 : i32
    return %c0_i32, %c0_i32_0 : i32, i32
  }
  func.func @transform_15(%arg0: i32) -> (i32, i32) {
    %c0_i32 = arith.constant 0 : i32
    %c0_i32_0 = arith.constant 0 : i32
    %c0_i32_1 = arith.constant 0 : i32
    return %c0_i32, %c0_i32_0 : i32, i32
  }
  func.func @transform_16(%arg0: i32) -> (i32, i32) {
    %c0_i32 = arith.constant 0 : i32
    %c0_i32_0 = arith.constant 0 : i32
    %c0_i32_1 = arith.constant 0 : i32
    return %c0_i32, %c0_i32_0 : i32, i32
  }
  func.func @transform_17(%arg0: i32) -> (i32, i32) {
    %c0_i32 = arith.constant 0 : i32
    %c0_i32_0 = arith.constant 0 : i32
    %c0_i32_1 = arith.constant 0 : i32
    return %c0_i32, %c0_i32_0 : i32, i32
  }
  func.func @transform_18(%arg0: i32) -> (i32, i32) {
    %c0_i32 = arith.constant 0 : i32
    %c0_i32_0 = arith.constant 0 : i32
    %c0_i32_1 = arith.constant 0 : i32
    return %c0_i32, %c0_i32_0 : i32, i32
  }
  func.func @transform_19(%arg0: i32) -> (i32, i32) {
    %c0_i32 = arith.constant 0 : i32
    %c0_i32_0 = arith.constant 0 : i32
    %c0_i32_1 = arith.constant 0 : i32
    return %c0_i32, %c0_i32_0 : i32, i32
  }
  func.func @transform_20(%arg0: i32) -> (i32, i32) {
    %c0_i32 = arith.constant 0 : i32
    %c0_i32_0 = arith.constant 0 : i32
    %c0_i32_1 = arith.constant 0 : i32
    return %c0_i32, %c0_i32_0 : i32, i32
  }
  func.func @transform_21(%arg0: i32) -> (i32, i32) {
    %c0_i32 = arith.constant 0 : i32
    %c0_i32_0 = arith.constant 0 : i32
    %c0_i32_1 = arith.constant 0 : i32
    return %c0_i32, %c0_i32_0 : i32, i32
  }
  func.func @transform_22(%arg0: i32) -> (i32, i32) {
    %c0_i32 = arith.constant 0 : i32
    %c0_i32_0 = arith.constant 0 : i32
    %c0_i32_1 = arith.constant 0 : i32
    return %c0_i32, %c0_i32_0 : i32, i32
  }
}

</mosaic_0001>

<llo_original>
// kernel: run.1
$region0: #{run.1}
  #allocation0 [shape = 'u32[]', space=smem, size = 0x4, offset = 0x4, fixed_abs, tag = 'smem constant byte address 0x4 - core index']
  #allocation1 [shape = 'u32[144,128]{1,0:T(1,128)}', space=vmem, size = 0x12000, scoped, tag = 'internal scratch']
  %s0 = inlined_call_operand.vmem [shape: f32[56,32], index: 0, kind: input, shape index: {}]
  %s1 = inlined_call_operand.vmem [shape: f32[32,32], index: 1, kind: input, shape index: {}]
  %s2 = inlined_call_operand.vmem [shape: f32[1,32], index: 2, kind: input, shape index: {}]
  %s3 = inlined_call_operand.vmem [shape: f32[32,32], index: 3, kind: input, shape index: {}]
  %s4 = inlined_call_operand.vmem [shape: f32[1,32], index: 4, kind: input, shape index: {}]
  %s5 = inlined_call_operand.vmem [shape: f32[32,16], index: 5, kind: input, shape index: {}]
  %s6 = inlined_call_operand.vmem [shape: f32[1,16], index: 6, kind: input, shape index: {}]
  %s7 = inlined_call_operand.vmem [shape: f32[56,16], index: 7, kind: input, shape index: {}]
  %s8 = inlined_call_operand.vmem [shape: f32[56,1], index: 8, kind: input, shape index: {}]
  %s9 = inlined_call_operand.vmem [shape: f32[16,8], index: 9, kind: input, shape index: {}]
  %s10 = inlined_call_operand.vmem [shape: f32[16,8], index: 10, kind: input, shape index: {}]
  %s11 = inlined_call_operand.vmem [shape: f32[16,8], index: 11, kind: input, shape index: {}]
  %s12 = inlined_call_operand.vmem [shape: f32[16,8], index: 12, kind: input, shape index: {}]
  %s13 = inlined_call_operand.vmem [shape: f32[176,56], index: 13, kind: input, shape index: {}]
  %s14 = inlined_call_operand.vmem [shape: f32[176,56], index: 14, kind: input, shape index: {}]
  %s15 = inlined_call_operand.vmem [shape: f32[176,56], index: 15, kind: input, shape index: {}]
  %s16 = inlined_call_operand.vmem [shape: f32[176,56], index: 16, kind: input, shape index: {}]
  %s17 = inlined_call_operand.vmem [shape: f32[8,8], index: 17, kind: input, shape index: {}]
  %s18 = inlined_call_operand.vmem [shape: f32[8,8], index: 18, kind: input, shape index: {}]
  %s19 = inlined_call_operand.vmem [shape: f32[160,88], index: 19, kind: input, shape index: {}]
  %s20 = inlined_call_operand.vmem [shape: f32[160,88], index: 20, kind: input, shape index: {}]
  %s21 = inlined_call_operand.vmem [shape: f32[56,16], index: 21, kind: output, shape index: {0}]
  %s22 = inlined_call_operand.vmem [shape: f32[1,128], index: 22, kind: output, shape index: {1}]
  %23 = xla_tuple %s21, %s22
  %s24 = sld [smem:[#allocation0]]
  $region102: #{run.1} parent=0
    _
  %s26 = ssub.s32 1, %s24
  %s27 = scalar_select 0, %s26, %s24
  // Predicated region
  $region2: #{run.1} parent=0 // pred_check
    _
  $region3: #{run.1} parent=0 // pred_check_branch
    %29 = sbr.rel (0) target = $region5
  $region4: #{run.1} parent=0 // pred_region
    _
  $region5: #{run.1} parent=0 // pred_fallthru
    _
  // Predicated region
  $region6: #{run.1} parent=0 // pred_check
    _
  $region7: #{run.1} parent=0 // pred_check_branch
    %31 = sbr.rel (0) target = $region9
  $region8: #{run.1} parent=0 // pred_region
    _
  $region9: #{run.1} parent=0 // pred_fallthru
    _
  // Predicated region
  $region10: #{run.1} parent=0 // pred_check
    _
  $region11: #{run.1} parent=0 // pred_check_branch
    %33 = sbr.rel (0) target = $region13
  $region12: #{run.1} parent=0 // pred_region
    _
  $region13: #{run.1} parent=0 // pred_fallthru
    _
  // Predicated region
  $region14: #{run.1} parent=0 // pred_check
    _
  $region15: #{run.1} parent=0 // pred_check_branch
    %35 = sbr.rel (0) target = $region17
  $region16: #{run.1} parent=0 // pred_region
    _
  $region17: #{run.1} parent=0 // pred_fallthru
    _
  // Predicated region
  $region18: #{run.1} parent=0 // pred_check
    _
  $region19: #{run.1} parent=0 // pred_check_branch
    %37 = sbr.rel (0) target = $region21
  $region20: #{run.1} parent=0 // pred_region
    _
  $region21: #{run.1} parent=0 // pred_fallthru
    _
  // Predicated region
  $region22: #{run.1} parent=0 // pred_check
    _
  $region23: #{run.1} parent=0 // pred_check_branch
    %39 = sbr.rel (0) target = $region25
  $region24: #{run.1} parent=0 // pred_region
    _
  $region25: #{run.1} parent=0 // pred_fallthru
    _
  // Predicated region
  $region26: #{run.1} parent=0 // pred_check
    _
  $region27: #{run.1} parent=0 // pred_check_branch
    %41 = sbr.rel (0) target = $region29
  $region28: #{run.1} parent=0 // pred_region
    _
  $region29: #{run.1} parent=0 // pred_fallthru
    _
  // Predicated region
  $region30: #{run.1} parent=0 // pred_check
    _
  $region31: #{run.1} parent=0 // pred_check_branch
    %43 = sbr.rel (0) target = $region33
  $region32: #{run.1} parent=0 // pred_region
    _
  $region33: #{run.1} parent=0 // pred_fallthru
    _
  // Predicated region
  $region34: #{run.1} parent=0 // pred_check
    _
  $region35: #{run.1} parent=0 // pred_check_branch
    %45 = sbr.rel (0) target = $region37
  $region36: #{run.1} parent=0 // pred_region
    _
  $region37: #{run.1} parent=0 // pred_fallthru
    _
  // Predicated region
  $region38: #{run.1} parent=0 // pred_check
    _
  $region39: #{run.1} parent=0 // pred_check_branch
    %47 = sbr.rel (0) target = $region41
  $region40: #{run.1} parent=0 // pred_region
    _
  $region41: #{run.1} parent=0 // pred_fallthru
    _
  // Predicated region
  $region42: #{run.1} parent=0 // pred_check
    _
  $region43: #{run.1} parent=0 // pred_check_branch
    %49 = sbr.rel (0) target = $region45
  $region44: #{run.1} parent=0 // pred_region
    _
  $region45: #{run.1} parent=0 // pred_fallthru
    _
  // Predicated region
  $region46: #{run.1} parent=0 // pred_check
    _
  $region47: #{run.1} parent=0 // pred_check_branch
    %51 = sbr.rel (0) target = $region49
  $region48: #{run.1} parent=0 // pred_region
    _
  $region49: #{run.1} parent=0 // pred_fallthru
    _
  // Predicated region
  $region50: #{run.1} parent=0 // pred_check
    _
  $region51: #{run.1} parent=0 // pred_check_branch
    %53 = sbr.rel (0) target = $region53
  $region52: #{run.1} parent=0 // pred_region
    _
  $region53: #{run.1} parent=0 // pred_fallthru
    _
  // Predicated region
  $region54: #{run.1} parent=0 // pred_check
    _
  $region55: #{run.1} parent=0 // pred_check_branch
    %55 = sbr.rel (0) target = $region57
  $region56: #{run.1} parent=0 // pred_region
    _
  $region57: #{run.1} parent=0 // pred_fallthru
    _
  // Predicated region
  $region58: #{run.1} parent=0 // pred_check
    _
  $region59: #{run.1} parent=0 // pred_check_branch
    %57 = sbr.rel (0) target = $region61
  $region60: #{run.1} parent=0 // pred_region
    _
  $region61: #{run.1} parent=0 // pred_fallthru
    _
  // Predicated region
  $region62: #{run.1} parent=0 // pred_check
    _
  $region63: #{run.1} parent=0 // pred_check_branch
    %59 = sbr.rel (0) target = $region65
  $region64: #{run.1} parent=0 // pred_region
    _
  $region65: #{run.1} parent=0 // pred_fallthru
    _
  // Predicated region
  $region66: #{run.1} parent=0 // pred_check
    _
  $region67: #{run.1} parent=0 // pred_check_branch
    %61 = sbr.rel (0) target = $region69
  $region68: #{run.1} parent=0 // pred_region
    _
  $region69: #{run.1} parent=0 // pred_fallthru
    _
  // Predicated region
  $region70: #{run.1} parent=0 // pred_check
    _
  $region71: #{run.1} parent=0 // pred_check_branch
    %63 = sbr.rel (0) target = $region73
  $region72: #{run.1} parent=0 // pred_region
    _
  $region73: #{run.1} parent=0 // pred_fallthru
    _
  // Predicated region
  $region74: #{run.1} parent=0 // pred_check
    _
  $region75: #{run.1} parent=0 // pred_check_branch
    %65 = sbr.rel (0) target = $region77
  $region76: #{run.1} parent=0 // pred_region
    _
  $region77: #{run.1} parent=0 // pred_fallthru
    _
  // Predicated region
  $region78: #{run.1} parent=0 // pred_check
    _
  $region79: #{run.1} parent=0 // pred_check_branch
    %67 = sbr.rel (0) target = $region81
  $region80: #{run.1} parent=0 // pred_region
    _
  $region81: #{run.1} parent=0 // pred_fallthru
    _
  // Predicated region
  $region82: #{run.1} parent=0 // pred_check
    _
  $region83: #{run.1} parent=0 // pred_check_branch
    %69 = sbr.rel (0) target = $region85
  $region84: #{run.1} parent=0 // pred_region
    _
  $region85: #{run.1} parent=0 // pred_fallthru
    _
  %v70 = vld [vmem:[%s0] sm:$0xff]
  %v71 = vld [vmem:[%s0 + $0x8] sm:$0xff]
  %v72 = vld [vmem:[%s0 + $0x10] sm:$0xff]
  %v73 = vld [vmem:[%s0 + $0x18] sm:$0xff]
  %v74 = vld [vmem:[%s0 + $0x20] sm:$0xff]
  %v75 = vld [vmem:[%s0 + $0x28] sm:$0xff]
  %v76 = vld [vmem:[%s0 + $0x30] sm:$0xff]
  %v77 = vld [vmem:[%s1] sm:$0xff]
  %v78 = vld [vmem:[%s1 + $0x8] sm:$0xff]
  %v79 = vld [vmem:[%s1 + $0x10] sm:$0xff]
  %v80 = vld [vmem:[%s1 + $0x18] sm:$0xff]
  %v81 = vld [vmem:[%s2] sm:$0x1]
  %v83 = vlaneseq
  %v84 = vshrl.u32 %v83, 7
  %v85 = vsub.s32 0, %v84
  %v86 = vrot.slane %v81, %v85
  %vm88 = vcmask 261120
  %v90 = vsel %vm88, %v70, 0
  %v93 = vsel %vm88, %v71, 0
  %v96 = vsel %vm88, %v72, 0
  %v99 = vsel %vm88, %v73, 0
  %v102 = vsel %vm88, %v74, 0
  %v105 = vsel %vm88, %v75, 0
  %v108 = vsel %vm88, %v76, 0
  %110 = vmatprep.subr.mxu0 0.0
  %111 = vmatpush1.msra.mxu0 0.0
  %112 = vmatprep.subr.mxu0 0.0
  %113 = vmatpush1.msra.mxu0 0.0
  %114 = vmatprep.subr.mxu0 0.0
  %115 = vmatpush1.msra.mxu0 0.0
  %116 = vmatprep.subr.mxu0 0.0
  %117 = vmatpush1.msra.mxu0 0.0
  %118 = vmatprep.subr.mxu0 0.0
  %119 = vmatpush1.msra.mxu0 0.0
  %120 = vmatprep.subr.mxu0 0.0
  %121 = vmatpush1.msra.mxu0 0.0
  %122 = vmatprep.subr.mxu0 0.0
  %123 = vmatpush1.msra.mxu0 0.0
  %124 = vmatprep.subr.mxu0 0.0
  %125 = vmatpush1.msra.mxu0 0.0
  %126 = vmatprep.subr.mxu0 0.0
  %127 = vmatpush1.msra.mxu0 0.0
  %128 = vmatprep.subr.mxu0 0.0
  %129 = vmatpush1.msra.mxu0 0.0
  %130 = vmatprep.subr.mxu0 0.0
  %131 = vmatpush1.msra.mxu0 0.0
  %132 = vmatprep.subr.mxu0 0.0
  %133 = vmatpush1.msra.mxu0 0.0
  %134 = vmatprep.subr.mxu0 0.0
  %135 = vmatpush1.msra.mxu0 %v80
  %136 = vmatprep.subr.mxu0 0.0
  %137 = vmatpush1.msra.mxu0 %v79
  %138 = vmatprep.subr.mxu0 0.0
  %139 = vmatpush1.msra.mxu0 %v78
  %140 = vmatprep.subr.mxu0 0.0
  %141 = vmatpush1.msra.mxu0 %v77
  %142 = vmatprep.subr.mxu0 0.0
  %143 = vmatpush2.msra.mxu0 0.0
  %144 = vmatprep.subr.mxu0 0.0
  %145 = vmatpush2.msra.mxu0 0.0
  %146 = vmatprep.subr.mxu0 0.0
  %147 = vmatpush2.msra.mxu0 0.0
  %148 = vmatprep.subr.mxu0 0.0
  %149 = vmatpush2.msra.mxu0 0.0
  %150 = vmatprep.subr.mxu0 0.0
  %151 = vmatpush2.msra.mxu0 0.0
  %152 = vmatprep.subr.mxu0 0.0
  %153 = vmatpush2.msra.mxu0 0.0
  %154 = vmatprep.subr.mxu0 0.0
  %155 = vmatpush2.msra.mxu0 0.0
  %156 = vmatprep.subr.mxu0 0.0
  %157 = vmatpush2.msra.mxu0 0.0
  %158 = vmatprep.subr.mxu0 0.0
  %159 = vmatpush2.msra.mxu0 0.0
  %160 = vmatprep.subr.mxu0 0.0
  %161 = vmatpush2.msra.mxu0 0.0
  %162 = vmatprep.subr.mxu0 0.0
  %163 = vmatpush2.msra.mxu0 0.0
  %164 = vmatprep.subr.mxu0 0.0
  %165 = vmatpush2.msra.mxu0 0.0
  %166 = vmatprep.subr.mxu0 0.0
  %167 = vmatpush2.msra.mxu0 0.0
  %168 = vmatprep.subr.mxu0 0.0
  %169 = vmatpush2.msra.mxu0 0.0
  %170 = vmatprep.subr.mxu0 0.0
  %171 = vmatpush2.msra.mxu0 0.0
  %172 = vmatprep.subr.mxu0 0.0
  %173 = vmatpush2.msra.mxu0 0.0
  %174 = vmatprep.mubr.f32.mxu0 0.0
  %175 = vmatmul.mubr.f32.gmra.mxu0 %v90
  %v176 = vpop.f32.mrf.mxu0
  %v177 = vadd.f32 %v86, %v176
  %v178 = vpop.f32.mrf.mxu0
  %179 = vmatprep.mubr.f32.mxu0 0.0
  %180 = vmatmul.mubr.f32.gmra.mxu0 %v93
  %v181 = vpop.f32.mrf.mxu0
  %v182 = vadd.f32 %v86, %v181
  %v183 = vpop.f32.mrf.mxu0
  %184 = vmatprep.mubr.f32.mxu0 0.0
  %185 = vmatmul.mubr.f32.gmra.mxu0 %v96
  %v186 = vpop.f32.mrf.mxu0
  %v187 = vadd.f32 %v86, %v186
  %v188 = vpop.f32.mrf.mxu0
  %189 = vmatprep.mubr.f32.mxu0 0.0
  %190 = vmatmul.mubr.f32.gmra.mxu0 %v99
  %v191 = vpop.f32.mrf.mxu0
  %v192 = vadd.f32 %v86, %v191
  %v193 = vpop.f32.mrf.mxu0
  %194 = vmatprep.mubr.f32.mxu0 0.0
  %195 = vmatmul.mubr.f32.gmra.mxu0 %v102
  %v196 = vpop.f32.mrf.mxu0
  %v197 = vadd.f32 %v86, %v196
  %v198 = vpop.f32.mrf.mxu0
  %199 = vmatprep.mubr.f32.mxu0 0.0
  %200 = vmatmul.mubr.f32.gmra.mxu0 %v105
  %v201 = vpop.f32.mrf.mxu0
  %v202 = vadd.f32 %v86, %v201
  %v203 = vpop.f32.mrf.mxu0
  %204 = vmatprep.mubr.f32.mxu0 0.0
  %205 = vmatmul.mubr.f32.gmra.mxu0 %v108
  %v206 = vpop.f32.mrf.mxu0
  %v207 = vadd.f32 %v86, %v206
  %v208 = vpop.f32.mrf.mxu0
  %209 = vdwg.mxu0
  %v210 = vmax.f32 %v177, 0.0
  %v211 = vmax.f32 %v182, 0.0
  %v212 = vmax.f32 %v187, 0.0
  %v213 = vmax.f32 %v192, 0.0
  %v214 = vmax.f32 %v197, 0.0
  %v215 = vmax.f32 %v202, 0.0
  %v216 = vmax.f32 %v207, 0.0
  %v217 = vld [vmem:[%s3] sm:$0xff]
  %v218 = vld [vmem:[%s3 + $0x8] sm:$0xff]
  %v219 = vld [vmem:[%s3 + $0x10] sm:$0xff]
  %v220 = vld [vmem:[%s3 + $0x18] sm:$0xff]
  %v221 = vld [vmem:[%s4] sm:$0x1]
  %v223 = vlaneseq
  %v224 = vshrl.u32 %v223, 7
  %v225 = vsub.s32 0, %v224
  %v226 = vrot.slane %v221, %v225
  %v229 = vsel %vm88, %v210, 0
  %v232 = vsel %vm88, %v211, 0
  %v235 = vsel %vm88, %v212, 0
  %v238 = vsel %vm88, %v213, 0
  %v241 = vsel %vm88, %v214, 0
  %v244 = vsel %vm88, %v215, 0
  %v247 = vsel %vm88, %v216, 0
  %249 = vmatprep.subr.mxu0 0.0
  %250 = vmatpush1.msra.mxu0 0.0
  %251 = vmatprep.subr.mxu0 0.0
  %252 = vmatpush1.msra.mxu0 0.0
  %253 = vmatprep.subr.mxu0 0.0
  %254 = vmatpush1.msra.mxu0 0.0
  %255 = vmatprep.subr.mxu0 0.0
  %256 = vmatpush1.msra.mxu0 0.0
  %257 = vmatprep.subr.mxu0 0.0
  %258 = vmatpush1.msra.mxu0 0.0
  %259 = vmatprep.subr.mxu0 0.0
  %260 = vmatpush1.msra.mxu0 0.0
  %261 = vmatprep.subr.mxu0 0.0
  %262 = vmatpush1.msra.mxu0 0.0
  %263 = vmatprep.subr.mxu0 0.0
  %264 = vmatpush1.msra.mxu0 0.0
  %265 = vmatprep.subr.mxu0 0.0
  %266 = vmatpush1.msra.mxu0 0.0
  %267 = vmatprep.subr.mxu0 0.0
  %268 = vmatpush1.msra.mxu0 0.0
  %269 = vmatprep.subr.mxu0 0.0
  %270 = vmatpush1.msra.mxu0 0.0
  %271 = vmatprep.subr.mxu0 0.0
  %272 = vmatpush1.msra.mxu0 0.0
  %273 = vmatprep.subr.mxu0 0.0
  %274 = vmatpush1.msra.mxu0 %v220
  %275 = vmatprep.subr.mxu0 0.0
  %276 = vmatpush1.msra.mxu0 %v219
  %277 = vmatprep.subr.mxu0 0.0
  %278 = vmatpush1.msra.mxu0 %v218
  %279 = vmatprep.subr.mxu0 0.0
  %280 = vmatpush1.msra.mxu0 %v217
  %281 = vmatprep.subr.mxu0 0.0
  %282 = vmatpush2.msra.mxu0 0.0
  %283 = vmatprep.subr.mxu0 0.0
  %284 = vmatpush2.msra.mxu0 0.0
  %285 = vmatprep.subr.mxu0 0.0
  %286 = vmatpush2.msra.mxu0 0.0
  %287 = vmatprep.subr.mxu0 0.0
  %288 = vmatpush2.msra.mxu0 0.0
  %289 = vmatprep.subr.mxu0 0.0
  %290 = vmatpush2.msra.mxu0 0.0
  %291 = vmatprep.subr.mxu0 0.0
  %292 = vmatpush2.msra.mxu0 0.0
  %293 = vmatprep.subr.mxu0 0.0
  %294 = vmatpush2.msra.mxu0 0.0
  %295 = vmatprep.subr.mxu0 0.0
  %296 = vmatpush2.msra.mxu0 0.0
  %297 = vmatprep.subr.mxu0 0.0
  %298 = vmatpush2.msra.mxu0 0.0
  %299 = vmatprep.subr.mxu0 0.0
  %300 = vmatpush2.msra.mxu0 0.0
  %301 = vmatprep.subr.mxu0 0.0
  %302 = vmatpush2.msra.mxu0 0.0
  %303 = vmatprep.subr.mxu0 0.0
  %304 = vmatpush2.msra.mxu0 0.0
  %305 = vmatprep.subr.mxu0 0.0
  %306 = vmatpush2.msra.mxu0 0.0
  %307 = vmatprep.subr.mxu0 0.0
  %308 = vmatpush2.msra.mxu0 0.0
  %309 = vmatprep.subr.mxu0 0.0
  %310 = vmatpush2.msra.mxu0 0.0
  %311 = vmatprep.subr.mxu0 0.0
  %312 = vmatpush2.msra.mxu0 0.0
  %313 = vmatprep.mubr.f32.mxu0 0.0
  %314 = vmatmul.mubr.f32.gmra.mxu0 %v229
  %v315 = vpop.f32.mrf.mxu0
  %v316 = vadd.f32 %v226, %v315
  %v317 = vpop.f32.mrf.mxu0
  %318 = vmatprep.mubr.f32.mxu0 0.0
  %319 = vmatmul.mubr.f32.gmra.mxu0 %v232
  %v320 = vpop.f32.mrf.mxu0
  %v321 = vadd.f32 %v226, %v320
  %v322 = vpop.f32.mrf.mxu0
  %323 = vmatprep.mubr.f32.mxu0 0.0
  %324 = vmatmul.mubr.f32.gmra.mxu0 %v235
  %v325 = vpop.f32.mrf.mxu0
  %v326 = vadd.f32 %v226, %v325
  %v327 = vpop.f32.mrf.mxu0
  %328 = vmatprep.mubr.f32.mxu0 0.0
  %329 = vmatmul.mubr.f32.gmra.mxu0 %v238
  %v330 = vpop.f32.mrf.mxu0
  %v331 = vadd.f32 %v226, %v330
  %v332 = vpop.f32.mrf.mxu0
  %333 = vmatprep.mubr.f32.mxu0 0.0
  %334 = vmatmul.mubr.f32.gmra.mxu0 %v241
  %v335 = vpop.f32.mrf.mxu0
  %v336 = vadd.f32 %v226, %v335
  %v337 = vpop.f32.mrf.mxu0
  %338 = vmatprep.mubr.f32.mxu0 0.0
  %339 = vmatmul.mubr.f32.gmra.mxu0 %v244
  %v340 = vpop.f32.mrf.mxu0
  %v341 = vadd.f32 %v226, %v340
  %v342 = vpop.f32.mrf.mxu0
  %343 = vmatprep.mubr.f32.mxu0 0.0
  %344 = vmatmul.mubr.f32.gmra.mxu0 %v247
  %v345 = vpop.f32.mrf.mxu0
  %v346 = vadd.f32 %v226, %v345
  %v347 = vpop.f32.mrf.mxu0
  %348 = vdwg.mxu0
  %v349 = vmax.f32 %v316, 0.0
  %v350 = vmax.f32 %v321, 0.0
  %v351 = vmax.f32 %v326, 0.0
  %v352 = vmax.f32 %v331, 0.0
  %v353 = vmax.f32 %v336, 0.0
  %v354 = vmax.f32 %v341, 0.0
  %v355 = vmax.f32 %v346, 0.0
  %v356 = vld [vmem:[%s5] sm:$0xff]
  %v357 = vld [vmem:[%s5 + $0x8] sm:$0xff]
  %v358 = vld [vmem:[%s5 + $0x10] sm:$0xff]
  %v359 = vld [vmem:[%s5 + $0x18] sm:$0xff]
  %v360 = vld [vmem:[%s6] sm:$0x1]
  %v362 = vlaneseq
  %v363 = vshrl.u32 %v362, 7
  %v364 = vsub.s32 0, %v363
  %v365 = vrot.slane %v360, %v364
  %v368 = vsel %vm88, %v349, 0
  %v371 = vsel %vm88, %v350, 0
  %v374 = vsel %vm88, %v351, 0
  %v377 = vsel %vm88, %v352, 0
  %v380 = vsel %vm88, %v353, 0
  %v383 = vsel %vm88, %v354, 0
  %v386 = vsel %vm88, %v355, 0
  %388 = vmatprep.subr.mxu0 0.0
  %389 = vmatpush1.msra.mxu0 0.0
  %390 = vmatprep.subr.mxu0 0.0
  %391 = vmatpush1.msra.mxu0 0.0
  %392 = vmatprep.subr.mxu0 0.0
  %393 = vmatpush1.msra.mxu0 0.0
  %394 = vmatprep.subr.mxu0 0.0
  %395 = vmatpush1.msra.mxu0 0.0
  %396 = vmatprep.subr.mxu0 0.0
  %397 = vmatpush1.msra.mxu0 0.0
  %398 = vmatprep.subr.mxu0 0.0
  %399 = vmatpush1.msra.mxu0 0.0
  %400 = vmatprep.subr.mxu0 0.0
  %401 = vmatpush1.msra.mxu0 0.0
  %402 = vmatprep.subr.mxu0 0.0
  %403 = vmatpush1.msra.mxu0 0.0
  %404 = vmatprep.subr.mxu0 0.0
  %405 = vmatpush1.msra.mxu0 0.0
  %406 = vmatprep.subr.mxu0 0.0
  %407 = vmatpush1.msra.mxu0 0.0
  %408 = vmatprep.subr.mxu0 0.0
  %409 = vmatpush1.msra.mxu0 0.0
  %410 = vmatprep.subr.mxu0 0.0
  %411 = vmatpush1.msra.mxu0 0.0
  %412 = vmatprep.subr.mxu0 0.0
  %413 = vmatpush1.msra.mxu0 %v359
  %414 = vmatprep.subr.mxu0 0.0
  %415 = vmatpush1.msra.mxu0 %v358
  %416 = vmatprep.subr.mxu0 0.0
  %417 = vmatpush1.msra.mxu0 %v357
  %418 = vmatprep.subr.mxu0 0.0
  %419 = vmatpush1.msra.mxu0 %v356
  %420 = vmatprep.subr.mxu0 0.0
  %421 = vmatpush2.msra.mxu0 0.0
  %422 = vmatprep.subr.mxu0 0.0
  %423 = vmatpush2.msra.mxu0 0.0
  %424 = vmatprep.subr.mxu0 0.0
  %425 = vmatpush2.msra.mxu0 0.0
  %426 = vmatprep.subr.mxu0 0.0
  %427 = vmatpush2.msra.mxu0 0.0
  %428 = vmatprep.subr.mxu0 0.0
  %429 = vmatpush2.msra.mxu0 0.0
  %430 = vmatprep.subr.mxu0 0.0
  %431 = vmatpush2.msra.mxu0 0.0
  %432 = vmatprep.subr.mxu0 0.0
  %433 = vmatpush2.msra.mxu0 0.0
  %434 = vmatprep.subr.mxu0 0.0
  %435 = vmatpush2.msra.mxu0 0.0
  %436 = vmatprep.subr.mxu0 0.0
  %437 = vmatpush2.msra.mxu0 0.0
  %438 = vmatprep.subr.mxu0 0.0
  %439 = vmatpush2.msra.mxu0 0.0
  %440 = vmatprep.subr.mxu0 0.0
  %441 = vmatpush2.msra.mxu0 0.0
  %442 = vmatprep.subr.mxu0 0.0
  %443 = vmatpush2.msra.mxu0 0.0
  %444 = vmatprep.subr.mxu0 0.0
  %445 = vmatpush2.msra.mxu0 0.0
  %446 = vmatprep.subr.mxu0 0.0
  %447 = vmatpush2.msra.mxu0 0.0
  %448 = vmatprep.subr.mxu0 0.0
  %449 = vmatpush2.msra.mxu0 0.0
  %450 = vmatprep.subr.mxu0 0.0
  %451 = vmatpush2.msra.mxu0 0.0
  %452 = vmatprep.mubr.f32.mxu0 0.0
  %453 = vmatmul.mubr.f32.gmra.mxu0 %v368
  %v454 = vpop.f32.mrf.mxu0
  %v455 = vadd.f32 %v365, %v454
  %v456 = vpop.f32.mrf.mxu0
  %457 = vmatprep.mubr.f32.mxu0 0.0
  %458 = vmatmul.mubr.f32.gmra.mxu0 %v371
  %v459 = vpop.f32.mrf.mxu0
  %v460 = vadd.f32 %v365, %v459
  %v461 = vpop.f32.mrf.mxu0
  %462 = vmatprep.mubr.f32.mxu0 0.0
  %463 = vmatmul.mubr.f32.gmra.mxu0 %v374
  %v464 = vpop.f32.mrf.mxu0
  %v465 = vadd.f32 %v365, %v464
  %v466 = vpop.f32.mrf.mxu0
  %467 = vmatprep.mubr.f32.mxu0 0.0
  %468 = vmatmul.mubr.f32.gmra.mxu0 %v377
  %v469 = vpop.f32.mrf.mxu0
  %v470 = vadd.f32 %v365, %v469
  %v471 = vpop.f32.mrf.mxu0
  %472 = vmatprep.mubr.f32.mxu0 0.0
  %473 = vmatmul.mubr.f32.gmra.mxu0 %v380
  %v474 = vpop.f32.mrf.mxu0
  %v475 = vadd.f32 %v365, %v474
  %v476 = vpop.f32.mrf.mxu0
  %477 = vmatprep.mubr.f32.mxu0 0.0
  %478 = vmatmul.mubr.f32.gmra.mxu0 %v383
  %v479 = vpop.f32.mrf.mxu0
  %v480 = vadd.f32 %v365, %v479
  %v481 = vpop.f32.mrf.mxu0
  %482 = vmatprep.mubr.f32.mxu0 0.0
  %483 = vmatmul.mubr.f32.gmra.mxu0 %v386
  %v484 = vpop.f32.mrf.mxu0
  %v485 = vadd.f32 %v365, %v484
  %v486 = vpop.f32.mrf.mxu0
  %487 = vdwg.mxu0
  %vm488 = vcmask 130048
  %v489 = vsel %vm488, %v455, -inf
  %490 = vmax.xlane.f32.xlu0 %v489
  %v491 = vpop.xlane.xlu0 %490
  %v492 = vsel %vm488, %v460, -inf
  %493 = vmax.xlane.f32.xlu0 %v492
  %v494 = vpop.xlane.xlu0 %493
  %v495 = vsel %vm488, %v465, -inf
  %496 = vmax.xlane.f32.xlu0 %v495
  %v497 = vpop.xlane.xlu0 %496
  %v498 = vsel %vm488, %v470, -inf
  %499 = vmax.xlane.f32.xlu0 %v498
  %v500 = vpop.xlane.xlu0 %499
  %v501 = vsel %vm488, %v475, -inf
  %502 = vmax.xlane.f32.xlu0 %v501
  %v503 = vpop.xlane.xlu0 %502
  %v504 = vsel %vm488, %v480, -inf
  %505 = vmax.xlane.f32.xlu0 %v504
  %v506 = vpop.xlane.xlu0 %505
  %v507 = vsel %vm488, %v485, -inf
  %508 = vmax.xlane.f32.xlu0 %v507
  %v509 = vpop.xlane.xlu0 %508
  %v510 = vsub.f32 %v455, %v491
  %v511 = vsub.f32 %v460, %v494
  %v512 = vsub.f32 %v465, %v497
  %v513 = vsub.f32 %v470, %v500
  %v514 = vsub.f32 %v475, %v503
  %v515 = vsub.f32 %v480, %v506
  %v516 = vsub.f32 %v485, %v509
  %v517 = vmul.f32 %v510, 1.442695
  %v518 = vpow.pop %v517
  %v519 = vmul.f32 %v511, 1.442695
  %v520 = vpow.pop %v519
  %v521 = vmul.f32 %v512, 1.442695
  %v522 = vpow.pop %v521
  %v523 = vmul.f32 %v513, 1.442695
  %v524 = vpow.pop %v523
  %v525 = vmul.f32 %v514, 1.442695
  %v526 = vpow.pop %v525
  %v527 = vmul.f32 %v515, 1.442695
  %v528 = vpow.pop %v527
  %v529 = vmul.f32 %v516, 1.442695
  %v530 = vpow.pop %v529
  %v531 = vsel %vm488, %v518, 0.0
  %532 = vadd.xlane.f32.xlu0 %v531
  %v533 = vpop.xlane.xlu0 %532
  %v534 = vsel %vm488, %v520, 0.0
  %535 = vadd.xlane.f32.xlu0 %v534
  %v536 = vpop.xlane.xlu0 %535
  %v537 = vsel %vm488, %v522, 0.0
  %538 = vadd.xlane.f32.xlu0 %v537
  %v539 = vpop.xlane.xlu0 %538
  %v540 = vsel %vm488, %v524, 0.0
  %541 = vadd.xlane.f32.xlu0 %v540
  %v542 = vpop.xlane.xlu0 %541
  %v543 = vsel %vm488, %v526, 0.0
  %544 = vadd.xlane.f32.xlu0 %v543
  %v545 = vpop.xlane.xlu0 %544
  %v546 = vsel %vm488, %v528, 0.0
  %547 = vadd.xlane.f32.xlu0 %v546
  %v548 = vpop.xlane.xlu0 %547
  %v549 = vsel %vm488, %v530, 0.0
  %550 = vadd.xlane.f32.xlu0 %v549
  %v551 = vpop.xlane.xlu0 %550
  %v552 = vrcp.pop %v533
  %v553 = vrcp.pop %v536
  %v554 = vrcp.pop %v539
  %v555 = vrcp.pop %v542
  %v556 = vrcp.pop %v545
  %v557 = vrcp.pop %v548
  %v558 = vrcp.pop %v551
  %v559 = vmul.f32 %v518, %v552
  %v560 = vmul.f32 %v520, %v553
  %v561 = vmul.f32 %v522, %v554
  %v562 = vmul.f32 %v524, %v555
  %v563 = vmul.f32 %v526, %v556
  %v564 = vmul.f32 %v528, %v557
  %v565 = vmul.f32 %v530, %v558
  %566 = vst.msk [vmem:[%s21] sm:$0xff] %vm488, %v559
  %567 = vst.msk [vmem:[%s21 + $0x8] sm:$0xff] %vm488, %v560
  %568 = vst.msk [vmem:[%s21 + $0x10] sm:$0xff] %vm488, %v561
  %569 = vst.msk [vmem:[%s21 + $0x18] sm:$0xff] %vm488, %v562
  %570 = vst.msk [vmem:[%s21 + $0x20] sm:$0xff] %vm488, %v563
  %571 = vst.msk [vmem:[%s21 + $0x28] sm:$0xff] %vm488, %v564
  %572 = vst.msk [vmem:[%s21 + $0x30] sm:$0xff] %vm488, %v565
  %v573 = vmax.f32 %v559, 1e-08
  %v574 = vmax.f32 %v560, 1e-08
  %v575 = vmax.f32 %v561, 1e-08
  %v576 = vmax.f32 %v562, 1e-08
  %v577 = vmax.f32 %v563, 1e-08
  %v578 = vmax.f32 %v564, 1e-08
  %v579 = vmax.f32 %v565, 1e-08
  %v580 = vlog2.pop %v573
  %v581 = vmul.f32 %v580, 0.6931472
  %v582 = vlog2.pop %v574
  %v583 = vmul.f32 %v582, 0.6931472
  %v584 = vlog2.pop %v575
  %v585 = vmul.f32 %v584, 0.6931472
  %v586 = vlog2.pop %v576
  %v587 = vmul.f32 %v586, 0.6931472
  %v588 = vlog2.pop %v577
  %v589 = vmul.f32 %v588, 0.6931472
  %v590 = vlog2.pop %v578
  %v591 = vmul.f32 %v590, 0.6931472
  %v592 = vlog2.pop %v579
  %v593 = vmul.f32 %v592, 0.6931472
  %v594 = vld [vmem:[%s8] sm:$0xff]
  %v595 = vld [vmem:[%s8 + $0x8] sm:$0xff]
  %v596 = vld [vmem:[%s8 + $0x10] sm:$0xff]
  %v597 = vld [vmem:[%s8 + $0x18] sm:$0xff]
  %v598 = vld [vmem:[%s8 + $0x20] sm:$0xff]
  %v599 = vld [vmem:[%s8 + $0x28] sm:$0xff]
  %v600 = vld [vmem:[%s8 + $0x30] sm:$0xff]
  %602 = vset.pattern.permute.xlu0 0
  %603 = vperm.xlu0 %602, %v594
  %v604 = vpop.permute.xlu0 %603
  %607 = vset.pattern.permute.xlu0 0
  %608 = vperm.xlu0 %607, %v595
  %v609 = vpop.permute.xlu0 %608
  %612 = vset.pattern.permute.xlu0 0
  %613 = vperm.xlu0 %612, %v596
  %v614 = vpop.permute.xlu0 %613
  %617 = vset.pattern.permute.xlu0 0
  %618 = vperm.xlu0 %617, %v597
  %v619 = vpop.permute.xlu0 %618
  %622 = vset.pattern.permute.xlu0 0
  %623 = vperm.xlu0 %622, %v598
  %v624 = vpop.permute.xlu0 %623
  %627 = vset.pattern.permute.xlu0 0
  %628 = vperm.xlu0 %627, %v599
  %v629 = vpop.permute.xlu0 %628
  %632 = vset.pattern.permute.xlu0 0
  %633 = vperm.xlu0 %632, %v600
  %v634 = vpop.permute.xlu0 %633
  %v636 = vmul.f32 %v604, %v559
  %v637 = vmul.f32 %v609, %v560
  %v638 = vmul.f32 %v614, %v561
  %v639 = vmul.f32 %v619, %v562
  %v640 = vmul.f32 %v624, %v563
  %v641 = vmul.f32 %v629, %v564
  %v642 = vmul.f32 %v634, %v565
  %v643 = vld [vmem:[%s7] sm:$0xff]
  %v644 = vld [vmem:[%s7 + $0x8] sm:$0xff]
  %v645 = vld [vmem:[%s7 + $0x10] sm:$0xff]
  %v646 = vld [vmem:[%s7 + $0x18] sm:$0xff]
  %v647 = vld [vmem:[%s7 + $0x20] sm:$0xff]
  %v648 = vld [vmem:[%s7 + $0x28] sm:$0xff]
  %v649 = vld [vmem:[%s7 + $0x30] sm:$0xff]
  %v650 = vsub.f32 %v581, %v643
  %v651 = vsub.f32 %v583, %v644
  %v652 = vsub.f32 %v585, %v645
  %v653 = vsub.f32 %v587, %v646
  %v654 = vsub.f32 %v589, %v647
  %v655 = vsub.f32 %v591, %v648
  %v656 = vsub.f32 %v593, %v649
  %v657 = vmul.f32 %v636, %v650
  %v658 = vmul.f32 %v637, %v651
  %v659 = vmul.f32 %v638, %v652
  %v660 = vmul.f32 %v639, %v653
  %v661 = vmul.f32 %v640, %v654
  %v662 = vmul.f32 %v641, %v655
  %v663 = vmul.f32 %v642, %v656
  %v664 = vsel %vm488, %v657, 0.0
  %v665 = vsel %vm488, %v658, 0.0
  %v666 = vadd.f32 %v664, %v665
  %v667 = vsel %vm488, %v659, 0.0
  %v668 = vadd.f32 %v666, %v667
  %v669 = vsel %vm488, %v660, 0.0
  %v670 = vadd.f32 %v668, %v669
  %v671 = vsel %vm488, %v661, 0.0
  %v672 = vadd.f32 %v670, %v671
  %v673 = vsel %vm488, %v662, 0.0
  %v674 = vadd.f32 %v672, %v673
  %v675 = vsel %vm488, %v663, 0.0
  %v676 = vadd.f32 %v674, %v675
  %677 = vadd.xlane.f32.xlu0 %v676
  %v678 = vpop.xlane.xlu0 %677
  %v679 = vrot.slane %v678, 4
  %v680 = vadd.f32 %v678, %v679
  %v681 = vrot.slane %v680, 2
  %v682 = vadd.f32 %v680, %v681
  %v683 = vrot.slane %v682, 1
  %v684 = vadd.f32 %v682, %v683
  %s685 = vtos %v684
  %v686 = vld [vmem:[%s9] sm:$0xff]
  %v687 = vld [vmem:[%s9 + $0x8] sm:$0xff]
  %v689 = vsel %vm488, %v559, 0
  %v692 = vsel %vm488, %v560, 0
  %v695 = vsel %vm488, %v561, 0
  %v698 = vsel %vm488, %v562, 0
  %v701 = vsel %vm488, %v563, 0
  %v704 = vsel %vm488, %v564, 0
  %v707 = vsel %vm488, %v565, 0
  %709 = vmatprep.subr.mxu0 0.0
  %710 = vmatpush1.msra.mxu0 0.0
  %711 = vmatprep.subr.mxu0 0.0
  %712 = vmatpush1.msra.mxu0 0.0
  %713 = vmatprep.subr.mxu0 0.0
  %714 = vmatpush1.msra.mxu0 0.0
  %715 = vmatprep.subr.mxu0 0.0
  %716 = vmatpush1.msra.mxu0 0.0
  %717 = vmatprep.subr.mxu0 0.0
  %718 = vmatpush1.msra.mxu0 0.0
  %719 = vmatprep.subr.mxu0 0.0
  %720 = vmatpush1.msra.mxu0 0.0
  %721 = vmatprep.subr.mxu0 0.0
  %722 = vmatpush1.msra.mxu0 0.0
  %723 = vmatprep.subr.mxu0 0.0
  %724 = vmatpush1.msra.mxu0 0.0
  %725 = vmatprep.subr.mxu0 0.0
  %726 = vmatpush1.msra.mxu0 0.0
  %727 = vmatprep.subr.mxu0 0.0
  %728 = vmatpush1.msra.mxu0 0.0
  %729 = vmatprep.subr.mxu0 0.0
  %730 = vmatpush1.msra.mxu0 0.0
  %731 = vmatprep.subr.mxu0 0.0
  %732 = vmatpush1.msra.mxu0 0.0
  %733 = vmatprep.subr.mxu0 0.0
  %734 = vmatpush1.msra.mxu0 0.0
  %735 = vmatprep.subr.mxu0 0.0
  %736 = vmatpush1.msra.mxu0 0.0
  %737 = vmatprep.subr.mxu0 0.0
  %738 = vmatpush1.msra.mxu0 %v687
  %739 = vmatprep.subr.mxu0 0.0
  %740 = vmatpush1.msra.mxu0 %v686
  %741 = vmatprep.subr.mxu0 0.0
  %742 = vmatpush2.msra.mxu0 0.0
  %743 = vmatprep.subr.mxu0 0.0
  %744 = vmatpush2.msra.mxu0 0.0
  %745 = vmatprep.subr.mxu0 0.0
  %746 = vmatpush2.msra.mxu0 0.0
  %747 = vmatprep.subr.mxu0 0.0
  %748 = vmatpush2.msra.mxu0 0.0
  %749 = vmatprep.subr.mxu0 0.0
  %750 = vmatpush2.msra.mxu0 0.0
  %751 = vmatprep.subr.mxu0 0.0
  %752 = vmatpush2.msra.mxu0 0.0
  %753 = vmatprep.subr.mxu0 0.0
  %754 = vmatpush2.msra.mxu0 0.0
  %755 = vmatprep.subr.mxu0 0.0
  %756 = vmatpush2.msra.mxu0 0.0
  %757 = vmatprep.subr.mxu0 0.0
  %758 = vmatpush2.msra.mxu0 0.0
  %759 = vmatprep.subr.mxu0 0.0
  %760 = vmatpush2.msra.mxu0 0.0
  %761 = vmatprep.subr.mxu0 0.0
  %762 = vmatpush2.msra.mxu0 0.0
  %763 = vmatprep.subr.mxu0 0.0
  %764 = vmatpush2.msra.mxu0 0.0
  %765 = vmatprep.subr.mxu0 0.0
  %766 = vmatpush2.msra.mxu0 0.0
  %767 = vmatprep.subr.mxu0 0.0
  %768 = vmatpush2.msra.mxu0 0.0
  %769 = vmatprep.subr.mxu0 0.0
  %770 = vmatpush2.msra.mxu0 0.0
  %771 = vmatprep.subr.mxu0 0.0
  %772 = vmatpush2.msra.mxu0 0.0
  %773 = vmatprep.mubr.f32.mxu0 0.0
  %774 = vmatmul.mubr.f32.gmra.mxu0 %v689
  %v775 = vpop.f32.mrf.mxu0
  %v776 = vadd.f32 0.0, %v775
  %v777 = vpop.f32.mrf.mxu0
  %778 = vmatprep.mubr.f32.mxu0 0.0
  %779 = vmatmul.mubr.f32.gmra.mxu0 %v692
  %v780 = vpop.f32.mrf.mxu0
  %v781 = vadd.f32 0.0, %v780
  %v782 = vpop.f32.mrf.mxu0
  %783 = vmatprep.mubr.f32.mxu0 0.0
  %784 = vmatmul.mubr.f32.gmra.mxu0 %v695
  %v785 = vpop.f32.mrf.mxu0
  %v786 = vadd.f32 0.0, %v785
  %v787 = vpop.f32.mrf.mxu0
  %788 = vmatprep.mubr.f32.mxu0 0.0
  %789 = vmatmul.mubr.f32.gmra.mxu0 %v698
  %v790 = vpop.f32.mrf.mxu0
  %v791 = vadd.f32 0.0, %v790
  %v792 = vpop.f32.mrf.mxu0
  %793 = vmatprep.mubr.f32.mxu0 0.0
  %794 = vmatmul.mubr.f32.gmra.mxu0 %v701
  %v795 = vpop.f32.mrf.mxu0
  %v796 = vadd.f32 0.0, %v795
  %v797 = vpop.f32.mrf.mxu0
  %798 = vmatprep.mubr.f32.mxu0 0.0
  %799 = vmatmul.mubr.f32.gmra.mxu0 %v704
  %v800 = vpop.f32.mrf.mxu0
  %v801 = vadd.f32 0.0, %v800
  %v802 = vpop.f32.mrf.mxu0
  %803 = vmatprep.mubr.f32.mxu0 0.0
  %804 = vmatmul.mubr.f32.gmra.mxu0 %v707
  %v805 = vpop.f32.mrf.mxu0
  %v806 = vadd.f32 0.0, %v805
  %v807 = vpop.f32.mrf.mxu0
  %808 = vdwg.mxu0
  %v809 = vld [vmem:[%s13] sm:$0xff]
  %v810 = vld [vmem:[%s13 + $0x8] sm:$0xff]
  %v811 = vld [vmem:[%s13 + $0x10] sm:$0xff]
  %v812 = vld [vmem:[%s13 + $0x18] sm:$0xff]
  %v813 = vld [vmem:[%s13 + $0x20] sm:$0xff]
  %v814 = vld [vmem:[%s13 + $0x28] sm:$0xff]
  %v815 = vld [vmem:[%s13 + $0x30] sm:$0xff]
  %v816 = vld [vmem:[%s13 + $0x38] sm:$0xff]
  %v817 = vld [vmem:[%s13 + $0x40] sm:$0xff]
  %v818 = vld [vmem:[%s13 + $0x48] sm:$0xff]
  %v819 = vld [vmem:[%s13 + $0x50] sm:$0xff]
  %v820 = vld [vmem:[%s13 + $0x58] sm:$0xff]
  %v821 = vld [vmem:[%s13 + $0x60] sm:$0xff]
  %v822 = vld [vmem:[%s13 + $0x68] sm:$0xff]
  %v823 = vld [vmem:[%s13 + $0x70] sm:$0xff]
  %v824 = vld [vmem:[%s13 + $0x78] sm:$0xff]
  %v825 = vld [vmem:[%s13 + $0x80] sm:$0xff]
  %v826 = vld [vmem:[%s13 + $0x88] sm:$0xff]
  %v827 = vld [vmem:[%s13 + $0x90] sm:$0xff]
  %v828 = vld [vmem:[%s13 + $0x98] sm:$0xff]
  %v829 = vld [vmem:[%s13 + $0xa0] sm:$0xff]
  %v830 = vld [vmem:[%s13 + $0xa8] sm:$0xff]
  %v831 = vld [vmem:[%s10] sm:$0xff]
  %v832 = vld [vmem:[%s10 + $0x8] sm:$0xff]
  %833 = vmatprep.subr.mxu0 0.0
  %834 = vmatpush1.msra.mxu0 0.0
  %835 = vmatprep.subr.mxu0 0.0
  %836 = vmatpush1.msra.mxu0 0.0
  %837 = vmatprep.subr.mxu0 0.0
  %838 = vmatpush1.msra.mxu0 0.0
  %839 = vmatprep.subr.mxu0 0.0
  %840 = vmatpush1.msra.mxu0 0.0
  %841 = vmatprep.subr.mxu0 0.0
  %842 = vmatpush1.msra.mxu0 0.0
  %843 = vmatprep.subr.mxu0 0.0
  %844 = vmatpush1.msra.mxu0 0.0
  %845 = vmatprep.subr.mxu0 0.0
  %846 = vmatpush1.msra.mxu0 0.0
  %847 = vmatprep.subr.mxu0 0.0
  %848 = vmatpush1.msra.mxu0 0.0
  %849 = vmatprep.subr.mxu0 0.0
  %850 = vmatpush1.msra.mxu0 0.0
  %851 = vmatprep.subr.mxu0 0.0
  %852 = vmatpush1.msra.mxu0 0.0
  %853 = vmatprep.subr.mxu0 0.0
  %854 = vmatpush1.msra.mxu0 0.0
  %855 = vmatprep.subr.mxu0 0.0
  %856 = vmatpush1.msra.mxu0 0.0
  %857 = vmatprep.subr.mxu0 0.0
  %858 = vmatpush1.msra.mxu0 0.0
  %859 = vmatprep.subr.mxu0 0.0
  %860 = vmatpush1.msra.mxu0 0.0
  %861 = vmatprep.subr.mxu0 0.0
  %862 = vmatpush1.msra.mxu0 %v832
  %863 = vmatprep.subr.mxu0 0.0
  %864 = vmatpush1.msra.mxu0 %v831
  %865 = vmatprep.subr.mxu0 0.0
  %866 = vmatpush2.msra.mxu0 0.0
  %867 = vmatprep.subr.mxu0 0.0
  %868 = vmatpush2.msra.mxu0 0.0
  %869 = vmatprep.subr.mxu0 0.0
  %870 = vmatpush2.msra.mxu0 0.0
  %871 = vmatprep.subr.mxu0 0.0
  %872 = vmatpush2.msra.mxu0 0.0
  %873 = vmatprep.subr.mxu0 0.0
  %874 = vmatpush2.msra.mxu0 0.0
  %875 = vmatprep.subr.mxu0 0.0
  %876 = vmatpush2.msra.mxu0 0.0
  %877 = vmatprep.subr.mxu0 0.0
  %878 = vmatpush2.msra.mxu0 0.0
  %879 = vmatprep.subr.mxu0 0.0
  %880 = vmatpush2.msra.mxu0 0.0
  %881 = vmatprep.subr.mxu0 0.0
  %882 = vmatpush2.msra.mxu0 0.0
  %883 = vmatprep.subr.mxu0 0.0
  %884 = vmatpush2.msra.mxu0 0.0
  %885 = vmatprep.subr.mxu0 0.0
  %886 = vmatpush2.msra.mxu0 0.0
  %887 = vmatprep.subr.mxu0 0.0
  %888 = vmatpush2.msra.mxu0 0.0
  %889 = vmatprep.subr.mxu0 0.0
  %890 = vmatpush2.msra.mxu0 0.0
  %891 = vmatprep.subr.mxu0 0.0
  %892 = vmatpush2.msra.mxu0 0.0
  %893 = vmatprep.subr.mxu0 0.0
  %894 = vmatpush2.msra.mxu0 0.0
  %895 = vmatprep.subr.mxu0 0.0
  %896 = vmatpush2.msra.mxu0 0.0
  %897 = vmatprep.mubr.f32.mxu0 0.0
  %898 = vmatmul.mubr.f32.gmra.mxu0 %v689
  %v899 = vpop.f32.mrf.mxu0
  %v900 = vadd.f32 0.0, %v899
  %v901 = vpop.f32.mrf.mxu0
  %902 = vmatprep.mubr.f32.mxu0 0.0
  %903 = vmatmul.mubr.f32.gmra.mxu0 %v692
  %v904 = vpop.f32.mrf.mxu0
  %v905 = vadd.f32 0.0, %v904
  %v906 = vpop.f32.mrf.mxu0
  %907 = vmatprep.mubr.f32.mxu0 0.0
  %908 = vmatmul.mubr.f32.gmra.mxu0 %v695
  %v909 = vpop.f32.mrf.mxu0
  %v910 = vadd.f32 0.0, %v909
  %v911 = vpop.f32.mrf.mxu0
  %912 = vmatprep.mubr.f32.mxu0 0.0
  %913 = vmatmul.mubr.f32.gmra.mxu0 %v698
  %v914 = vpop.f32.mrf.mxu0
  %v915 = vadd.f32 0.0, %v914
  %v916 = vpop.f32.mrf.mxu0
  %917 = vmatprep.mubr.f32.mxu0 0.0
  %918 = vmatmul.mubr.f32.gmra.mxu0 %v701
  %v919 = vpop.f32.mrf.mxu0
  %v920 = vadd.f32 0.0, %v919
  %v921 = vpop.f32.mrf.mxu0
  %922 = vmatprep.mubr.f32.mxu0 0.0
  %923 = vmatmul.mubr.f32.gmra.mxu0 %v704
  %v924 = vpop.f32.mrf.mxu0
  %v925 = vadd.f32 0.0, %v924
  %v926 = vpop.f32.mrf.mxu0
  %927 = vmatprep.mubr.f32.mxu0 0.0
  %928 = vmatmul.mubr.f32.gmra.mxu0 %v707
  %v929 = vpop.f32.mrf.mxu0
  %v930 = vadd.f32 0.0, %v929
  %v931 = vpop.f32.mrf.mxu0
  %932 = vdwg.mxu0
  %v933 = vld [vmem:[%s14] sm:$0xff]
  %v934 = vld [vmem:[%s14 + $0x8] sm:$0xff]
  %v935 = vld [vmem:[%s14 + $0x10] sm:$0xff]
  %v936 = vld [vmem:[%s14 + $0x18] sm:$0xff]
  %v937 = vld [vmem:[%s14 + $0x20] sm:$0xff]
  %v938 = vld [vmem:[%s14 + $0x28] sm:$0xff]
  %v939 = vld [vmem:[%s14 + $0x30] sm:$0xff]
  %v940 = vld [vmem:[%s14 + $0x38] sm:$0xff]
  %v941 = vld [vmem:[%s14 + $0x40] sm:$0xff]
  %v942 = vld [vmem:[%s14 + $0x48] sm:$0xff]
  %v943 = vld [vmem:[%s14 + $0x50] sm:$0xff]
  %v944 = vld [vmem:[%s14 + $0x58] sm:$0xff]
  %v945 = vld [vmem:[%s14 + $0x60] sm:$0xff]
  %v946 = vld [vmem:[%s14 + $0x68] sm:$0xff]
  %v947 = vld [vmem:[%s14 + $0x70] sm:$0xff]
  %v948 = vld [vmem:[%s14 + $0x78] sm:$0xff]
  %v949 = vld [vmem:[%s14 + $0x80] sm:$0xff]
  %v950 = vld [vmem:[%s14 + $0x88] sm:$0xff]
  %v951 = vld [vmem:[%s14 + $0x90] sm:$0xff]
  %v952 = vld [vmem:[%s14 + $0x98] sm:$0xff]
  %v953 = vld [vmem:[%s14 + $0xa0] sm:$0xff]
  %v954 = vld [vmem:[%s14 + $0xa8] sm:$0xff]
  %vm955 = vcmask 457728
  %v957 = vsel %vm955, %v933, 0
  %v960 = vsel %vm955, %v934, 0
  %v963 = vsel %vm955, %v935, 0
  %v966 = vsel %vm955, %v936, 0
  %v969 = vsel %vm955, %v937, 0
  %v972 = vsel %vm955, %v938, 0
  %v975 = vsel %vm955, %v939, 0
  %v978 = vsel %vm955, %v940, 0
  %v981 = vsel %vm955, %v941, 0
  %v984 = vsel %vm955, %v942, 0
  %v987 = vsel %vm955, %v943, 0
  %v990 = vsel %vm955, %v944, 0
  %v993 = vsel %vm955, %v945, 0
  %v996 = vsel %vm955, %v946, 0
  %v999 = vsel %vm955, %v947, 0
  %v1002 = vsel %vm955, %v948, 0
  %v1005 = vsel %vm955, %v949, 0
  %v1008 = vsel %vm955, %v950, 0
  %v1011 = vsel %vm955, %v951, 0
  %v1014 = vsel %vm955, %v952, 0
  %v1017 = vsel %vm955, %v953, 0
  %v1020 = vsel %vm955, %v954, 0
  %1022 = vmatprep.subr.mxu0 0.0
  %1023 = vmatpush1.msra.mxu0 0.0
  %1024 = vmatprep.subr.mxu0 0.0
  %1025 = vmatpush1.msra.mxu0 0.0
  %1026 = vmatprep.subr.mxu0 0.0
  %1027 = vmatpush1.msra.mxu0 0.0
  %1028 = vmatprep.subr.mxu0 0.0
  %1029 = vmatpush1.msra.mxu0 0.0
  %1030 = vmatprep.subr.mxu0 0.0
  %1031 = vmatpush1.msra.mxu0 0.0
  %1032 = vmatprep.subr.mxu0 0.0
  %1033 = vmatpush1.msra.mxu0 0.0
  %1034 = vmatprep.subr.mxu0 0.0
  %1035 = vmatpush1.msra.mxu0 0.0
  %1036 = vmatprep.subr.mxu0 0.0
  %1037 = vmatpush1.msra.mxu0 0.0
  %1038 = vmatprep.subr.mxu0 0.0
  %1039 = vmatpush1.msra.mxu0 0.0
  %1040 = vmatprep.subr.mxu0 0.0
  %1041 = vmatpush1.msra.mxu0 %v930
  %1042 = vmatprep.subr.mxu0 0.0
  %1043 = vmatpush1.msra.mxu0 %v925
  %1044 = vmatprep.subr.mxu0 0.0
  %1045 = vmatpush1.msra.mxu0 %v920
  %1046 = vmatprep.subr.mxu0 0.0
  %1047 = vmatpush1.msra.mxu0 %v915
  %1048 = vmatprep.subr.mxu0 0.0
  %1049 = vmatpush1.msra.mxu0 %v910
  %1050 = vmatprep.subr.mxu0 0.0
  %1051 = vmatpush1.msra.mxu0 %v905
  %1052 = vmatprep.subr.mxu0 0.0
  %1053 = vmatpush1.msra.mxu0 %v900
  %1054 = vmatprep.subr.mxu0 0.0
  %1055 = vmatpush2.msra.mxu0 0.0
  %1056 = vmatprep.subr.mxu0 0.0
  %1057 = vmatpush2.msra.mxu0 0.0
  %1058 = vmatprep.subr.mxu0 0.0
  %1059 = vmatpush2.msra.mxu0 0.0
  %1060 = vmatprep.subr.mxu0 0.0
  %1061 = vmatpush2.msra.mxu0 0.0
  %1062 = vmatprep.subr.mxu0 0.0
  %1063 = vmatpush2.msra.mxu0 0.0
  %1064 = vmatprep.subr.mxu0 0.0
  %1065 = vmatpush2.msra.mxu0 0.0
  %1066 = vmatprep.subr.mxu0 0.0
  %1067 = vmatpush2.msra.mxu0 0.0
  %1068 = vmatprep.subr.mxu0 0.0
  %1069 = vmatpush2.msra.mxu0 0.0
  %1070 = vmatprep.subr.mxu0 0.0
  %1071 = vmatpush2.msra.mxu0 0.0
  %1072 = vmatprep.subr.mxu0 0.0
  %1073 = vmatpush2.msra.mxu0 0.0
  %1074 = vmatprep.subr.mxu0 0.0
  %1075 = vmatpush2.msra.mxu0 0.0
  %1076 = vmatprep.subr.mxu0 0.0
  %1077 = vmatpush2.msra.mxu0 0.0
  %1078 = vmatprep.subr.mxu0 0.0
  %1079 = vmatpush2.msra.mxu0 0.0
  %1080 = vmatprep.subr.mxu0 0.0
  %1081 = vmatpush2.msra.mxu0 0.0
  %1082 = vmatprep.subr.mxu0 0.0
  %1083 = vmatpush2.msra.mxu0 0.0
  %1084 = vmatprep.subr.mxu0 0.0
  %1085 = vmatpush2.msra.mxu0 0.0
  %1086 = vmatprep.mubr.f32.mxu0 0.0
  %1087 = vmatmul.mubr.f32.gmra.mxu0 %v957
  %v1088 = vpop.f32.mrf.mxu0
  %v1089 = vadd.f32 0.0, %v1088
  %v1090 = vpop.f32.mrf.mxu0
  %1091 = vmatprep.mubr.f32.mxu0 0.0
  %1092 = vmatmul.mubr.f32.gmra.mxu0 %v960
  %v1093 = vpop.f32.mrf.mxu0
  %v1094 = vadd.f32 0.0, %v1093
  %v1095 = vpop.f32.mrf.mxu0
  %1096 = vmatprep.mubr.f32.mxu0 0.0
  %1097 = vmatmul.mubr.f32.gmra.mxu0 %v963
  %v1098 = vpop.f32.mrf.mxu0
  %v1099 = vadd.f32 0.0, %v1098
  %v1100 = vpop.f32.mrf.mxu0
  %1101 = vmatprep.mubr.f32.mxu0 0.0
  %1102 = vmatmul.mubr.f32.gmra.mxu0 %v966
  %v1103 = vpop.f32.mrf.mxu0
  %v1104 = vadd.f32 0.0, %v1103
  %v1105 = vpop.f32.mrf.mxu0
  %1106 = vmatprep.mubr.f32.mxu0 0.0
  %1107 = vmatmul.mubr.f32.gmra.mxu0 %v969
  %v1108 = vpop.f32.mrf.mxu0
  %v1109 = vadd.f32 0.0, %v1108
  %v1110 = vpop.f32.mrf.mxu0
  %1111 = vmatprep.mubr.f32.mxu0 0.0
  %1112 = vmatmul.mubr.f32.gmra.mxu0 %v972
  %v1113 = vpop.f32.mrf.mxu0
  %v1114 = vadd.f32 0.0, %v1113
  %v1115 = vpop.f32.mrf.mxu0
  %1116 = vmatprep.mubr.f32.mxu0 0.0
  %1117 = vmatmul.mubr.f32.gmra.mxu0 %v975
  %v1118 = vpop.f32.mrf.mxu0
  %v1119 = vadd.f32 0.0, %v1118
  %v1120 = vpop.f32.mrf.mxu0
  %1121 = vmatprep.mubr.f32.mxu0 0.0
  %1122 = vmatmul.mubr.f32.gmra.mxu0 %v978
  %v1123 = vpop.f32.mrf.mxu0
  %v1124 = vadd.f32 0.0, %v1123
  %v1125 = vpop.f32.mrf.mxu0
  %1126 = vmatprep.mubr.f32.mxu0 0.0
  %1127 = vmatmul.mubr.f32.gmra.mxu0 %v981
  %v1128 = vpop.f32.mrf.mxu0
  %v1129 = vadd.f32 0.0, %v1128
  %v1130 = vpop.f32.mrf.mxu0
  %1131 = vmatprep.mubr.f32.mxu0 0.0
  %1132 = vmatmul.mubr.f32.gmra.mxu0 %v984
  %v1133 = vpop.f32.mrf.mxu0
  %v1134 = vadd.f32 0.0, %v1133
  %v1135 = vpop.f32.mrf.mxu0
  %1136 = vmatprep.mubr.f32.mxu0 0.0
  %1137 = vmatmul.mubr.f32.gmra.mxu0 %v987
  %v1138 = vpop.f32.mrf.mxu0
  %v1139 = vadd.f32 0.0, %v1138
  %v1140 = vpop.f32.mrf.mxu0
  %1141 = vmatprep.mubr.f32.mxu0 0.0
  %1142 = vmatmul.mubr.f32.gmra.mxu0 %v990
  %v1143 = vpop.f32.mrf.mxu0
  %v1144 = vadd.f32 0.0, %v1143
  %v1145 = vpop.f32.mrf.mxu0
  %1146 = vmatprep.mubr.f32.mxu0 0.0
  %1147 = vmatmul.mubr.f32.gmra.mxu0 %v993
  %v1148 = vpop.f32.mrf.mxu0
  %v1149 = vadd.f32 0.0, %v1148
  %v1150 = vpop.f32.mrf.mxu0
  %1151 = vmatprep.mubr.f32.mxu0 0.0
  %1152 = vmatmul.mubr.f32.gmra.mxu0 %v996
  %v1153 = vpop.f32.mrf.mxu0
  %v1154 = vadd.f32 0.0, %v1153
  %v1155 = vpop.f32.mrf.mxu0
  %1156 = vmatprep.mubr.f32.mxu0 0.0
  %1157 = vmatmul.mubr.f32.gmra.mxu0 %v999
  %v1158 = vpop.f32.mrf.mxu0
  %v1159 = vadd.f32 0.0, %v1158
  %v1160 = vpop.f32.mrf.mxu0
  %1161 = vmatprep.mubr.f32.mxu0 0.0
  %1162 = vmatmul.mubr.f32.gmra.mxu0 %v1002
  %v1163 = vpop.f32.mrf.mxu0
  %v1164 = vadd.f32 0.0, %v1163
  %v1165 = vpop.f32.mrf.mxu0
  %1166 = vmatprep.mubr.f32.mxu0 0.0
  %1167 = vmatmul.mubr.f32.gmra.mxu0 %v1005
  %v1168 = vpop.f32.mrf.mxu0
  %v1169 = vadd.f32 0.0, %v1168
  %v1170 = vpop.f32.mrf.mxu0
  %1171 = vmatprep.mubr.f32.mxu0 0.0
  %1172 = vmatmul.mubr.f32.gmra.mxu0 %v1008
  %v1173 = vpop.f32.mrf.mxu0
  %v1174 = vadd.f32 0.0, %v1173
  %v1175 = vpop.f32.mrf.mxu0
  %1176 = vmatprep.mubr.f32.mxu0 0.0
  %1177 = vmatmul.mubr.f32.gmra.mxu0 %v1011
  %v1178 = vpop.f32.mrf.mxu0
  %v1179 = vadd.f32 0.0, %v1178
  %v1180 = vpop.f32.mrf.mxu0
  %1181 = vmatprep.mubr.f32.mxu0 0.0
  %1182 = vmatmul.mubr.f32.gmra.mxu0 %v1014
  %v1183 = vpop.f32.mrf.mxu0
  %v1184 = vadd.f32 0.0, %v1183
  %v1185 = vpop.f32.mrf.mxu0
  %1186 = vmatprep.mubr.f32.mxu0 0.0
  %1187 = vmatmul.mubr.f32.gmra.mxu0 %v1017
  %v1188 = vpop.f32.mrf.mxu0
  %v1189 = vadd.f32 0.0, %v1188
  %v1190 = vpop.f32.mrf.mxu0
  %1191 = vmatprep.mubr.f32.mxu0 0.0
  %1192 = vmatmul.mubr.f32.gmra.mxu0 %v1020
  %v1193 = vpop.f32.mrf.mxu0
  %v1194 = vadd.f32 0.0, %v1193
  %v1195 = vpop.f32.mrf.mxu0
  %1196 = vdwg.mxu0
  %v1198 = vsel %vm955, %v809, 0
  %v1201 = vsel %vm955, %v810, 0
  %v1204 = vsel %vm955, %v811, 0
  %v1207 = vsel %vm955, %v812, 0
  %v1210 = vsel %vm955, %v813, 0
  %v1213 = vsel %vm955, %v814, 0
  %v1216 = vsel %vm955, %v815, 0
  %v1219 = vsel %vm955, %v816, 0
  %v1222 = vsel %vm955, %v817, 0
  %v1225 = vsel %vm955, %v818, 0
  %v1228 = vsel %vm955, %v819, 0
  %v1231 = vsel %vm955, %v820, 0
  %v1234 = vsel %vm955, %v821, 0
  %v1237 = vsel %vm955, %v822, 0
  %v1240 = vsel %vm955, %v823, 0
  %v1243 = vsel %vm955, %v824, 0
  %v1246 = vsel %vm955, %v825, 0
  %v1249 = vsel %vm955, %v826, 0
  %v1252 = vsel %vm955, %v827, 0
  %v1255 = vsel %vm955, %v828, 0
  %v1258 = vsel %vm955, %v829, 0
  %v1261 = vsel %vm955, %v830, 0
  %1263 = vmatprep.subr.mxu0 0.0
  %1264 = vmatpush1.msra.mxu0 0.0
  %1265 = vmatprep.subr.mxu0 0.0
  %1266 = vmatpush1.msra.mxu0 0.0
  %1267 = vmatprep.subr.mxu0 0.0
  %1268 = vmatpush1.msra.mxu0 0.0
  %1269 = vmatprep.subr.mxu0 0.0
  %1270 = vmatpush1.msra.mxu0 0.0
  %1271 = vmatprep.subr.mxu0 0.0
  %1272 = vmatpush1.msra.mxu0 0.0
  %1273 = vmatprep.subr.mxu0 0.0
  %1274 = vmatpush1.msra.mxu0 0.0
  %1275 = vmatprep.subr.mxu0 0.0
  %1276 = vmatpush1.msra.mxu0 0.0
  %1277 = vmatprep.subr.mxu0 0.0
  %1278 = vmatpush1.msra.mxu0 0.0
  %1279 = vmatprep.subr.mxu0 0.0
  %1280 = vmatpush1.msra.mxu0 0.0
  %1281 = vmatprep.subr.mxu0 0.0
  %1282 = vmatpush1.msra.mxu0 %v806
  %1283 = vmatprep.subr.mxu0 0.0
  %1284 = vmatpush1.msra.mxu0 %v801
  %1285 = vmatprep.subr.mxu0 0.0
  %1286 = vmatpush1.msra.mxu0 %v796
  %1287 = vmatprep.subr.mxu0 0.0
  %1288 = vmatpush1.msra.mxu0 %v791
  %1289 = vmatprep.subr.mxu0 0.0
  %1290 = vmatpush1.msra.mxu0 %v786
  %1291 = vmatprep.subr.mxu0 0.0
  %1292 = vmatpush1.msra.mxu0 %v781
  %1293 = vmatprep.subr.mxu0 0.0
  %1294 = vmatpush1.msra.mxu0 %v776
  %1295 = vmatprep.subr.mxu0 0.0
  %1296 = vmatpush2.msra.mxu0 0.0
  %1297 = vmatprep.subr.mxu0 0.0
  %1298 = vmatpush2.msra.mxu0 0.0
  %1299 = vmatprep.subr.mxu0 0.0
  %1300 = vmatpush2.msra.mxu0 0.0
  %1301 = vmatprep.subr.mxu0 0.0
  %1302 = vmatpush2.msra.mxu0 0.0
  %1303 = vmatprep.subr.mxu0 0.0
  %1304 = vmatpush2.msra.mxu0 0.0
  %1305 = vmatprep.subr.mxu0 0.0
  %1306 = vmatpush2.msra.mxu0 0.0
  %1307 = vmatprep.subr.mxu0 0.0
  %1308 = vmatpush2.msra.mxu0 0.0
  %1309 = vmatprep.subr.mxu0 0.0
  %1310 = vmatpush2.msra.mxu0 0.0
  %1311 = vmatprep.subr.mxu0 0.0
  %1312 = vmatpush2.msra.mxu0 0.0
  %1313 = vmatprep.subr.mxu0 0.0
  %1314 = vmatpush2.msra.mxu0 0.0
  %1315 = vmatprep.subr.mxu0 0.0
  %1316 = vmatpush2.msra.mxu0 0.0
  %1317 = vmatprep.subr.mxu0 0.0
  %1318 = vmatpush2.msra.mxu0 0.0
  %1319 = vmatprep.subr.mxu0 0.0
  %1320 = vmatpush2.msra.mxu0 0.0
  %1321 = vmatprep.subr.mxu0 0.0
  %1322 = vmatpush2.msra.mxu0 0.0
  %1323 = vmatprep.subr.mxu0 0.0
  %1324 = vmatpush2.msra.mxu0 0.0
  %1325 = vmatprep.subr.mxu0 0.0
  %1326 = vmatpush2.msra.mxu0 0.0
  %1327 = vmatprep.mubr.f32.mxu0 0.0
  %1328 = vmatmul.mubr.f32.gmra.mxu0 %v1198
  %v1329 = vpop.f32.mrf.mxu0
  %v1330 = vadd.f32 %v1089, %v1329
  %v1331 = vpop.f32.mrf.mxu0
  %1332 = vmatprep.mubr.f32.mxu0 0.0
  %1333 = vmatmul.mubr.f32.gmra.mxu0 %v1201
  %v1334 = vpop.f32.mrf.mxu0
  %v1335 = vadd.f32 %v1094, %v1334
  %v1336 = vpop.f32.mrf.mxu0
  %1337 = vmatprep.mubr.f32.mxu0 0.0
  %1338 = vmatmul.mubr.f32.gmra.mxu0 %v1204
  %v1339 = vpop.f32.mrf.mxu0
  %v1340 = vadd.f32 %v1099, %v1339
  %v1341 = vpop.f32.mrf.mxu0
  %1342 = vmatprep.mubr.f32.mxu0 0.0
  %1343 = vmatmul.mubr.f32.gmra.mxu0 %v1207
  %v1344 = vpop.f32.mrf.mxu0
  %v1345 = vadd.f32 %v1104, %v1344
  %v1346 = vpop.f32.mrf.mxu0
  %1347 = vmatprep.mubr.f32.mxu0 0.0
  %1348 = vmatmul.mubr.f32.gmra.mxu0 %v1210
  %v1349 = vpop.f32.mrf.mxu0
  %v1350 = vadd.f32 %v1109, %v1349
  %v1351 = vpop.f32.mrf.mxu0
  %1352 = vmatprep.mubr.f32.mxu0 0.0
  %1353 = vmatmul.mubr.f32.gmra.mxu0 %v1213
  %v1354 = vpop.f32.mrf.mxu0
  %v1355 = vadd.f32 %v1114, %v1354
  %v1356 = vpop.f32.mrf.mxu0
  %1357 = vmatprep.mubr.f32.mxu0 0.0
  %1358 = vmatmul.mubr.f32.gmra.mxu0 %v1216
  %v1359 = vpop.f32.mrf.mxu0
  %v1360 = vadd.f32 %v1119, %v1359
  %v1361 = vpop.f32.mrf.mxu0
  %1362 = vmatprep.mubr.f32.mxu0 0.0
  %1363 = vmatmul.mubr.f32.gmra.mxu0 %v1219
  %v1364 = vpop.f32.mrf.mxu0
  %v1365 = vadd.f32 %v1124, %v1364
  %v1366 = vpop.f32.mrf.mxu0
  %1367 = vmatprep.mubr.f32.mxu0 0.0
  %1368 = vmatmul.mubr.f32.gmra.mxu0 %v1222
  %v1369 = vpop.f32.mrf.mxu0
  %v1370 = vadd.f32 %v1129, %v1369
  %v1371 = vpop.f32.mrf.mxu0
  %1372 = vmatprep.mubr.f32.mxu0 0.0
  %1373 = vmatmul.mubr.f32.gmra.mxu0 %v1225
  %v1374 = vpop.f32.mrf.mxu0
  %v1375 = vadd.f32 %v1134, %v1374
  %v1376 = vpop.f32.mrf.mxu0
  %1377 = vmatprep.mubr.f32.mxu0 0.0
  %1378 = vmatmul.mubr.f32.gmra.mxu0 %v1228
  %v1379 = vpop.f32.mrf.mxu0
  %v1380 = vadd.f32 %v1139, %v1379
  %v1381 = vpop.f32.mrf.mxu0
  %1382 = vmatprep.mubr.f32.mxu0 0.0
  %1383 = vmatmul.mubr.f32.gmra.mxu0 %v1231
  %v1384 = vpop.f32.mrf.mxu0
  %v1385 = vadd.f32 %v1144, %v1384
  %v1386 = vpop.f32.mrf.mxu0
  %1387 = vmatprep.mubr.f32.mxu0 0.0
  %1388 = vmatmul.mubr.f32.gmra.mxu0 %v1234
  %v1389 = vpop.f32.mrf.mxu0
  %v1390 = vadd.f32 %v1149, %v1389
  %v1391 = vpop.f32.mrf.mxu0
  %1392 = vmatprep.mubr.f32.mxu0 0.0
  %1393 = vmatmul.mubr.f32.gmra.mxu0 %v1237
  %v1394 = vpop.f32.mrf.mxu0
  %v1395 = vadd.f32 %v1154, %v1394
  %v1396 = vpop.f32.mrf.mxu0
  %1397 = vmatprep.mubr.f32.mxu0 0.0
  %1398 = vmatmul.mubr.f32.gmra.mxu0 %v1240
  %v1399 = vpop.f32.mrf.mxu0
  %v1400 = vadd.f32 %v1159, %v1399
  %v1401 = vpop.f32.mrf.mxu0
  %1402 = vmatprep.mubr.f32.mxu0 0.0
  %1403 = vmatmul.mubr.f32.gmra.mxu0 %v1243
  %v1404 = vpop.f32.mrf.mxu0
  %v1405 = vadd.f32 %v1164, %v1404
  %v1406 = vpop.f32.mrf.mxu0
  %1407 = vmatprep.mubr.f32.mxu0 0.0
  %1408 = vmatmul.mubr.f32.gmra.mxu0 %v1246
  %v1409 = vpop.f32.mrf.mxu0
  %v1410 = vadd.f32 %v1169, %v1409
  %v1411 = vpop.f32.mrf.mxu0
  %1412 = vmatprep.mubr.f32.mxu0 0.0
  %1413 = vmatmul.mubr.f32.gmra.mxu0 %v1249
  %v1414 = vpop.f32.mrf.mxu0
  %v1415 = vadd.f32 %v1174, %v1414
  %v1416 = vpop.f32.mrf.mxu0
  %1417 = vmatprep.mubr.f32.mxu0 0.0
  %1418 = vmatmul.mubr.f32.gmra.mxu0 %v1252
  %v1419 = vpop.f32.mrf.mxu0
  %v1420 = vadd.f32 %v1179, %v1419
  %v1421 = vpop.f32.mrf.mxu0
  %1422 = vmatprep.mubr.f32.mxu0 0.0
  %1423 = vmatmul.mubr.f32.gmra.mxu0 %v1255
  %v1424 = vpop.f32.mrf.mxu0
  %v1425 = vadd.f32 %v1184, %v1424
  %v1426 = vpop.f32.mrf.mxu0
  %1427 = vmatprep.mubr.f32.mxu0 0.0
  %1428 = vmatmul.mubr.f32.gmra.mxu0 %v1258
  %v1429 = vpop.f32.mrf.mxu0
  %v1430 = vadd.f32 %v1189, %v1429
  %v1431 = vpop.f32.mrf.mxu0
  %1432 = vmatprep.mubr.f32.mxu0 0.0
  %1433 = vmatmul.mubr.f32.gmra.mxu0 %v1261
  %v1434 = vpop.f32.mrf.mxu0
  %v1435 = vadd.f32 %v1194, %v1434
  %v1436 = vpop.f32.mrf.mxu0
  %1437 = vdwg.mxu0
  %v1438 = vld [vmem:[%s11] sm:$0xff]
  %v1439 = vld [vmem:[%s11 + $0x8] sm:$0xff]
  %1440 = vmatprep.subr.mxu0 0.0
  %1441 = vmatpush1.msra.mxu0 0.0
  %1442 = vmatprep.subr.mxu0 0.0
  %1443 = vmatpush1.msra.mxu0 0.0
  %1444 = vmatprep.subr.mxu0 0.0
  %1445 = vmatpush1.msra.mxu0 0.0
  %1446 = vmatprep.subr.mxu0 0.0
  %1447 = vmatpush1.msra.mxu0 0.0
  %1448 = vmatprep.subr.mxu0 0.0
  %1449 = vmatpush1.msra.mxu0 0.0
  %1450 = vmatprep.subr.mxu0 0.0
  %1451 = vmatpush1.msra.mxu0 0.0
  %1452 = vmatprep.subr.mxu0 0.0
  %1453 = vmatpush1.msra.mxu0 0.0
  %1454 = vmatprep.subr.mxu0 0.0
  %1455 = vmatpush1.msra.mxu0 0.0
  %1456 = vmatprep.subr.mxu0 0.0
  %1457 = vmatpush1.msra.mxu0 0.0
  %1458 = vmatprep.subr.mxu0 0.0
  %1459 = vmatpush1.msra.mxu0 0.0
  %1460 = vmatprep.subr.mxu0 0.0
  %1461 = vmatpush1.msra.mxu0 0.0
  %1462 = vmatprep.subr.mxu0 0.0
  %1463 = vmatpush1.msra.mxu0 0.0
  %1464 = vmatprep.subr.mxu0 0.0
  %1465 = vmatpush1.msra.mxu0 0.0
  %1466 = vmatprep.subr.mxu0 0.0
  %1467 = vmatpush1.msra.mxu0 0.0
  %1468 = vmatprep.subr.mxu0 0.0
  %1469 = vmatpush1.msra.mxu0 %v1439
  %1470 = vmatprep.subr.mxu0 0.0
  %1471 = vmatpush1.msra.mxu0 %v1438
  %1472 = vmatprep.subr.mxu0 0.0
  %1473 = vmatpush2.msra.mxu0 0.0
  %1474 = vmatprep.subr.mxu0 0.0
  %1475 = vmatpush2.msra.mxu0 0.0
  %1476 = vmatprep.subr.mxu0 0.0
  %1477 = vmatpush2.msra.mxu0 0.0
  %1478 = vmatprep.subr.mxu0 0.0
  %1479 = vmatpush2.msra.mxu0 0.0
  %1480 = vmatprep.subr.mxu0 0.0
  %1481 = vmatpush2.msra.mxu0 0.0
  %1482 = vmatprep.subr.mxu0 0.0
  %1483 = vmatpush2.msra.mxu0 0.0
  %1484 = vmatprep.subr.mxu0 0.0
  %1485 = vmatpush2.msra.mxu0 0.0
  %1486 = vmatprep.subr.mxu0 0.0
  %1487 = vmatpush2.msra.mxu0 0.0
  %1488 = vmatprep.subr.mxu0 0.0
  %1489 = vmatpush2.msra.mxu0 0.0
  %1490 = vmatprep.subr.mxu0 0.0
  %1491 = vmatpush2.msra.mxu0 0.0
  %1492 = vmatprep.subr.mxu0 0.0
  %1493 = vmatpush2.msra.mxu0 0.0
  %1494 = vmatprep.subr.mxu0 0.0
  %1495 = vmatpush2.msra.mxu0 0.0
  %1496 = vmatprep.subr.mxu0 0.0
  %1497 = vmatpush2.msra.mxu0 0.0
  %1498 = vmatprep.subr.mxu0 0.0
  %1499 = vmatpush2.msra.mxu0 0.0
  %1500 = vmatprep.subr.mxu0 0.0
  %1501 = vmatpush2.msra.mxu0 0.0
  %1502 = vmatprep.subr.mxu0 0.0
  %1503 = vmatpush2.msra.mxu0 0.0
  %1504 = vmatprep.mubr.f32.mxu0 0.0
  %1505 = vmatmul.mubr.f32.gmra.mxu0 %v689
  %v1506 = vpop.f32.mrf.mxu0
  %v1507 = vadd.f32 0.0, %v1506
  %v1508 = vpop.f32.mrf.mxu0
  %1509 = vmatprep.mubr.f32.mxu0 0.0
  %1510 = vmatmul.mubr.f32.gmra.mxu0 %v692
  %v1511 = vpop.f32.mrf.mxu0
  %v1512 = vadd.f32 0.0, %v1511
  %v1513 = vpop.f32.mrf.mxu0
  %1514 = vmatprep.mubr.f32.mxu0 0.0
  %1515 = vmatmul.mubr.f32.gmra.mxu0 %v695
  %v1516 = vpop.f32.mrf.mxu0
  %v1517 = vadd.f32 0.0, %v1516
  %v1518 = vpop.f32.mrf.mxu0
  %1519 = vmatprep.mubr.f32.mxu0 0.0
  %1520 = vmatmul.mubr.f32.gmra.mxu0 %v698
  %v1521 = vpop.f32.mrf.mxu0
  %v1522 = vadd.f32 0.0, %v1521
  %v1523 = vpop.f32.mrf.mxu0
  %1524 = vmatprep.mubr.f32.mxu0 0.0
  %1525 = vmatmul.mubr.f32.gmra.mxu0 %v701
  %v1526 = vpop.f32.mrf.mxu0
  %v1527 = vadd.f32 0.0, %v1526
  %v1528 = vpop.f32.mrf.mxu0
  %1529 = vmatprep.mubr.f32.mxu0 0.0
  %1530 = vmatmul.mubr.f32.gmra.mxu0 %v704
  %v1531 = vpop.f32.mrf.mxu0
  %v1532 = vadd.f32 0.0, %v1531
  %v1533 = vpop.f32.mrf.mxu0
  %1534 = vmatprep.mubr.f32.mxu0 0.0
  %1535 = vmatmul.mubr.f32.gmra.mxu0 %v707
  %v1536 = vpop.f32.mrf.mxu0
  %v1537 = vadd.f32 0.0, %v1536
  %v1538 = vpop.f32.mrf.mxu0
  %1539 = vdwg.mxu0
  %v1540 = vld [vmem:[%s15] sm:$0xff]
  %v1541 = vld [vmem:[%s15 + $0x8] sm:$0xff]
  %v1542 = vld [vmem:[%s15 + $0x10] sm:$0xff]
  %v1543 = vld [vmem:[%s15 + $0x18] sm:$0xff]
  %v1544 = vld [vmem:[%s15 + $0x20] sm:$0xff]
  %v1545 = vld [vmem:[%s15 + $0x28] sm:$0xff]
  %v1546 = vld [vmem:[%s15 + $0x30] sm:$0xff]
  %v1547 = vld [vmem:[%s15 + $0x38] sm:$0xff]
  %v1548 = vld [vmem:[%s15 + $0x40] sm:$0xff]
  %v1549 = vld [vmem:[%s15 + $0x48] sm:$0xff]
  %v1550 = vld [vmem:[%s15 + $0x50] sm:$0xff]
  %v1551 = vld [vmem:[%s15 + $0x58] sm:$0xff]
  %v1552 = vld [vmem:[%s15 + $0x60] sm:$0xff]
  %v1553 = vld [vmem:[%s15 + $0x68] sm:$0xff]
  %v1554 = vld [vmem:[%s15 + $0x70] sm:$0xff]
  %v1555 = vld [vmem:[%s15 + $0x78] sm:$0xff]
  %v1556 = vld [vmem:[%s15 + $0x80] sm:$0xff]
  %v1557 = vld [vmem:[%s15 + $0x88] sm:$0xff]
  %v1558 = vld [vmem:[%s15 + $0x90] sm:$0xff]
  %v1559 = vld [vmem:[%s15 + $0x98] sm:$0xff]
  %v1560 = vld [vmem:[%s15 + $0xa0] sm:$0xff]
  %v1561 = vld [vmem:[%s15 + $0xa8] sm:$0xff]
  %v1563 = vsel %vm955, %v1540, 0
  %v1566 = vsel %vm955, %v1541, 0
  %v1569 = vsel %vm955, %v1542, 0
  %v1572 = vsel %vm955, %v1543, 0
  %v1575 = vsel %vm955, %v1544, 0
  %v1578 = vsel %vm955, %v1545, 0
  %v1581 = vsel %vm955, %v1546, 0
  %v1584 = vsel %vm955, %v1547, 0
  %v1587 = vsel %vm955, %v1548, 0
  %v1590 = vsel %vm955, %v1549, 0
  %v1593 = vsel %vm955, %v1550, 0
  %v1596 = vsel %vm955, %v1551, 0
  %v1599 = vsel %vm955, %v1552, 0
  %v1602 = vsel %vm955, %v1553, 0
  %v1605 = vsel %vm955, %v1554, 0
  %v1608 = vsel %vm955, %v1555, 0
  %v1611 = vsel %vm955, %v1556, 0
  %v1614 = vsel %vm955, %v1557, 0
  %v1617 = vsel %vm955, %v1558, 0
  %v1620 = vsel %vm955, %v1559, 0
  %v1623 = vsel %vm955, %v1560, 0
  %v1626 = vsel %vm955, %v1561, 0
  %1628 = vmatprep.subr.mxu0 0.0
  %1629 = vmatpush1.msra.mxu0 0.0
  %1630 = vmatprep.subr.mxu0 0.0
  %1631 = vmatpush1.msra.mxu0 0.0
  %1632 = vmatprep.subr.mxu0 0.0
  %1633 = vmatpush1.msra.mxu0 0.0
  %1634 = vmatprep.subr.mxu0 0.0
  %1635 = vmatpush1.msra.mxu0 0.0
  %1636 = vmatprep.subr.mxu0 0.0
  %1637 = vmatpush1.msra.mxu0 0.0
  %1638 = vmatprep.subr.mxu0 0.0
  %1639 = vmatpush1.msra.mxu0 0.0
  %1640 = vmatprep.subr.mxu0 0.0
  %1641 = vmatpush1.msra.mxu0 0.0
  %1642 = vmatprep.subr.mxu0 0.0
  %1643 = vmatpush1.msra.mxu0 0.0
  %1644 = vmatprep.subr.mxu0 0.0
  %1645 = vmatpush1.msra.mxu0 0.0
  %1646 = vmatprep.subr.mxu0 0.0
  %1647 = vmatpush1.msra.mxu0 %v1537
  %1648 = vmatprep.subr.mxu0 0.0
  %1649 = vmatpush1.msra.mxu0 %v1532
  %1650 = vmatprep.subr.mxu0 0.0
  %1651 = vmatpush1.msra.mxu0 %v1527
  %1652 = vmatprep.subr.mxu0 0.0
  %1653 = vmatpush1.msra.mxu0 %v1522
  %1654 = vmatprep.subr.mxu0 0.0
  %1655 = vmatpush1.msra.mxu0 %v1517
  %1656 = vmatprep.subr.mxu0 0.0
  %1657 = vmatpush1.msra.mxu0 %v1512
  %1658 = vmatprep.subr.mxu0 0.0
  %1659 = vmatpush1.msra.mxu0 %v1507
  %1660 = vmatprep.subr.mxu0 0.0
  %1661 = vmatpush2.msra.mxu0 0.0
  %1662 = vmatprep.subr.mxu0 0.0
  %1663 = vmatpush2.msra.mxu0 0.0
  %1664 = vmatprep.subr.mxu0 0.0
  %1665 = vmatpush2.msra.mxu0 0.0
  %1666 = vmatprep.subr.mxu0 0.0
  %1667 = vmatpush2.msra.mxu0 0.0
  %1668 = vmatprep.subr.mxu0 0.0
  %1669 = vmatpush2.msra.mxu0 0.0
  %1670 = vmatprep.subr.mxu0 0.0
  %1671 = vmatpush2.msra.mxu0 0.0
  %1672 = vmatprep.subr.mxu0 0.0
  %1673 = vmatpush2.msra.mxu0 0.0
  %1674 = vmatprep.subr.mxu0 0.0
  %1675 = vmatpush2.msra.mxu0 0.0
  %1676 = vmatprep.subr.mxu0 0.0
  %1677 = vmatpush2.msra.mxu0 0.0
  %1678 = vmatprep.subr.mxu0 0.0
  %1679 = vmatpush2.msra.mxu0 0.0
  %1680 = vmatprep.subr.mxu0 0.0
  %1681 = vmatpush2.msra.mxu0 0.0
  %1682 = vmatprep.subr.mxu0 0.0
  %1683 = vmatpush2.msra.mxu0 0.0
  %1684 = vmatprep.subr.mxu0 0.0
  %1685 = vmatpush2.msra.mxu0 0.0
  %1686 = vmatprep.subr.mxu0 0.0
  %1687 = vmatpush2.msra.mxu0 0.0
  %1688 = vmatprep.subr.mxu0 0.0
  %1689 = vmatpush2.msra.mxu0 0.0
  %1690 = vmatprep.subr.mxu0 0.0
  %1691 = vmatpush2.msra.mxu0 0.0
  %1692 = vmatprep.mubr.f32.mxu0 0.0
  %1693 = vmatmul.mubr.f32.gmra.mxu0 %v1563
  %v1694 = vpop.f32.mrf.mxu0
  %v1695 = vadd.f32 0.0, %v1694
  %v1696 = vpop.f32.mrf.mxu0
  %1697 = vmatprep.mubr.f32.mxu0 0.0
  %1698 = vmatmul.mubr.f32.gmra.mxu0 %v1566
  %v1699 = vpop.f32.mrf.mxu0
  %v1700 = vadd.f32 0.0, %v1699
  %v1701 = vpop.f32.mrf.mxu0
  %1702 = vmatprep.mubr.f32.mxu0 0.0
  %1703 = vmatmul.mubr.f32.gmra.mxu0 %v1569
  %v1704 = vpop.f32.mrf.mxu0
  %v1705 = vadd.f32 0.0, %v1704
  %v1706 = vpop.f32.mrf.mxu0
  %1707 = vmatprep.mubr.f32.mxu0 0.0
  %1708 = vmatmul.mubr.f32.gmra.mxu0 %v1572
  %v1709 = vpop.f32.mrf.mxu0
  %v1710 = vadd.f32 0.0, %v1709
  %v1711 = vpop.f32.mrf.mxu0
  %1712 = vmatprep.mubr.f32.mxu0 0.0
  %1713 = vmatmul.mubr.f32.gmra.mxu0 %v1575
  %v1714 = vpop.f32.mrf.mxu0
  %v1715 = vadd.f32 0.0, %v1714
  %v1716 = vpop.f32.mrf.mxu0
  %1717 = vmatprep.mubr.f32.mxu0 0.0
  %1718 = vmatmul.mubr.f32.gmra.mxu0 %v1578
  %v1719 = vpop.f32.mrf.mxu0
  %v1720 = vadd.f32 0.0, %v1719
  %v1721 = vpop.f32.mrf.mxu0
  %1722 = vmatprep.mubr.f32.mxu0 0.0
  %1723 = vmatmul.mubr.f32.gmra.mxu0 %v1581
  %v1724 = vpop.f32.mrf.mxu0
  %v1725 = vadd.f32 0.0, %v1724
  %v1726 = vpop.f32.mrf.mxu0
  %1727 = vmatprep.mubr.f32.mxu0 0.0
  %1728 = vmatmul.mubr.f32.gmra.mxu0 %v1584
  %v1729 = vpop.f32.mrf.mxu0
  %v1730 = vadd.f32 0.0, %v1729
  %v1731 = vpop.f32.mrf.mxu0
  %1732 = vmatprep.mubr.f32.mxu0 0.0
  %1733 = vmatmul.mubr.f32.gmra.mxu0 %v1587
  %v1734 = vpop.f32.mrf.mxu0
  %v1735 = vadd.f32 0.0, %v1734
  %v1736 = vpop.f32.mrf.mxu0
  %1737 = vmatprep.mubr.f32.mxu0 0.0
  %1738 = vmatmul.mubr.f32.gmra.mxu0 %v1590
  %v1739 = vpop.f32.mrf.mxu0
  %v1740 = vadd.f32 0.0, %v1739
  %v1741 = vpop.f32.mrf.mxu0
  %1742 = vmatprep.mubr.f32.mxu0 0.0
  %1743 = vmatmul.mubr.f32.gmra.mxu0 %v1593
  %v1744 = vpop.f32.mrf.mxu0
  %v1745 = vadd.f32 0.0, %v1744
  %v1746 = vpop.f32.mrf.mxu0
  %1747 = vmatprep.mubr.f32.mxu0 0.0
  %1748 = vmatmul.mubr.f32.gmra.mxu0 %v1596
  %v1749 = vpop.f32.mrf.mxu0
  %v1750 = vadd.f32 0.0, %v1749
  %v1751 = vpop.f32.mrf.mxu0
  %1752 = vmatprep.mubr.f32.mxu0 0.0
  %1753 = vmatmul.mubr.f32.gmra.mxu0 %v1599
  %v1754 = vpop.f32.mrf.mxu0
  %v1755 = vadd.f32 0.0, %v1754
  %v1756 = vpop.f32.mrf.mxu0
  %1757 = vmatprep.mubr.f32.mxu0 0.0
  %1758 = vmatmul.mubr.f32.gmra.mxu0 %v1602
  %v1759 = vpop.f32.mrf.mxu0
  %v1760 = vadd.f32 0.0, %v1759
  %v1761 = vpop.f32.mrf.mxu0
  %1762 = vmatprep.mubr.f32.mxu0 0.0
  %1763 = vmatmul.mubr.f32.gmra.mxu0 %v1605
  %v1764 = vpop.f32.mrf.mxu0
  %v1765 = vadd.f32 0.0, %v1764
  %v1766 = vpop.f32.mrf.mxu0
  %1767 = vmatprep.mubr.f32.mxu0 0.0
  %1768 = vmatmul.mubr.f32.gmra.mxu0 %v1608
  %v1769 = vpop.f32.mrf.mxu0
  %v1770 = vadd.f32 0.0, %v1769
  %v1771 = vpop.f32.mrf.mxu0
  %1772 = vmatprep.mubr.f32.mxu0 0.0
  %1773 = vmatmul.mubr.f32.gmra.mxu0 %v1611
  %v1774 = vpop.f32.mrf.mxu0
  %v1775 = vadd.f32 0.0, %v1774
  %v1776 = vpop.f32.mrf.mxu0
  %1777 = vmatprep.mubr.f32.mxu0 0.0
  %1778 = vmatmul.mubr.f32.gmra.mxu0 %v1614
  %v1779 = vpop.f32.mrf.mxu0
  %v1780 = vadd.f32 0.0, %v1779
  %v1781 = vpop.f32.mrf.mxu0
  %1782 = vmatprep.mubr.f32.mxu0 0.0
  %1783 = vmatmul.mubr.f32.gmra.mxu0 %v1617
  %v1784 = vpop.f32.mrf.mxu0
  %v1785 = vadd.f32 0.0, %v1784
  %v1786 = vpop.f32.mrf.mxu0
  %1787 = vmatprep.mubr.f32.mxu0 0.0
  %1788 = vmatmul.mubr.f32.gmra.mxu0 %v1620
  %v1789 = vpop.f32.mrf.mxu0
  %v1790 = vadd.f32 0.0, %v1789
  %v1791 = vpop.f32.mrf.mxu0
  %1792 = vmatprep.mubr.f32.mxu0 0.0
  %1793 = vmatmul.mubr.f32.gmra.mxu0 %v1623
  %v1794 = vpop.f32.mrf.mxu0
  %v1795 = vadd.f32 0.0, %v1794
  %v1796 = vpop.f32.mrf.mxu0
  %1797 = vmatprep.mubr.f32.mxu0 0.0
  %1798 = vmatmul.mubr.f32.gmra.mxu0 %v1626
  %v1799 = vpop.f32.mrf.mxu0
  %v1800 = vadd.f32 0.0, %v1799
  %v1801 = vpop.f32.mrf.mxu0
  %1802 = vdwg.mxu0
  %v1803 = vadd.f32 %v1330, %v1695
  %v1804 = vadd.f32 %v1335, %v1700
  %v1805 = vadd.f32 %v1340, %v1705
  %v1806 = vadd.f32 %v1345, %v1710
  %v1807 = vadd.f32 %v1350, %v1715
  %v1808 = vadd.f32 %v1355, %v1720
  %v1809 = vadd.f32 %v1360, %v1725
  %v1810 = vadd.f32 %v1365, %v1730
  %v1811 = vadd.f32 %v1370, %v1735
  %v1812 = vadd.f32 %v1375, %v1740
  %v1813 = vadd.f32 %v1380, %v1745
  %v1814 = vadd.f32 %v1385, %v1750
  %v1815 = vadd.f32 %v1390, %v1755
  %v1816 = vadd.f32 %v1395, %v1760
  %v1817 = vadd.f32 %v1400, %v1765
  %v1818 = vadd.f32 %v1405, %v1770
  %v1819 = vadd.f32 %v1410, %v1775
  %v1820 = vadd.f32 %v1415, %v1780
  %v1821 = vadd.f32 %v1420, %v1785
  %v1822 = vadd.f32 %v1425, %v1790
  %v1823 = vadd.f32 %v1430, %v1795
  %v1824 = vadd.f32 %v1435, %v1800
  %v1825 = vld [vmem:[%s12] sm:$0xff]
  %v1826 = vld [vmem:[%s12 + $0x8] sm:$0xff]
  %1827 = vmatprep.subr.mxu0 0.0
  %1828 = vmatpush1.msra.mxu0 0.0
  %1829 = vmatprep.subr.mxu0 0.0
  %1830 = vmatpush1.msra.mxu0 0.0
  %1831 = vmatprep.subr.mxu0 0.0
  %1832 = vmatpush1.msra.mxu0 0.0
  %1833 = vmatprep.subr.mxu0 0.0
  %1834 = vmatpush1.msra.mxu0 0.0
  %1835 = vmatprep.subr.mxu0 0.0
  %1836 = vmatpush1.msra.mxu0 0.0
  %1837 = vmatprep.subr.mxu0 0.0
  %1838 = vmatpush1.msra.mxu0 0.0
  %1839 = vmatprep.subr.mxu0 0.0
  %1840 = vmatpush1.msra.mxu0 0.0
  %1841 = vmatprep.subr.mxu0 0.0
  %1842 = vmatpush1.msra.mxu0 0.0
  %1843 = vmatprep.subr.mxu0 0.0
  %1844 = vmatpush1.msra.mxu0 0.0
  %1845 = vmatprep.subr.mxu0 0.0
  %1846 = vmatpush1.msra.mxu0 0.0
  %1847 = vmatprep.subr.mxu0 0.0
  %1848 = vmatpush1.msra.mxu0 0.0
  %1849 = vmatprep.subr.mxu0 0.0
  %1850 = vmatpush1.msra.mxu0 0.0
  %1851 = vmatprep.subr.mxu0 0.0
  %1852 = vmatpush1.msra.mxu0 0.0
  %1853 = vmatprep.subr.mxu0 0.0
  %1854 = vmatpush1.msra.mxu0 0.0
  %1855 = vmatprep.subr.mxu0 0.0
  %1856 = vmatpush1.msra.mxu0 %v1826
  %1857 = vmatprep.subr.mxu0 0.0
  %1858 = vmatpush1.msra.mxu0 %v1825
  %1859 = vmatprep.subr.mxu0 0.0
  %1860 = vmatpush2.msra.mxu0 0.0
  %1861 = vmatprep.subr.mxu0 0.0
  %1862 = vmatpush2.msra.mxu0 0.0
  %1863 = vmatprep.subr.mxu0 0.0
  %1864 = vmatpush2.msra.mxu0 0.0
  %1865 = vmatprep.subr.mxu0 0.0
  %1866 = vmatpush2.msra.mxu0 0.0
  %1867 = vmatprep.subr.mxu0 0.0
  %1868 = vmatpush2.msra.mxu0 0.0
  %1869 = vmatprep.subr.mxu0 0.0
  %1870 = vmatpush2.msra.mxu0 0.0
  %1871 = vmatprep.subr.mxu0 0.0
  %1872 = vmatpush2.msra.mxu0 0.0
  %1873 = vmatprep.subr.mxu0 0.0
  %1874 = vmatpush2.msra.mxu0 0.0
  %1875 = vmatprep.subr.mxu0 0.0
  %1876 = vmatpush2.msra.mxu0 0.0
  %1877 = vmatprep.subr.mxu0 0.0
  %1878 = vmatpush2.msra.mxu0 0.0
  %1879 = vmatprep.subr.mxu0 0.0
  %1880 = vmatpush2.msra.mxu0 0.0
  %1881 = vmatprep.subr.mxu0 0.0
  %1882 = vmatpush2.msra.mxu0 0.0
  %1883 = vmatprep.subr.mxu0 0.0
  %1884 = vmatpush2.msra.mxu0 0.0
  %1885 = vmatprep.subr.mxu0 0.0
  %1886 = vmatpush2.msra.mxu0 0.0
  %1887 = vmatprep.subr.mxu0 0.0
  %1888 = vmatpush2.msra.mxu0 0.0
  %1889 = vmatprep.subr.mxu0 0.0
  %1890 = vmatpush2.msra.mxu0 0.0
  %1891 = vmatprep.mubr.f32.mxu0 0.0
  %1892 = vmatmul.mubr.f32.gmra.mxu0 %v689
  %v1893 = vpop.f32.mrf.mxu0
  %v1894 = vadd.f32 0.0, %v1893
  %v1895 = vpop.f32.mrf.mxu0
  %1896 = vmatprep.mubr.f32.mxu0 0.0
  %1897 = vmatmul.mubr.f32.gmra.mxu0 %v692
  %v1898 = vpop.f32.mrf.mxu0
  %v1899 = vadd.f32 0.0, %v1898
  %v1900 = vpop.f32.mrf.mxu0
  %1901 = vmatprep.mubr.f32.mxu0 0.0
  %1902 = vmatmul.mubr.f32.gmra.mxu0 %v695
  %v1903 = vpop.f32.mrf.mxu0
  %v1904 = vadd.f32 0.0, %v1903
  %v1905 = vpop.f32.mrf.mxu0
  %1906 = vmatprep.mubr.f32.mxu0 0.0
  %1907 = vmatmul.mubr.f32.gmra.mxu0 %v698
  %v1908 = vpop.f32.mrf.mxu0
  %v1909 = vadd.f32 0.0, %v1908
  %v1910 = vpop.f32.mrf.mxu0
  %1911 = vmatprep.mubr.f32.mxu0 0.0
  %1912 = vmatmul.mubr.f32.gmra.mxu0 %v701
  %v1913 = vpop.f32.mrf.mxu0
  %v1914 = vadd.f32 0.0, %v1913
  %v1915 = vpop.f32.mrf.mxu0
  %1916 = vmatprep.mubr.f32.mxu0 0.0
  %1917 = vmatmul.mubr.f32.gmra.mxu0 %v704
  %v1918 = vpop.f32.mrf.mxu0
  %v1919 = vadd.f32 0.0, %v1918
  %v1920 = vpop.f32.mrf.mxu0
  %1921 = vmatprep.mubr.f32.mxu0 0.0
  %1922 = vmatmul.mubr.f32.gmra.mxu0 %v707
  %v1923 = vpop.f32.mrf.mxu0
  %v1924 = vadd.f32 0.0, %v1923
  %v1925 = vpop.f32.mrf.mxu0
  %1926 = vdwg.mxu0
  %v1927 = vld [vmem:[%s16] sm:$0xff]
  %v1928 = vld [vmem:[%s16 + $0x8] sm:$0xff]
  %v1929 = vld [vmem:[%s16 + $0x10] sm:$0xff]
  %v1930 = vld [vmem:[%s16 + $0x18] sm:$0xff]
  %v1931 = vld [vmem:[%s16 + $0x20] sm:$0xff]
  %v1932 = vld [vmem:[%s16 + $0x28] sm:$0xff]
  %v1933 = vld [vmem:[%s16 + $0x30] sm:$0xff]
  %v1934 = vld [vmem:[%s16 + $0x38] sm:$0xff]
  %v1935 = vld [vmem:[%s16 + $0x40] sm:$0xff]
  %v1936 = vld [vmem:[%s16 + $0x48] sm:$0xff]
  %v1937 = vld [vmem:[%s16 + $0x50] sm:$0xff]
  %v1938 = vld [vmem:[%s16 + $0x58] sm:$0xff]
  %v1939 = vld [vmem:[%s16 + $0x60] sm:$0xff]
  %v1940 = vld [vmem:[%s16 + $0x68] sm:$0xff]
  %v1941 = vld [vmem:[%s16 + $0x70] sm:$0xff]
  %v1942 = vld [vmem:[%s16 + $0x78] sm:$0xff]
  %v1943 = vld [vmem:[%s16 + $0x80] sm:$0xff]
  %v1944 = vld [vmem:[%s16 + $0x88] sm:$0xff]
  %v1945 = vld [vmem:[%s16 + $0x90] sm:$0xff]
  %v1946 = vld [vmem:[%s16 + $0x98] sm:$0xff]
  %v1947 = vld [vmem:[%s16 + $0xa0] sm:$0xff]
  %v1948 = vld [vmem:[%s16 + $0xa8] sm:$0xff]
  %v1950 = vsel %vm955, %v1927, 0
  %v1953 = vsel %vm955, %v1928, 0
  %v1956 = vsel %vm955, %v1929, 0
  %v1959 = vsel %vm955, %v1930, 0
  %v1962 = vsel %vm955, %v1931, 0
  %v1965 = vsel %vm955, %v1932, 0
  %v1968 = vsel %vm955, %v1933, 0
  %v1971 = vsel %vm955, %v1934, 0
  %v1974 = vsel %vm955, %v1935, 0
  %v1977 = vsel %vm955, %v1936, 0
  %v1980 = vsel %vm955, %v1937, 0
  %v1983 = vsel %vm955, %v1938, 0
  %v1986 = vsel %vm955, %v1939, 0
  %v1989 = vsel %vm955, %v1940, 0
  %v1992 = vsel %vm955, %v1941, 0
  %v1995 = vsel %vm955, %v1942, 0
  %v1998 = vsel %vm955, %v1943, 0
  %v2001 = vsel %vm955, %v1944, 0
  %v2004 = vsel %vm955, %v1945, 0
  %v2007 = vsel %vm955, %v1946, 0
  %v2010 = vsel %vm955, %v1947, 0
  %v2013 = vsel %vm955, %v1948, 0
  %2015 = vmatprep.subr.mxu0 0.0
  %2016 = vmatpush1.msra.mxu0 0.0
  %2017 = vmatprep.subr.mxu0 0.0
  %2018 = vmatpush1.msra.mxu0 0.0
  %2019 = vmatprep.subr.mxu0 0.0
  %2020 = vmatpush1.msra.mxu0 0.0
  %2021 = vmatprep.subr.mxu0 0.0
  %2022 = vmatpush1.msra.mxu0 0.0
  %2023 = vmatprep.subr.mxu0 0.0
  %2024 = vmatpush1.msra.mxu0 0.0
  %2025 = vmatprep.subr.mxu0 0.0
  %2026 = vmatpush1.msra.mxu0 0.0
  %2027 = vmatprep.subr.mxu0 0.0
  %2028 = vmatpush1.msra.mxu0 0.0
  %2029 = vmatprep.subr.mxu0 0.0
  %2030 = vmatpush1.msra.mxu0 0.0
  %2031 = vmatprep.subr.mxu0 0.0
  %2032 = vmatpush1.msra.mxu0 0.0
  %2033 = vmatprep.subr.mxu0 0.0
  %2034 = vmatpush1.msra.mxu0 %v1924
  %2035 = vmatprep.subr.mxu0 0.0
  %2036 = vmatpush1.msra.mxu0 %v1919
  %2037 = vmatprep.subr.mxu0 0.0
  %2038 = vmatpush1.msra.mxu0 %v1914
  %2039 = vmatprep.subr.mxu0 0.0
  %2040 = vmatpush1.msra.mxu0 %v1909
  %2041 = vmatprep.subr.mxu0 0.0
  %2042 = vmatpush1.msra.mxu0 %v1904
  %2043 = vmatprep.subr.mxu0 0.0
  %2044 = vmatpush1.msra.mxu0 %v1899
  %2045 = vmatprep.subr.mxu0 0.0
  %2046 = vmatpush1.msra.mxu0 %v1894
  %2047 = vmatprep.subr.mxu0 0.0
  %2048 = vmatpush2.msra.mxu0 0.0
  %2049 = vmatprep.subr.mxu0 0.0
  %2050 = vmatpush2.msra.mxu0 0.0
  %2051 = vmatprep.subr.mxu0 0.0
  %2052 = vmatpush2.msra.mxu0 0.0
  %2053 = vmatprep.subr.mxu0 0.0
  %2054 = vmatpush2.msra.mxu0 0.0
  %2055 = vmatprep.subr.mxu0 0.0
  %2056 = vmatpush2.msra.mxu0 0.0
  %2057 = vmatprep.subr.mxu0 0.0
  %2058 = vmatpush2.msra.mxu0 0.0
  %2059 = vmatprep.subr.mxu0 0.0
  %2060 = vmatpush2.msra.mxu0 0.0
  %2061 = vmatprep.subr.mxu0 0.0
  %2062 = vmatpush2.msra.mxu0 0.0
  %2063 = vmatprep.subr.mxu0 0.0
  %2064 = vmatpush2.msra.mxu0 0.0
  %2065 = vmatprep.subr.mxu0 0.0
  %2066 = vmatpush2.msra.mxu0 0.0
  %2067 = vmatprep.subr.mxu0 0.0
  %2068 = vmatpush2.msra.mxu0 0.0
  %2069 = vmatprep.subr.mxu0 0.0
  %2070 = vmatpush2.msra.mxu0 0.0
  %2071 = vmatprep.subr.mxu0 0.0
  %2072 = vmatpush2.msra.mxu0 0.0
  %2073 = vmatprep.subr.mxu0 0.0
  %2074 = vmatpush2.msra.mxu0 0.0
  %2075 = vmatprep.subr.mxu0 0.0
  %2076 = vmatpush2.msra.mxu0 0.0
  %2077 = vmatprep.subr.mxu0 0.0
  %2078 = vmatpush2.msra.mxu0 0.0
  %2079 = vmatprep.mubr.f32.mxu0 0.0
  %2080 = vmatmul.mubr.f32.gmra.mxu0 %v1950
  %v2081 = vpop.f32.mrf.mxu0
  %v2082 = vadd.f32 0.0, %v2081
  %v2083 = vpop.f32.mrf.mxu0
  %2084 = vmatprep.mubr.f32.mxu0 0.0
  %2085 = vmatmul.mubr.f32.gmra.mxu0 %v1953
  %v2086 = vpop.f32.mrf.mxu0
  %v2087 = vadd.f32 0.0, %v2086
  %v2088 = vpop.f32.mrf.mxu0
  %2089 = vmatprep.mubr.f32.mxu0 0.0
  %2090 = vmatmul.mubr.f32.gmra.mxu0 %v1956
  %v2091 = vpop.f32.mrf.mxu0
  %v2092 = vadd.f32 0.0, %v2091
  %v2093 = vpop.f32.mrf.mxu0
  %2094 = vmatprep.mubr.f32.mxu0 0.0
  %2095 = vmatmul.mubr.f32.gmra.mxu0 %v1959
  %v2096 = vpop.f32.mrf.mxu0
  %v2097 = vadd.f32 0.0, %v2096
  %v2098 = vpop.f32.mrf.mxu0
  %2099 = vmatprep.mubr.f32.mxu0 0.0
  %2100 = vmatmul.mubr.f32.gmra.mxu0 %v1962
  %v2101 = vpop.f32.mrf.mxu0
  %v2102 = vadd.f32 0.0, %v2101
  %v2103 = vpop.f32.mrf.mxu0
  %2104 = vmatprep.mubr.f32.mxu0 0.0
  %2105 = vmatmul.mubr.f32.gmra.mxu0 %v1965
  %v2106 = vpop.f32.mrf.mxu0
  %v2107 = vadd.f32 0.0, %v2106
  %v2108 = vpop.f32.mrf.mxu0
  %2109 = vmatprep.mubr.f32.mxu0 0.0
  %2110 = vmatmul.mubr.f32.gmra.mxu0 %v1968
  %v2111 = vpop.f32.mrf.mxu0
  %v2112 = vadd.f32 0.0, %v2111
  %v2113 = vpop.f32.mrf.mxu0
  %2114 = vmatprep.mubr.f32.mxu0 0.0
  %2115 = vmatmul.mubr.f32.gmra.mxu0 %v1971
  %v2116 = vpop.f32.mrf.mxu0
  %v2117 = vadd.f32 0.0, %v2116
  %v2118 = vpop.f32.mrf.mxu0
  %2119 = vmatprep.mubr.f32.mxu0 0.0
  %2120 = vmatmul.mubr.f32.gmra.mxu0 %v1974
  %v2121 = vpop.f32.mrf.mxu0
  %v2122 = vadd.f32 0.0, %v2121
  %v2123 = vpop.f32.mrf.mxu0
  %2124 = vmatprep.mubr.f32.mxu0 0.0
  %2125 = vmatmul.mubr.f32.gmra.mxu0 %v1977
  %v2126 = vpop.f32.mrf.mxu0
  %v2127 = vadd.f32 0.0, %v2126
  %v2128 = vpop.f32.mrf.mxu0
  %2129 = vmatprep.mubr.f32.mxu0 0.0
  %2130 = vmatmul.mubr.f32.gmra.mxu0 %v1980
  %v2131 = vpop.f32.mrf.mxu0
  %v2132 = vadd.f32 0.0, %v2131
  %v2133 = vpop.f32.mrf.mxu0
  %2134 = vmatprep.mubr.f32.mxu0 0.0
  %2135 = vmatmul.mubr.f32.gmra.mxu0 %v1983
  %v2136 = vpop.f32.mrf.mxu0
  %v2137 = vadd.f32 0.0, %v2136
  %v2138 = vpop.f32.mrf.mxu0
  %2139 = vmatprep.mubr.f32.mxu0 0.0
  %2140 = vmatmul.mubr.f32.gmra.mxu0 %v1986
  %v2141 = vpop.f32.mrf.mxu0
  %v2142 = vadd.f32 0.0, %v2141
  %v2143 = vpop.f32.mrf.mxu0
  %2144 = vmatprep.mubr.f32.mxu0 0.0
  %2145 = vmatmul.mubr.f32.gmra.mxu0 %v1989
  %v2146 = vpop.f32.mrf.mxu0
  %v2147 = vadd.f32 0.0, %v2146
  %v2148 = vpop.f32.mrf.mxu0
  %2149 = vmatprep.mubr.f32.mxu0 0.0
  %2150 = vmatmul.mubr.f32.gmra.mxu0 %v1992
  %v2151 = vpop.f32.mrf.mxu0
  %v2152 = vadd.f32 0.0, %v2151
  %v2153 = vpop.f32.mrf.mxu0
  %2154 = vmatprep.mubr.f32.mxu0 0.0
  %2155 = vmatmul.mubr.f32.gmra.mxu0 %v1995
  %v2156 = vpop.f32.mrf.mxu0
  %v2157 = vadd.f32 0.0, %v2156
  %v2158 = vpop.f32.mrf.mxu0
  %2159 = vmatprep.mubr.f32.mxu0 0.0
  %2160 = vmatmul.mubr.f32.gmra.mxu0 %v1998
  %v2161 = vpop.f32.mrf.mxu0
  %v2162 = vadd.f32 0.0, %v2161
  %v2163 = vpop.f32.mrf.mxu0
  %2164 = vmatprep.mubr.f32.mxu0 0.0
  %2165 = vmatmul.mubr.f32.gmra.mxu0 %v2001
  %v2166 = vpop.f32.mrf.mxu0
  %v2167 = vadd.f32 0.0, %v2166
  %v2168 = vpop.f32.mrf.mxu0
  %2169 = vmatprep.mubr.f32.mxu0 0.0
  %2170 = vmatmul.mubr.f32.gmra.mxu0 %v2004
  %v2171 = vpop.f32.mrf.mxu0
  %v2172 = vadd.f32 0.0, %v2171
  %v2173 = vpop.f32.mrf.mxu0
  %2174 = vmatprep.mubr.f32.mxu0 0.0
  %2175 = vmatmul.mubr.f32.gmra.mxu0 %v2007
  %v2176 = vpop.f32.mrf.mxu0
  %v2177 = vadd.f32 0.0, %v2176
  %v2178 = vpop.f32.mrf.mxu0
  %2179 = vmatprep.mubr.f32.mxu0 0.0
  %2180 = vmatmul.mubr.f32.gmra.mxu0 %v2010
  %v2181 = vpop.f32.mrf.mxu0
  %v2182 = vadd.f32 0.0, %v2181
  %v2183 = vpop.f32.mrf.mxu0
  %2184 = vmatprep.mubr.f32.mxu0 0.0
  %2185 = vmatmul.mubr.f32.gmra.mxu0 %v2013
  %v2186 = vpop.f32.mrf.mxu0
  %v2187 = vadd.f32 0.0, %v2186
  %v2188 = vpop.f32.mrf.mxu0
  %2189 = vdwg.mxu0
  %v2190 = vadd.f32 %v1803, %v2082
  %v2191 = vadd.f32 %v1804, %v2087
  %v2192 = vadd.f32 %v1805, %v2092
  %v2193 = vadd.f32 %v1806, %v2097
  %v2194 = vadd.f32 %v1807, %v2102
  %v2195 = vadd.f32 %v1808, %v2107
  %v2196 = vadd.f32 %v1809, %v2112
  %v2197 = vadd.f32 %v1810, %v2117
  %v2198 = vadd.f32 %v1811, %v2122
  %v2199 = vadd.f32 %v1812, %v2127
  %v2200 = vadd.f32 %v1813, %v2132
  %v2201 = vadd.f32 %v1814, %v2137
  %v2202 = vadd.f32 %v1815, %v2142
  %v2203 = vadd.f32 %v1816, %v2147
  %v2204 = vadd.f32 %v1817, %v2152
  %v2205 = vadd.f32 %v1818, %v2157
  %v2206 = vadd.f32 %v1819, %v2162
  %v2207 = vadd.f32 %v1820, %v2167
  %v2208 = vadd.f32 %v1821, %v2172
  %v2209 = vadd.f32 %v1822, %v2177
  %v2210 = vadd.f32 %v1823, %v2182
  %v2211 = vadd.f32 %v1824, %v2187
  %v2212 = vadd.f32 %v2190, %v2201
  %v2213 = vadd.f32 %v2191, %v2202
  %v2214 = vadd.f32 %v2192, %v2203
  %v2215 = vadd.f32 %v2193, %v2204
  %v2216 = vadd.f32 %v2194, %v2205
  %v2217 = vadd.f32 %v2195, %v2206
  %v2218 = vadd.f32 %v2196, %v2207
  %v2219 = vadd.f32 %v2197, %v2208
  %v2220 = vadd.f32 %v2198, %v2209
  %v2221 = vadd.f32 %v2199, %v2210
  %v2222 = vadd.f32 %v2200, %v2211
  %v2223 = vmul.f32 %v2212, 0.5
  %v2224 = vmul.f32 %v2213, 0.5
  %v2225 = vmul.f32 %v2214, 0.5
  %v2226 = vmul.f32 %v2215, 0.5
  %v2227 = vmul.f32 %v2216, 0.5
  %v2228 = vmul.f32 %v2217, 0.5
  %v2229 = vmul.f32 %v2218, 0.5
  %v2230 = vmul.f32 %v2219, 0.5
  %v2231 = vmul.f32 %v2220, 0.5
  %v2232 = vmul.f32 %v2221, 0.5
  %v2233 = vmul.f32 %v2222, 0.5
  %v2234 = vmax.f32 %v2223, 1e-08
  %v2235 = vmax.f32 %v2224, 1e-08
  %v2236 = vmax.f32 %v2225, 1e-08
  %v2237 = vmax.f32 %v2226, 1e-08
  %v2238 = vmax.f32 %v2227, 1e-08
  %v2239 = vmax.f32 %v2228, 1e-08
  %v2240 = vmax.f32 %v2229, 1e-08
  %v2241 = vmax.f32 %v2230, 1e-08
  %v2242 = vmax.f32 %v2231, 1e-08
  %v2243 = vmax.f32 %v2232, 1e-08
  %v2244 = vmax.f32 %v2233, 1e-08
  %v2245 = vlog2.pop %v2234
  %v2246 = vmul.f32 %v2245, 0.6931472
  %v2247 = vlog2.pop %v2235
  %v2248 = vmul.f32 %v2247, 0.6931472
  %v2249 = vlog2.pop %v2236
  %v2250 = vmul.f32 %v2249, 0.6931472
  %v2251 = vlog2.pop %v2237
  %v2252 = vmul.f32 %v2251, 0.6931472
  %v2253 = vlog2.pop %v2238
  %v2254 = vmul.f32 %v2253, 0.6931472
  %v2255 = vlog2.pop %v2239
  %v2256 = vmul.f32 %v2255, 0.6931472
  %v2257 = vlog2.pop %v2240
  %v2258 = vmul.f32 %v2257, 0.6931472
  %v2259 = vlog2.pop %v2241
  %v2260 = vmul.f32 %v2259, 0.6931472
  %v2261 = vlog2.pop %v2242
  %v2262 = vmul.f32 %v2261, 0.6931472
  %v2263 = vlog2.pop %v2243
  %v2264 = vmul.f32 %v2263, 0.6931472
  %v2265 = vlog2.pop %v2244
  %v2266 = vmul.f32 %v2265, 0.6931472
  %v2267 = vmul.f32 %v2223, %v2246
  %v2268 = vmul.f32 %v2224, %v2248
  %v2269 = vmul.f32 %v2225, %v2250
  %v2270 = vmul.f32 %v2226, %v2252
  %v2271 = vmul.f32 %v2227, %v2254
  %v2272 = vmul.f32 %v2228, %v2256
  %v2273 = vmul.f32 %v2229, %v2258
  %v2274 = vmul.f32 %v2230, %v2260
  %v2275 = vmul.f32 %v2231, %v2262
  %v2276 = vmul.f32 %v2232, %v2264
  %v2277 = vmul.f32 %v2233, %v2266
  %vm2278 = vcmask 64512
  %v2279 = vsel %vm2278, %v2267, 0.0
  %v2280 = vsel %vm2278, %v2268, 0.0
  %v2281 = vadd.f32 %v2279, %v2280
  %v2282 = vsel %vm2278, %v2269, 0.0
  %v2283 = vadd.f32 %v2281, %v2282
  %v2284 = vsel %vm2278, %v2270, 0.0
  %v2285 = vadd.f32 %v2283, %v2284
  %v2286 = vsel %vm2278, %v2271, 0.0
  %v2287 = vadd.f32 %v2285, %v2286
  %v2288 = vsel %vm2278, %v2272, 0.0
  %v2289 = vadd.f32 %v2287, %v2288
  %v2290 = vsel %vm2278, %v2273, 0.0
  %v2291 = vadd.f32 %v2289, %v2290
  %v2292 = vsel %vm2278, %v2274, 0.0
  %v2293 = vadd.f32 %v2291, %v2292
  %v2294 = vsel %vm2278, %v2275, 0.0
  %v2295 = vadd.f32 %v2293, %v2294
  %v2296 = vsel %vm2278, %v2276, 0.0
  %v2297 = vadd.f32 %v2295, %v2296
  %v2298 = vsel %vm2278, %v2277, 0.0
  %v2299 = vadd.f32 %v2297, %v2298
  %2300 = vadd.xlane.f32.xlu0 %v2299
  %v2301 = vpop.xlane.xlu0 %2300
  %v2302 = vrot.slane %v2301, 4
  %v2303 = vadd.f32 %v2301, %v2302
  %v2304 = vrot.slane %v2303, 2
  %v2305 = vadd.f32 %v2303, %v2304
  %v2306 = vrot.slane %v2305, 1
  %v2307 = vadd.f32 %v2305, %v2306
  %s2308 = vtos %v2307
  %s2309 = ssub.f32 0.0, %s2308
  %v2310 = vsub.f32 %v2190, %v2223
  %v2311 = vsub.f32 %v2191, %v2224
  %v2312 = vsub.f32 %v2192, %v2225
  %v2313 = vsub.f32 %v2193, %v2226
  %v2314 = vsub.f32 %v2194, %v2227
  %v2315 = vsub.f32 %v2195, %v2228
  %v2316 = vsub.f32 %v2196, %v2229
  %v2317 = vsub.f32 %v2197, %v2230
  %v2318 = vsub.f32 %v2198, %v2231
  %v2319 = vsub.f32 %v2199, %v2232
  %v2320 = vsub.f32 %v2200, %v2233
  %v2321 = vmul.f32 %v2310, %v2310
  %v2322 = vmul.f32 %v2311, %v2311
  %v2323 = vmul.f32 %v2312, %v2312
  %v2324 = vmul.f32 %v2313, %v2313
  %v2325 = vmul.f32 %v2314, %v2314
  %v2326 = vmul.f32 %v2315, %v2315
  %v2327 = vmul.f32 %v2316, %v2316
  %v2328 = vmul.f32 %v2317, %v2317
  %v2329 = vmul.f32 %v2318, %v2318
  %v2330 = vmul.f32 %v2319, %v2319
  %v2331 = vmul.f32 %v2320, %v2320
  %v2332 = vsel %vm2278, %v2321, 0.0
  %v2333 = vsel %vm2278, %v2322, 0.0
  %v2334 = vadd.f32 %v2332, %v2333
  %v2335 = vsel %vm2278, %v2323, 0.0
  %v2336 = vadd.f32 %v2334, %v2335
  %v2337 = vsel %vm2278, %v2324, 0.0
  %v2338 = vadd.f32 %v2336, %v2337
  %v2339 = vsel %vm2278, %v2325, 0.0
  %v2340 = vadd.f32 %v2338, %v2339
  %v2341 = vsel %vm2278, %v2326, 0.0
  %v2342 = vadd.f32 %v2340, %v2341
  %v2343 = vsel %vm2278, %v2327, 0.0
  %v2344 = vadd.f32 %v2342, %v2343
  %v2345 = vsel %vm2278, %v2328, 0.0
  %v2346 = vadd.f32 %v2344, %v2345
  %v2347 = vsel %vm2278, %v2329, 0.0
  %v2348 = vadd.f32 %v2346, %v2347
  %v2349 = vsel %vm2278, %v2330, 0.0
  %v2350 = vadd.f32 %v2348, %v2349
  %v2351 = vsel %vm2278, %v2331, 0.0
  %v2352 = vadd.f32 %v2350, %v2351
  %2353 = vadd.xlane.f32.xlu0 %v2352
  %v2354 = vpop.xlane.xlu0 %2353
  %v2355 = vrot.slane %v2354, 4
  %v2356 = vadd.f32 %v2354, %v2355
  %v2357 = vrot.slane %v2356, 2
  %v2358 = vadd.f32 %v2356, %v2357
  %v2359 = vrot.slane %v2358, 1
  %v2360 = vadd.f32 %v2358, %v2359
  %s2361 = vtos %v2360
  %v2362 = vsub.f32 %v2201, %v2223
  %v2363 = vsub.f32 %v2202, %v2224
  %v2364 = vsub.f32 %v2203, %v2225
  %v2365 = vsub.f32 %v2204, %v2226
  %v2366 = vsub.f32 %v2205, %v2227
  %v2367 = vsub.f32 %v2206, %v2228
  %v2368 = vsub.f32 %v2207, %v2229
  %v2369 = vsub.f32 %v2208, %v2230
  %v2370 = vsub.f32 %v2209, %v2231
  %v2371 = vsub.f32 %v2210, %v2232
  %v2372 = vsub.f32 %v2211, %v2233
  %v2373 = vmul.f32 %v2362, %v2362
  %v2374 = vmul.f32 %v2363, %v2363
  %v2375 = vmul.f32 %v2364, %v2364
  %v2376 = vmul.f32 %v2365, %v2365
  %v2377 = vmul.f32 %v2366, %v2366
  %v2378 = vmul.f32 %v2367, %v2367
  %v2379 = vmul.f32 %v2368, %v2368
  %v2380 = vmul.f32 %v2369, %v2369
  %v2381 = vmul.f32 %v2370, %v2370
  %v2382 = vmul.f32 %v2371, %v2371
  %v2383 = vmul.f32 %v2372, %v2372
  %v2384 = vsel %vm2278, %v2373, 0.0
  %v2385 = vsel %vm2278, %v2374, 0.0
  %v2386 = vadd.f32 %v2384, %v2385
  %v2387 = vsel %vm2278, %v2375, 0.0
  %v2388 = vadd.f32 %v2386, %v2387
  %v2389 = vsel %vm2278, %v2376, 0.0
  %v2390 = vadd.f32 %v2388, %v2389
  %v2391 = vsel %vm2278, %v2377, 0.0
  %v2392 = vadd.f32 %v2390, %v2391
  %v2393 = vsel %vm2278, %v2378, 0.0
  %v2394 = vadd.f32 %v2392, %v2393
  %v2395 = vsel %vm2278, %v2379, 0.0
  %v2396 = vadd.f32 %v2394, %v2395
  %v2397 = vsel %vm2278, %v2380, 0.0
  %v2398 = vadd.f32 %v2396, %v2397
  %v2399 = vsel %vm2278, %v2381, 0.0
  %v2400 = vadd.f32 %v2398, %v2399
  %v2401 = vsel %vm2278, %v2382, 0.0
  %v2402 = vadd.f32 %v2400, %v2401
  %v2403 = vsel %vm2278, %v2383, 0.0
  %v2404 = vadd.f32 %v2402, %v2403
  %2405 = vadd.xlane.f32.xlu0 %v2404
  %v2406 = vpop.xlane.xlu0 %2405
  %v2407 = vrot.slane %v2406, 4
  %v2408 = vadd.f32 %v2406, %v2407
  %v2409 = vrot.slane %v2408, 2
  %v2410 = vadd.f32 %v2408, %v2409
  %v2411 = vrot.slane %v2410, 1
  %v2412 = vadd.f32 %v2410, %v2411
  %s2413 = vtos %v2412
  %s2414 = sadd.f32 %s2361, %s2413
  %v2415 = vld [vmem:[%s17] sm:$0xff]
  %v2417 = vsel %vm2278, %v2223, 0
  %v2420 = vsel %vm2278, %v2224, 0
  %v2423 = vsel %vm2278, %v2225, 0
  %v2426 = vsel %vm2278, %v2226, 0
  %v2429 = vsel %vm2278, %v2227, 0
  %v2432 = vsel %vm2278, %v2228, 0
  %v2435 = vsel %vm2278, %v2229, 0
  %v2438 = vsel %vm2278, %v2230, 0
  %v2441 = vsel %vm2278, %v2231, 0
  %v2444 = vsel %vm2278, %v2232, 0
  %v2447 = vsel %vm2278, %v2233, 0
  %2449 = vmatprep.subr.mxu0 0.0
  %2450 = vmatpush1.msra.mxu0 0.0
  %2451 = vmatprep.subr.mxu0 0.0
  %2452 = vmatpush1.msra.mxu0 0.0
  %2453 = vmatprep.subr.mxu0 0.0
  %2454 = vmatpush1.msra.mxu0 0.0
  %2455 = vmatprep.subr.mxu0 0.0
  %2456 = vmatpush1.msra.mxu0 0.0
  %2457 = vmatprep.subr.mxu0 0.0
  %2458 = vmatpush1.msra.mxu0 0.0
  %2459 = vmatprep.subr.mxu0 0.0
  %2460 = vmatpush1.msra.mxu0 0.0
  %2461 = vmatprep.subr.mxu0 0.0
  %2462 = vmatpush1.msra.mxu0 0.0
  %2463 = vmatprep.subr.mxu0 0.0
  %2464 = vmatpush1.msra.mxu0 0.0
  %2465 = vmatprep.subr.mxu0 0.0
  %2466 = vmatpush1.msra.mxu0 0.0
  %2467 = vmatprep.subr.mxu0 0.0
  %2468 = vmatpush1.msra.mxu0 0.0
  %2469 = vmatprep.subr.mxu0 0.0
  %2470 = vmatpush1.msra.mxu0 0.0
  %2471 = vmatprep.subr.mxu0 0.0
  %2472 = vmatpush1.msra.mxu0 0.0
  %2473 = vmatprep.subr.mxu0 0.0
  %2474 = vmatpush1.msra.mxu0 0.0
  %2475 = vmatprep.subr.mxu0 0.0
  %2476 = vmatpush1.msra.mxu0 0.0
  %2477 = vmatprep.subr.mxu0 0.0
  %2478 = vmatpush1.msra.mxu0 0.0
  %2479 = vmatprep.subr.mxu0 0.0
  %2480 = vmatpush1.msra.mxu0 %v2415
  %2481 = vmatprep.subr.mxu0 0.0
  %2482 = vmatpush2.msra.mxu0 0.0
  %2483 = vmatprep.subr.mxu0 0.0
  %2484 = vmatpush2.msra.mxu0 0.0
  %2485 = vmatprep.subr.mxu0 0.0
  %2486 = vmatpush2.msra.mxu0 0.0
  %2487 = vmatprep.subr.mxu0 0.0
  %2488 = vmatpush2.msra.mxu0 0.0
  %2489 = vmatprep.subr.mxu0 0.0
  %2490 = vmatpush2.msra.mxu0 0.0
  %2491 = vmatprep.subr.mxu0 0.0
  %2492 = vmatpush2.msra.mxu0 0.0
  %2493 = vmatprep.subr.mxu0 0.0
  %2494 = vmatpush2.msra.mxu0 0.0
  %2495 = vmatprep.subr.mxu0 0.0
  %2496 = vmatpush2.msra.mxu0 0.0
  %2497 = vmatprep.subr.mxu0 0.0
  %2498 = vmatpush2.msra.mxu0 0.0
  %2499 = vmatprep.subr.mxu0 0.0
  %2500 = vmatpush2.msra.mxu0 0.0
  %2501 = vmatprep.subr.mxu0 0.0
  %2502 = vmatpush2.msra.mxu0 0.0
  %2503 = vmatprep.subr.mxu0 0.0
  %2504 = vmatpush2.msra.mxu0 0.0
  %2505 = vmatprep.subr.mxu0 0.0
  %2506 = vmatpush2.msra.mxu0 0.0
  %2507 = vmatprep.subr.mxu0 0.0
  %2508 = vmatpush2.msra.mxu0 0.0
  %2509 = vmatprep.subr.mxu0 0.0
  %2510 = vmatpush2.msra.mxu0 0.0
  %2511 = vmatprep.subr.mxu0 0.0
  %2512 = vmatpush2.msra.mxu0 0.0
  %2513 = vmatprep.mubr.f32.mxu0 0.0
  %2514 = vmatmul.mubr.f32.gmra.mxu0 %v2417
  %v2515 = vpop.f32.mrf.mxu0
  %v2516 = vadd.f32 0.0, %v2515
  %v2517 = vpop.f32.mrf.mxu0
  %2518 = vmatprep.mubr.f32.mxu0 0.0
  %2519 = vmatmul.mubr.f32.gmra.mxu0 %v2420
  %v2520 = vpop.f32.mrf.mxu0
  %v2521 = vadd.f32 0.0, %v2520
  %v2522 = vpop.f32.mrf.mxu0
  %2523 = vmatprep.mubr.f32.mxu0 0.0
  %2524 = vmatmul.mubr.f32.gmra.mxu0 %v2423
  %v2525 = vpop.f32.mrf.mxu0
  %v2526 = vadd.f32 0.0, %v2525
  %v2527 = vpop.f32.mrf.mxu0
  %2528 = vmatprep.mubr.f32.mxu0 0.0
  %2529 = vmatmul.mubr.f32.gmra.mxu0 %v2426
  %v2530 = vpop.f32.mrf.mxu0
  %v2531 = vadd.f32 0.0, %v2530
  %v2532 = vpop.f32.mrf.mxu0
  %2533 = vmatprep.mubr.f32.mxu0 0.0
  %2534 = vmatmul.mubr.f32.gmra.mxu0 %v2429
  %v2535 = vpop.f32.mrf.mxu0
  %v2536 = vadd.f32 0.0, %v2535
  %v2537 = vpop.f32.mrf.mxu0
  %2538 = vmatprep.mubr.f32.mxu0 0.0
  %2539 = vmatmul.mubr.f32.gmra.mxu0 %v2432
  %v2540 = vpop.f32.mrf.mxu0
  %v2541 = vadd.f32 0.0, %v2540
  %v2542 = vpop.f32.mrf.mxu0
  %2543 = vmatprep.mubr.f32.mxu0 0.0
  %2544 = vmatmul.mubr.f32.gmra.mxu0 %v2435
  %v2545 = vpop.f32.mrf.mxu0
  %v2546 = vadd.f32 0.0, %v2545
  %v2547 = vpop.f32.mrf.mxu0
  %2548 = vmatprep.mubr.f32.mxu0 0.0
  %2549 = vmatmul.mubr.f32.gmra.mxu0 %v2438
  %v2550 = vpop.f32.mrf.mxu0
  %v2551 = vadd.f32 0.0, %v2550
  %v2552 = vpop.f32.mrf.mxu0
  %2553 = vmatprep.mubr.f32.mxu0 0.0
  %2554 = vmatmul.mubr.f32.gmra.mxu0 %v2441
  %v2555 = vpop.f32.mrf.mxu0
  %v2556 = vadd.f32 0.0, %v2555
  %v2557 = vpop.f32.mrf.mxu0
  %2558 = vmatprep.mubr.f32.mxu0 0.0
  %2559 = vmatmul.mubr.f32.gmra.mxu0 %v2444
  %v2560 = vpop.f32.mrf.mxu0
  %v2561 = vadd.f32 0.0, %v2560
  %v2562 = vpop.f32.mrf.mxu0
  %2563 = vmatprep.mubr.f32.mxu0 0.0
  %2564 = vmatmul.mubr.f32.gmra.mxu0 %v2447
  %v2565 = vpop.f32.mrf.mxu0
  %v2566 = vadd.f32 0.0, %v2565
  %v2567 = vpop.f32.mrf.mxu0
  %2568 = vdwg.mxu0
  %v2569 = vld [vmem:[%s19] sm:$0xff]
  %v2570 = vld [vmem:[%s19 + $0x8] sm:$0xff]
  %v2571 = vld [vmem:[%s19 + $0x10] sm:$0xff]
  %v2572 = vld [vmem:[%s19 + $0x18] sm:$0xff]
  %v2573 = vld [vmem:[%s19 + $0x20] sm:$0xff]
  %v2574 = vld [vmem:[%s19 + $0x28] sm:$0xff]
  %v2575 = vld [vmem:[%s19 + $0x30] sm:$0xff]
  %v2576 = vld [vmem:[%s19 + $0x38] sm:$0xff]
  %v2577 = vld [vmem:[%s19 + $0x40] sm:$0xff]
  %v2578 = vld [vmem:[%s19 + $0x48] sm:$0xff]
  %v2579 = vld [vmem:[%s19 + $0x50] sm:$0xff]
  %v2580 = vld [vmem:[%s19 + $0x58] sm:$0xff]
  %v2581 = vld [vmem:[%s19 + $0x60] sm:$0xff]
  %v2582 = vld [vmem:[%s19 + $0x68] sm:$0xff]
  %v2583 = vld [vmem:[%s19 + $0x70] sm:$0xff]
  %v2584 = vld [vmem:[%s19 + $0x78] sm:$0xff]
  %v2585 = vld [vmem:[%s19 + $0x80] sm:$0xff]
  %v2586 = vld [vmem:[%s19 + $0x88] sm:$0xff]
  %v2587 = vld [vmem:[%s19 + $0x90] sm:$0xff]
  %v2588 = vld [vmem:[%s19 + $0x98] sm:$0xff]
  %v2589 = vld [vmem:[%s18] sm:$0xff]
  %2590 = vmatprep.subr.mxu0 0.0
  %2591 = vmatpush1.msra.mxu0 0.0
  %2592 = vmatprep.subr.mxu0 0.0
  %2593 = vmatpush1.msra.mxu0 0.0
  %2594 = vmatprep.subr.mxu0 0.0
  %2595 = vmatpush1.msra.mxu0 0.0
  %2596 = vmatprep.subr.mxu0 0.0
  %2597 = vmatpush1.msra.mxu0 0.0
  %2598 = vmatprep.subr.mxu0 0.0
  %2599 = vmatpush1.msra.mxu0 0.0
  %2600 = vmatprep.subr.mxu0 0.0
  %2601 = vmatpush1.msra.mxu0 0.0
  %2602 = vmatprep.subr.mxu0 0.0
  %2603 = vmatpush1.msra.mxu0 0.0
  %2604 = vmatprep.subr.mxu0 0.0
  %2605 = vmatpush1.msra.mxu0 0.0
  %2606 = vmatprep.subr.mxu0 0.0
  %2607 = vmatpush1.msra.mxu0 0.0
  %2608 = vmatprep.subr.mxu0 0.0
  %2609 = vmatpush1.msra.mxu0 0.0
  %2610 = vmatprep.subr.mxu0 0.0
  %2611 = vmatpush1.msra.mxu0 0.0
  %2612 = vmatprep.subr.mxu0 0.0
  %2613 = vmatpush1.msra.mxu0 0.0
  %2614 = vmatprep.subr.mxu0 0.0
  %2615 = vmatpush1.msra.mxu0 0.0
  %2616 = vmatprep.subr.mxu0 0.0
  %2617 = vmatpush1.msra.mxu0 0.0
  %2618 = vmatprep.subr.mxu0 0.0
  %2619 = vmatpush1.msra.mxu0 0.0
  %2620 = vmatprep.subr.mxu0 0.0
  %2621 = vmatpush1.msra.mxu0 %v2589
  %2622 = vmatprep.subr.mxu0 0.0
  %2623 = vmatpush2.msra.mxu0 0.0
  %2624 = vmatprep.subr.mxu0 0.0
  %2625 = vmatpush2.msra.mxu0 0.0
  %2626 = vmatprep.subr.mxu0 0.0
  %2627 = vmatpush2.msra.mxu0 0.0
  %2628 = vmatprep.subr.mxu0 0.0
  %2629 = vmatpush2.msra.mxu0 0.0
  %2630 = vmatprep.subr.mxu0 0.0
  %2631 = vmatpush2.msra.mxu0 0.0
  %2632 = vmatprep.subr.mxu0 0.0
  %2633 = vmatpush2.msra.mxu0 0.0
  %2634 = vmatprep.subr.mxu0 0.0
  %2635 = vmatpush2.msra.mxu0 0.0
  %2636 = vmatprep.subr.mxu0 0.0
  %2637 = vmatpush2.msra.mxu0 0.0
  %2638 = vmatprep.subr.mxu0 0.0
  %2639 = vmatpush2.msra.mxu0 0.0
  %2640 = vmatprep.subr.mxu0 0.0
  %2641 = vmatpush2.msra.mxu0 0.0
  %2642 = vmatprep.subr.mxu0 0.0
  %2643 = vmatpush2.msra.mxu0 0.0
  %2644 = vmatprep.subr.mxu0 0.0
  %2645 = vmatpush2.msra.mxu0 0.0
  %2646 = vmatprep.subr.mxu0 0.0
  %2647 = vmatpush2.msra.mxu0 0.0
  %2648 = vmatprep.subr.mxu0 0.0
  %2649 = vmatpush2.msra.mxu0 0.0
  %2650 = vmatprep.subr.mxu0 0.0
  %2651 = vmatpush2.msra.mxu0 0.0
  %2652 = vmatprep.subr.mxu0 0.0
  %2653 = vmatpush2.msra.mxu0 0.0
  %2654 = vmatprep.mubr.f32.mxu0 0.0
  %2655 = vmatmul.mubr.f32.gmra.mxu0 %v2417
  %v2656 = vpop.f32.mrf.mxu0
  %v2657 = vadd.f32 0.0, %v2656
  %v2658 = vpop.f32.mrf.mxu0
  %2659 = vmatprep.mubr.f32.mxu0 0.0
  %2660 = vmatmul.mubr.f32.gmra.mxu0 %v2420
  %v2661 = vpop.f32.mrf.mxu0
  %v2662 = vadd.f32 0.0, %v2661
  %v2663 = vpop.f32.mrf.mxu0
  %2664 = vmatprep.mubr.f32.mxu0 0.0
  %2665 = vmatmul.mubr.f32.gmra.mxu0 %v2423
  %v2666 = vpop.f32.mrf.mxu0
  %v2667 = vadd.f32 0.0, %v2666
  %v2668 = vpop.f32.mrf.mxu0
  %2669 = vmatprep.mubr.f32.mxu0 0.0
  %2670 = vmatmul.mubr.f32.gmra.mxu0 %v2426
  %v2671 = vpop.f32.mrf.mxu0
  %v2672 = vadd.f32 0.0, %v2671
  %v2673 = vpop.f32.mrf.mxu0
  %2674 = vmatprep.mubr.f32.mxu0 0.0
  %2675 = vmatmul.mubr.f32.gmra.mxu0 %v2429
  %v2676 = vpop.f32.mrf.mxu0
  %v2677 = vadd.f32 0.0, %v2676
  %v2678 = vpop.f32.mrf.mxu0
  %2679 = vmatprep.mubr.f32.mxu0 0.0
  %2680 = vmatmul.mubr.f32.gmra.mxu0 %v2432
  %v2681 = vpop.f32.mrf.mxu0
  %v2682 = vadd.f32 0.0, %v2681
  %v2683 = vpop.f32.mrf.mxu0
  %2684 = vmatprep.mubr.f32.mxu0 0.0
  %2685 = vmatmul.mubr.f32.gmra.mxu0 %v2435
  %v2686 = vpop.f32.mrf.mxu0
  %v2687 = vadd.f32 0.0, %v2686
  %v2688 = vpop.f32.mrf.mxu0
  %2689 = vmatprep.mubr.f32.mxu0 0.0
  %2690 = vmatmul.mubr.f32.gmra.mxu0 %v2438
  %v2691 = vpop.f32.mrf.mxu0
  %v2692 = vadd.f32 0.0, %v2691
  %v2693 = vpop.f32.mrf.mxu0
  %2694 = vmatprep.mubr.f32.mxu0 0.0
  %2695 = vmatmul.mubr.f32.gmra.mxu0 %v2441
  %v2696 = vpop.f32.mrf.mxu0
  %v2697 = vadd.f32 0.0, %v2696
  %v2698 = vpop.f32.mrf.mxu0
  %2699 = vmatprep.mubr.f32.mxu0 0.0
  %2700 = vmatmul.mubr.f32.gmra.mxu0 %v2444
  %v2701 = vpop.f32.mrf.mxu0
  %v2702 = vadd.f32 0.0, %v2701
  %v2703 = vpop.f32.mrf.mxu0
  %2704 = vmatprep.mubr.f32.mxu0 0.0
  %2705 = vmatmul.mubr.f32.gmra.mxu0 %v2447
  %v2706 = vpop.f32.mrf.mxu0
  %v2707 = vadd.f32 0.0, %v2706
  %v2708 = vpop.f32.mrf.mxu0
  %2709 = vdwg.mxu0
  %v2710 = vld [vmem:[%s20] sm:$0xff]
  %v2711 = vld [vmem:[%s20 + $0x8] sm:$0xff]
  %v2712 = vld [vmem:[%s20 + $0x10] sm:$0xff]
  %v2713 = vld [vmem:[%s20 + $0x18] sm:$0xff]
  %v2714 = vld [vmem:[%s20 + $0x20] sm:$0xff]
  %v2715 = vld [vmem:[%s20 + $0x28] sm:$0xff]
  %v2716 = vld [vmem:[%s20 + $0x30] sm:$0xff]
  %v2717 = vld [vmem:[%s20 + $0x38] sm:$0xff]
  %v2718 = vld [vmem:[%s20 + $0x40] sm:$0xff]
  %v2719 = vld [vmem:[%s20 + $0x48] sm:$0xff]
  %v2720 = vld [vmem:[%s20 + $0x50] sm:$0xff]
  %v2721 = vld [vmem:[%s20 + $0x58] sm:$0xff]
  %v2722 = vld [vmem:[%s20 + $0x60] sm:$0xff]
  %v2723 = vld [vmem:[%s20 + $0x68] sm:$0xff]
  %v2724 = vld [vmem:[%s20 + $0x70] sm:$0xff]
  %v2725 = vld [vmem:[%s20 + $0x78] sm:$0xff]
  %v2726 = vld [vmem:[%s20 + $0x80] sm:$0xff]
  %v2727 = vld [vmem:[%s20 + $0x88] sm:$0xff]
  %v2728 = vld [vmem:[%s20 + $0x90] sm:$0xff]
  %v2729 = vld [vmem:[%s20 + $0x98] sm:$0xff]
  %vm2730 = vcmask 719872
  %v2732 = vsel %vm2730, %v2710, 0
  %v2735 = vsel %vm2730, %v2711, 0
  %v2738 = vsel %vm2730, %v2712, 0
  %v2741 = vsel %vm2730, %v2713, 0
  %v2744 = vsel %vm2730, %v2714, 0
  %v2747 = vsel %vm2730, %v2715, 0
  %v2750 = vsel %vm2730, %v2716, 0
  %v2753 = vsel %vm2730, %v2717, 0
  %v2756 = vsel %vm2730, %v2718, 0
  %v2759 = vsel %vm2730, %v2719, 0
  %v2762 = vsel %vm2730, %v2720, 0
  %v2765 = vsel %vm2730, %v2721, 0
  %v2768 = vsel %vm2730, %v2722, 0
  %v2771 = vsel %vm2730, %v2723, 0
  %v2774 = vsel %vm2730, %v2724, 0
  %v2777 = vsel %vm2730, %v2725, 0
  %v2780 = vsel %vm2730, %v2726, 0
  %v2783 = vsel %vm2730, %v2727, 0
  %v2786 = vsel %vm2730, %v2728, 0
  %v2789 = vsel %vm2730, %v2729, 0
  %2791 = vmatprep.subr.mxu0 0.0
  %2792 = vmatpush1.msra.mxu0 0.0
  %2793 = vmatprep.subr.mxu0 0.0
  %2794 = vmatpush1.msra.mxu0 0.0
  %2795 = vmatprep.subr.mxu0 0.0
  %2796 = vmatpush1.msra.mxu0 0.0
  %2797 = vmatprep.subr.mxu0 0.0
  %2798 = vmatpush1.msra.mxu0 0.0
  %2799 = vmatprep.subr.mxu0 0.0
  %2800 = vmatpush1.msra.mxu0 0.0
  %2801 = vmatprep.subr.mxu0 0.0
  %2802 = vmatpush1.msra.mxu0 %v2707
  %2803 = vmatprep.subr.mxu0 0.0
  %2804 = vmatpush1.msra.mxu0 %v2702
  %2805 = vmatprep.subr.mxu0 0.0
  %2806 = vmatpush1.msra.mxu0 %v2697
  %2807 = vmatprep.subr.mxu0 0.0
  %2808 = vmatpush1.msra.mxu0 %v2692
  %2809 = vmatprep.subr.mxu0 0.0
  %2810 = vmatpush1.msra.mxu0 %v2687
  %2811 = vmatprep.subr.mxu0 0.0
  %2812 = vmatpush1.msra.mxu0 %v2682
  %2813 = vmatprep.subr.mxu0 0.0
  %2814 = vmatpush1.msra.mxu0 %v2677
  %2815 = vmatprep.subr.mxu0 0.0
  %2816 = vmatpush1.msra.mxu0 %v2672
  %2817 = vmatprep.subr.mxu0 0.0
  %2818 = vmatpush1.msra.mxu0 %v2667
  %2819 = vmatprep.subr.mxu0 0.0
  %2820 = vmatpush1.msra.mxu0 %v2662
  %2821 = vmatprep.subr.mxu0 0.0
  %2822 = vmatpush1.msra.mxu0 %v2657
  %2823 = vmatprep.subr.mxu0 0.0
  %2824 = vmatpush2.msra.mxu0 0.0
  %2825 = vmatprep.subr.mxu0 0.0
  %2826 = vmatpush2.msra.mxu0 0.0
  %2827 = vmatprep.subr.mxu0 0.0
  %2828 = vmatpush2.msra.mxu0 0.0
  %2829 = vmatprep.subr.mxu0 0.0
  %2830 = vmatpush2.msra.mxu0 0.0
  %2831 = vmatprep.subr.mxu0 0.0
  %2832 = vmatpush2.msra.mxu0 0.0
  %2833 = vmatprep.subr.mxu0 0.0
  %2834 = vmatpush2.msra.mxu0 0.0
  %2835 = vmatprep.subr.mxu0 0.0
  %2836 = vmatpush2.msra.mxu0 0.0
  %2837 = vmatprep.subr.mxu0 0.0
  %2838 = vmatpush2.msra.mxu0 0.0
  %2839 = vmatprep.subr.mxu0 0.0
  %2840 = vmatpush2.msra.mxu0 0.0
  %2841 = vmatprep.subr.mxu0 0.0
  %2842 = vmatpush2.msra.mxu0 0.0
  %2843 = vmatprep.subr.mxu0 0.0
  %2844 = vmatpush2.msra.mxu0 0.0
  %2845 = vmatprep.subr.mxu0 0.0
  %2846 = vmatpush2.msra.mxu0 0.0
  %2847 = vmatprep.subr.mxu0 0.0
  %2848 = vmatpush2.msra.mxu0 0.0
  %2849 = vmatprep.subr.mxu0 0.0
  %2850 = vmatpush2.msra.mxu0 0.0
  %2851 = vmatprep.subr.mxu0 0.0
  %2852 = vmatpush2.msra.mxu0 0.0
  %2853 = vmatprep.subr.mxu0 0.0
  %2854 = vmatpush2.msra.mxu0 0.0
  %2855 = vmatprep.mubr.f32.mxu0 0.0
  %2856 = vmatmul.mubr.f32.gmra.mxu0 %v2732
  %v2857 = vpop.f32.mrf.mxu0
  %v2858 = vadd.f32 0.0, %v2857
  %v2859 = vpop.f32.mrf.mxu0
  %2860 = vmatprep.mubr.f32.mxu0 0.0
  %2861 = vmatmul.mubr.f32.gmra.mxu0 %v2735
  %v2862 = vpop.f32.mrf.mxu0
  %v2863 = vadd.f32 0.0, %v2862
  %v2864 = vpop.f32.mrf.mxu0
  %2865 = vmatprep.mubr.f32.mxu0 0.0
  %2866 = vmatmul.mubr.f32.gmra.mxu0 %v2738
  %v2867 = vpop.f32.mrf.mxu0
  %v2868 = vadd.f32 0.0, %v2867
  %v2869 = vpop.f32.mrf.mxu0
  %2870 = vmatprep.mubr.f32.mxu0 0.0
  %2871 = vmatmul.mubr.f32.gmra.mxu0 %v2741
  %v2872 = vpop.f32.mrf.mxu0
  %v2873 = vadd.f32 0.0, %v2872
  %v2874 = vpop.f32.mrf.mxu0
  %2875 = vmatprep.mubr.f32.mxu0 0.0
  %2876 = vmatmul.mubr.f32.gmra.mxu0 %v2744
  %v2877 = vpop.f32.mrf.mxu0
  %v2878 = vadd.f32 0.0, %v2877
  %v2879 = vpop.f32.mrf.mxu0
  %2880 = vmatprep.mubr.f32.mxu0 0.0
  %2881 = vmatmul.mubr.f32.gmra.mxu0 %v2747
  %v2882 = vpop.f32.mrf.mxu0
  %v2883 = vadd.f32 0.0, %v2882
  %v2884 = vpop.f32.mrf.mxu0
  %2885 = vmatprep.mubr.f32.mxu0 0.0
  %2886 = vmatmul.mubr.f32.gmra.mxu0 %v2750
  %v2887 = vpop.f32.mrf.mxu0
  %v2888 = vadd.f32 0.0, %v2887
  %v2889 = vpop.f32.mrf.mxu0
  %2890 = vmatprep.mubr.f32.mxu0 0.0
  %2891 = vmatmul.mubr.f32.gmra.mxu0 %v2753
  %v2892 = vpop.f32.mrf.mxu0
  %v2893 = vadd.f32 0.0, %v2892
  %v2894 = vpop.f32.mrf.mxu0
  %2895 = vmatprep.mubr.f32.mxu0 0.0
  %2896 = vmatmul.mubr.f32.gmra.mxu0 %v2756
  %v2897 = vpop.f32.mrf.mxu0
  %v2898 = vadd.f32 0.0, %v2897
  %v2899 = vpop.f32.mrf.mxu0
  %2900 = vmatprep.mubr.f32.mxu0 0.0
  %2901 = vmatmul.mubr.f32.gmra.mxu0 %v2759
  %v2902 = vpop.f32.mrf.mxu0
  %v2903 = vadd.f32 0.0, %v2902
  %v2904 = vpop.f32.mrf.mxu0
  %2905 = vmatprep.mubr.f32.mxu0 0.0
  %2906 = vmatmul.mubr.f32.gmra.mxu0 %v2762
  %v2907 = vpop.f32.mrf.mxu0
  %v2908 = vadd.f32 0.0, %v2907
  %v2909 = vpop.f32.mrf.mxu0
  %2910 = vmatprep.mubr.f32.mxu0 0.0
  %2911 = vmatmul.mubr.f32.gmra.mxu0 %v2765
  %v2912 = vpop.f32.mrf.mxu0
  %v2913 = vadd.f32 0.0, %v2912
  %v2914 = vpop.f32.mrf.mxu0
  %2915 = vmatprep.mubr.f32.mxu0 0.0
  %2916 = vmatmul.mubr.f32.gmra.mxu0 %v2768
  %v2917 = vpop.f32.mrf.mxu0
  %v2918 = vadd.f32 0.0, %v2917
  %v2919 = vpop.f32.mrf.mxu0
  %2920 = vmatprep.mubr.f32.mxu0 0.0
  %2921 = vmatmul.mubr.f32.gmra.mxu0 %v2771
  %v2922 = vpop.f32.mrf.mxu0
  %v2923 = vadd.f32 0.0, %v2922
  %v2924 = vpop.f32.mrf.mxu0
  %2925 = vmatprep.mubr.f32.mxu0 0.0
  %2926 = vmatmul.mubr.f32.gmra.mxu0 %v2774
  %v2927 = vpop.f32.mrf.mxu0
  %v2928 = vadd.f32 0.0, %v2927
  %v2929 = vpop.f32.mrf.mxu0
  %2930 = vmatprep.mubr.f32.mxu0 0.0
  %2931 = vmatmul.mubr.f32.gmra.mxu0 %v2777
  %v2932 = vpop.f32.mrf.mxu0
  %v2933 = vadd.f32 0.0, %v2932
  %v2934 = vpop.f32.mrf.mxu0
  %2935 = vmatprep.mubr.f32.mxu0 0.0
  %2936 = vmatmul.mubr.f32.gmra.mxu0 %v2780
  %v2937 = vpop.f32.mrf.mxu0
  %v2938 = vadd.f32 0.0, %v2937
  %v2939 = vpop.f32.mrf.mxu0
  %2940 = vmatprep.mubr.f32.mxu0 0.0
  %2941 = vmatmul.mubr.f32.gmra.mxu0 %v2783
  %v2942 = vpop.f32.mrf.mxu0
  %v2943 = vadd.f32 0.0, %v2942
  %v2944 = vpop.f32.mrf.mxu0
  %2945 = vmatprep.mubr.f32.mxu0 0.0
  %2946 = vmatmul.mubr.f32.gmra.mxu0 %v2786
  %v2947 = vpop.f32.mrf.mxu0
  %v2948 = vadd.f32 0.0, %v2947
  %v2949 = vpop.f32.mrf.mxu0
  %2950 = vmatprep.mubr.f32.mxu0 0.0
  %2951 = vmatmul.mubr.f32.gmra.mxu0 %v2789
  %v2952 = vpop.f32.mrf.mxu0
  %v2953 = vadd.f32 0.0, %v2952
  %v2954 = vpop.f32.mrf.mxu0
  %2955 = vdwg.mxu0
  %v2957 = vsel %vm2730, %v2569, 0
  %v2960 = vsel %vm2730, %v2570, 0
  %v2963 = vsel %vm2730, %v2571, 0
  %v2966 = vsel %vm2730, %v2572, 0
  %v2969 = vsel %vm2730, %v2573, 0
  %v2972 = vsel %vm2730, %v2574, 0
  %v2975 = vsel %vm2730, %v2575, 0
  %v2978 = vsel %vm2730, %v2576, 0
  %v2981 = vsel %vm2730, %v2577, 0
  %v2984 = vsel %vm2730, %v2578, 0
  %v2987 = vsel %vm2730, %v2579, 0
  %v2990 = vsel %vm2730, %v2580, 0
  %v2993 = vsel %vm2730, %v2581, 0
  %v2996 = vsel %vm2730, %v2582, 0
  %v2999 = vsel %vm2730, %v2583, 0
  %v3002 = vsel %vm2730, %v2584, 0
  %v3005 = vsel %vm2730, %v2585, 0
  %v3008 = vsel %vm2730, %v2586, 0
  %v3011 = vsel %vm2730, %v2587, 0
  %v3014 = vsel %vm2730, %v2588, 0
  %3016 = vmatprep.subr.mxu0 0.0
  %3017 = vmatpush1.msra.mxu0 0.0
  %3018 = vmatprep.subr.mxu0 0.0
  %3019 = vmatpush1.msra.mxu0 0.0
  %3020 = vmatprep.subr.mxu0 0.0
  %3021 = vmatpush1.msra.mxu0 0.0
  %3022 = vmatprep.subr.mxu0 0.0
  %3023 = vmatpush1.msra.mxu0 0.0
  %3024 = vmatprep.subr.mxu0 0.0
  %3025 = vmatpush1.msra.mxu0 0.0
  %3026 = vmatprep.subr.mxu0 0.0
  %3027 = vmatpush1.msra.mxu0 %v2566
  %3028 = vmatprep.subr.mxu0 0.0
  %3029 = vmatpush1.msra.mxu0 %v2561
  %3030 = vmatprep.subr.mxu0 0.0
  %3031 = vmatpush1.msra.mxu0 %v2556
  %3032 = vmatprep.subr.mxu0 0.0
  %3033 = vmatpush1.msra.mxu0 %v2551
  %3034 = vmatprep.subr.mxu0 0.0
  %3035 = vmatpush1.msra.mxu0 %v2546
  %3036 = vmatprep.subr.mxu0 0.0
  %3037 = vmatpush1.msra.mxu0 %v2541
  %3038 = vmatprep.subr.mxu0 0.0
  %3039 = vmatpush1.msra.mxu0 %v2536
  %3040 = vmatprep.subr.mxu0 0.0
  %3041 = vmatpush1.msra.mxu0 %v2531
  %3042 = vmatprep.subr.mxu0 0.0
  %3043 = vmatpush1.msra.mxu0 %v2526
  %3044 = vmatprep.subr.mxu0 0.0
  %3045 = vmatpush1.msra.mxu0 %v2521
  %3046 = vmatprep.subr.mxu0 0.0
  %3047 = vmatpush1.msra.mxu0 %v2516
  %3048 = vmatprep.subr.mxu0 0.0
  %3049 = vmatpush2.msra.mxu0 0.0
  %3050 = vmatprep.subr.mxu0 0.0
  %3051 = vmatpush2.msra.mxu0 0.0
  %3052 = vmatprep.subr.mxu0 0.0
  %3053 = vmatpush2.msra.mxu0 0.0
  %3054 = vmatprep.subr.mxu0 0.0
  %3055 = vmatpush2.msra.mxu0 0.0
  %3056 = vmatprep.subr.mxu0 0.0
  %3057 = vmatpush2.msra.mxu0 0.0
  %3058 = vmatprep.subr.mxu0 0.0
  %3059 = vmatpush2.msra.mxu0 0.0
  %3060 = vmatprep.subr.mxu0 0.0
  %3061 = vmatpush2.msra.mxu0 0.0
  %3062 = vmatprep.subr.mxu0 0.0
  %3063 = vmatpush2.msra.mxu0 0.0
  %3064 = vmatprep.subr.mxu0 0.0
  %3065 = vmatpush2.msra.mxu0 0.0
  %3066 = vmatprep.subr.mxu0 0.0
  %3067 = vmatpush2.msra.mxu0 0.0
  %3068 = vmatprep.subr.mxu0 0.0
  %3069 = vmatpush2.msra.mxu0 0.0
  %3070 = vmatprep.subr.mxu0 0.0
  %3071 = vmatpush2.msra.mxu0 0.0
  %3072 = vmatprep.subr.mxu0 0.0
  %3073 = vmatpush2.msra.mxu0 0.0
  %3074 = vmatprep.subr.mxu0 0.0
  %3075 = vmatpush2.msra.mxu0 0.0
  %3076 = vmatprep.subr.mxu0 0.0
  %3077 = vmatpush2.msra.mxu0 0.0
  %3078 = vmatprep.subr.mxu0 0.0
  %3079 = vmatpush2.msra.mxu0 0.0
  %3080 = vmatprep.mubr.f32.mxu0 0.0
  %3081 = vmatmul.mubr.f32.gmra.mxu0 %v2957
  %v3082 = vpop.f32.mrf.mxu0
  %v3083 = vadd.f32 %v2858, %v3082
  %v3084 = vpop.f32.mrf.mxu0
  %3085 = vmatprep.mubr.f32.mxu0 0.0
  %3086 = vmatmul.mubr.f32.gmra.mxu0 %v2960
  %v3087 = vpop.f32.mrf.mxu0
  %v3088 = vadd.f32 %v2863, %v3087
  %v3089 = vpop.f32.mrf.mxu0
  %3090 = vmatprep.mubr.f32.mxu0 0.0
  %3091 = vmatmul.mubr.f32.gmra.mxu0 %v2963
  %v3092 = vpop.f32.mrf.mxu0
  %v3093 = vadd.f32 %v2868, %v3092
  %v3094 = vpop.f32.mrf.mxu0
  %3095 = vmatprep.mubr.f32.mxu0 0.0
  %3096 = vmatmul.mubr.f32.gmra.mxu0 %v2966
  %v3097 = vpop.f32.mrf.mxu0
  %v3098 = vadd.f32 %v2873, %v3097
  %v3099 = vpop.f32.mrf.mxu0
  %3100 = vmatprep.mubr.f32.mxu0 0.0
  %3101 = vmatmul.mubr.f32.gmra.mxu0 %v2969
  %v3102 = vpop.f32.mrf.mxu0
  %v3103 = vadd.f32 %v2878, %v3102
  %v3104 = vpop.f32.mrf.mxu0
  %3105 = vmatprep.mubr.f32.mxu0 0.0
  %3106 = vmatmul.mubr.f32.gmra.mxu0 %v2972
  %v3107 = vpop.f32.mrf.mxu0
  %v3108 = vadd.f32 %v2883, %v3107
  %v3109 = vpop.f32.mrf.mxu0
  %3110 = vmatprep.mubr.f32.mxu0 0.0
  %3111 = vmatmul.mubr.f32.gmra.mxu0 %v2975
  %v3112 = vpop.f32.mrf.mxu0
  %v3113 = vadd.f32 %v2888, %v3112
  %v3114 = vpop.f32.mrf.mxu0
  %3115 = vmatprep.mubr.f32.mxu0 0.0
  %3116 = vmatmul.mubr.f32.gmra.mxu0 %v2978
  %v3117 = vpop.f32.mrf.mxu0
  %v3118 = vadd.f32 %v2893, %v3117
  %v3119 = vpop.f32.mrf.mxu0
  %3120 = vmatprep.mubr.f32.mxu0 0.0
  %3121 = vmatmul.mubr.f32.gmra.mxu0 %v2981
  %v3122 = vpop.f32.mrf.mxu0
  %v3123 = vadd.f32 %v2898, %v3122
  %v3124 = vpop.f32.mrf.mxu0
  %3125 = vmatprep.mubr.f32.mxu0 0.0
  %3126 = vmatmul.mubr.f32.gmra.mxu0 %v2984
  %v3127 = vpop.f32.mrf.mxu0
  %v3128 = vadd.f32 %v2903, %v3127
  %v3129 = vpop.f32.mrf.mxu0
  %3130 = vmatprep.mubr.f32.mxu0 0.0
  %3131 = vmatmul.mubr.f32.gmra.mxu0 %v2987
  %v3132 = vpop.f32.mrf.mxu0
  %v3133 = vadd.f32 %v2908, %v3132
  %v3134 = vpop.f32.mrf.mxu0
  %3135 = vmatprep.mubr.f32.mxu0 0.0
  %3136 = vmatmul.mubr.f32.gmra.mxu0 %v2990
  %v3137 = vpop.f32.mrf.mxu0
  %v3138 = vadd.f32 %v2913, %v3137
  %v3139 = vpop.f32.mrf.mxu0
  %3140 = vmatprep.mubr.f32.mxu0 0.0
  %3141 = vmatmul.mubr.f32.gmra.mxu0 %v2993
  %v3142 = vpop.f32.mrf.mxu0
  %v3143 = vadd.f32 %v2918, %v3142
  %v3144 = vpop.f32.mrf.mxu0
  %3145 = vmatprep.mubr.f32.mxu0 0.0
  %3146 = vmatmul.mubr.f32.gmra.mxu0 %v2996
  %v3147 = vpop.f32.mrf.mxu0
  %v3148 = vadd.f32 %v2923, %v3147
  %v3149 = vpop.f32.mrf.mxu0
  %3150 = vmatprep.mubr.f32.mxu0 0.0
  %3151 = vmatmul.mubr.f32.gmra.mxu0 %v2999
  %v3152 = vpop.f32.mrf.mxu0
  %v3153 = vadd.f32 %v2928, %v3152
  %v3154 = vpop.f32.mrf.mxu0
  %3155 = vmatprep.mubr.f32.mxu0 0.0
  %3156 = vmatmul.mubr.f32.gmra.mxu0 %v3002
  %v3157 = vpop.f32.mrf.mxu0
  %v3158 = vadd.f32 %v2933, %v3157
  %v3159 = vpop.f32.mrf.mxu0
  %3160 = vmatprep.mubr.f32.mxu0 0.0
  %3161 = vmatmul.mubr.f32.gmra.mxu0 %v3005
  %v3162 = vpop.f32.mrf.mxu0
  %v3163 = vadd.f32 %v2938, %v3162
  %v3164 = vpop.f32.mrf.mxu0
  %3165 = vmatprep.mubr.f32.mxu0 0.0
  %3166 = vmatmul.mubr.f32.gmra.mxu0 %v3008
  %v3167 = vpop.f32.mrf.mxu0
  %v3168 = vadd.f32 %v2943, %v3167
  %v3169 = vpop.f32.mrf.mxu0
  %3170 = vmatprep.mubr.f32.mxu0 0.0
  %3171 = vmatmul.mubr.f32.gmra.mxu0 %v3011
  %v3172 = vpop.f32.mrf.mxu0
  %v3173 = vadd.f32 %v2948, %v3172
  %v3174 = vpop.f32.mrf.mxu0
  %3175 = vmatprep.mubr.f32.mxu0 0.0
  %3176 = vmatmul.mubr.f32.gmra.mxu0 %v3014
  %v3177 = vpop.f32.mrf.mxu0
  %v3178 = vadd.f32 %v2953, %v3177
  %v3179 = vpop.f32.mrf.mxu0
  %3180 = vdwg.mxu0
  %v3181 = vadd.f32 %v3083, %v3108
  %v3182 = vadd.f32 %v3088, %v3113
  %v3183 = vadd.f32 %v3093, %v3118
  %v3184 = vadd.f32 %v3098, %v3123
  %v3185 = vadd.f32 %v3103, %v3128
  %v3186 = vadd.f32 %v3181, %v3133
  %v3187 = vadd.f32 %v3182, %v3138
  %v3188 = vadd.f32 %v3183, %v3143
  %v3189 = vadd.f32 %v3184, %v3148
  %v3190 = vadd.f32 %v3185, %v3153
  %v3191 = vadd.f32 %v3186, %v3158
  %v3192 = vadd.f32 %v3187, %v3163
  %v3193 = vadd.f32 %v3188, %v3168
  %v3194 = vadd.f32 %v3189, %v3173
  %v3195 = vadd.f32 %v3190, %v3178
  %v3196 = vmul.f32 %v3191, 0.25
  %v3197 = vmul.f32 %v3192, 0.25
  %v3198 = vmul.f32 %v3193, 0.25
  %v3199 = vmul.f32 %v3194, 0.25
  %v3200 = vmul.f32 %v3195, 0.25
  %v3201 = vmax.f32 %v3196, 1e-08
  %v3202 = vmax.f32 %v3197, 1e-08
  %v3203 = vmax.f32 %v3198, 1e-08
  %v3204 = vmax.f32 %v3199, 1e-08
  %v3205 = vmax.f32 %v3200, 1e-08
  %v3206 = vlog2.pop %v3201
  %v3207 = vmul.f32 %v3206, 0.6931472
  %v3208 = vlog2.pop %v3202
  %v3209 = vmul.f32 %v3208, 0.6931472
  %v3210 = vlog2.pop %v3203
  %v3211 = vmul.f32 %v3210, 0.6931472
  %v3212 = vlog2.pop %v3204
  %v3213 = vmul.f32 %v3212, 0.6931472
  %v3214 = vlog2.pop %v3205
  %v3215 = vmul.f32 %v3214, 0.6931472
  %v3216 = vmul.f32 %v3196, %v3207
  %v3217 = vmul.f32 %v3197, %v3209
  %v3218 = vmul.f32 %v3198, %v3211
  %v3219 = vmul.f32 %v3199, %v3213
  %v3220 = vmul.f32 %v3200, %v3215
  %v3221 = vsel %vm2278, %v3216, 0.0
  %v3222 = vsel %vm2278, %v3217, 0.0
  %v3223 = vadd.f32 %v3221, %v3222
  %v3224 = vsel %vm2278, %v3218, 0.0
  %v3225 = vadd.f32 %v3223, %v3224
  %v3226 = vsel %vm2278, %v3219, 0.0
  %v3227 = vadd.f32 %v3225, %v3226
  %v3228 = vsel %vm2278, %v3220, 0.0
  %v3229 = vadd.f32 %v3227, %v3228
  %3230 = vadd.xlane.f32.xlu0 %v3229
  %v3231 = vpop.xlane.xlu0 %3230
  %v3232 = vrot.slane %v3231, 4
  %v3233 = vadd.f32 %v3231, %v3232
  %v3234 = vrot.slane %v3233, 2
  %v3235 = vadd.f32 %v3233, %v3234
  %v3236 = vrot.slane %v3235, 1
  %v3237 = vadd.f32 %v3235, %v3236
  %s3238 = vtos %v3237
  %v3239 = vsub.f32 %v3083, %v3196
  %v3240 = vsub.f32 %v3088, %v3197
  %v3241 = vsub.f32 %v3093, %v3198
  %v3242 = vsub.f32 %v3098, %v3199
  %v3243 = vsub.f32 %v3103, %v3200
  %v3244 = vmul.f32 %v3239, %v3239
  %v3245 = vmul.f32 %v3240, %v3240
  %v3246 = vmul.f32 %v3241, %v3241
  %v3247 = vmul.f32 %v3242, %v3242
  %v3248 = vmul.f32 %v3243, %v3243
  %v3249 = vsel %vm2278, %v3244, 0.0
  %v3250 = vsel %vm2278, %v3245, 0.0
  %v3251 = vadd.f32 %v3249, %v3250
  %v3252 = vsel %vm2278, %v3246, 0.0
  %v3253 = vadd.f32 %v3251, %v3252
  %v3254 = vsel %vm2278, %v3247, 0.0
  %v3255 = vadd.f32 %v3253, %v3254
  %v3256 = vsel %vm2278, %v3248, 0.0
  %v3257 = vadd.f32 %v3255, %v3256
  %3258 = vadd.xlane.f32.xlu0 %v3257
  %v3259 = vpop.xlane.xlu0 %3258
  %v3260 = vrot.slane %v3259, 4
  %v3261 = vadd.f32 %v3259, %v3260
  %v3262 = vrot.slane %v3261, 2
  %v3263 = vadd.f32 %v3261, %v3262
  %v3264 = vrot.slane %v3263, 1
  %v3265 = vadd.f32 %v3263, %v3264
  %s3266 = vtos %v3265
  %s3267 = sadd.f32 %s2414, %s3266
  %v3268 = vsub.f32 %v3108, %v3196
  %v3269 = vsub.f32 %v3113, %v3197
  %v3270 = vsub.f32 %v3118, %v3198
  %v3271 = vsub.f32 %v3123, %v3199
  %v3272 = vsub.f32 %v3128, %v3200
  %v3273 = vmul.f32 %v3268, %v3268
  %v3274 = vmul.f32 %v3269, %v3269
  %v3275 = vmul.f32 %v3270, %v3270
  %v3276 = vmul.f32 %v3271, %v3271
  %v3277 = vmul.f32 %v3272, %v3272
  %v3278 = vsel %vm2278, %v3273, 0.0
  %v3279 = vsel %vm2278, %v3274, 0.0
  %v3280 = vadd.f32 %v3278, %v3279
  %v3281 = vsel %vm2278, %v3275, 0.0
  %v3282 = vadd.f32 %v3280, %v3281
  %v3283 = vsel %vm2278, %v3276, 0.0
  %v3284 = vadd.f32 %v3282, %v3283
  %v3285 = vsel %vm2278, %v3277, 0.0
  %v3286 = vadd.f32 %v3284, %v3285
  %3287 = vadd.xlane.f32.xlu0 %v3286
  %v3288 = vpop.xlane.xlu0 %3287
  %v3289 = vrot.slane %v3288, 4
  %v3290 = vadd.f32 %v3288, %v3289
  %v3291 = vrot.slane %v3290, 2
  %v3292 = vadd.f32 %v3290, %v3291
  %v3293 = vrot.slane %v3292, 1
  %v3294 = vadd.f32 %v3292, %v3293
  %s3295 = vtos %v3294
  %s3296 = sadd.f32 %s3267, %s3295
  %v3297 = vsub.f32 %v3133, %v3196
  %v3298 = vsub.f32 %v3138, %v3197
  %v3299 = vsub.f32 %v3143, %v3198
  %v3300 = vsub.f32 %v3148, %v3199
  %v3301 = vsub.f32 %v3153, %v3200
  %v3302 = vmul.f32 %v3297, %v3297
  %v3303 = vmul.f32 %v3298, %v3298
  %v3304 = vmul.f32 %v3299, %v3299
  %v3305 = vmul.f32 %v3300, %v3300
  %v3306 = vmul.f32 %v3301, %v3301
  %v3307 = vsel %vm2278, %v3302, 0.0
  %v3308 = vsel %vm2278, %v3303, 0.0
  %v3309 = vadd.f32 %v3307, %v3308
  %v3310 = vsel %vm2278, %v3304, 0.0
  %v3311 = vadd.f32 %v3309, %v3310
  %v3312 = vsel %vm2278, %v3305, 0.0
  %v3313 = vadd.f32 %v3311, %v3312
  %v3314 = vsel %vm2278, %v3306, 0.0
  %v3315 = vadd.f32 %v3313, %v3314
  %3316 = vadd.xlane.f32.xlu0 %v3315
  %v3317 = vpop.xlane.xlu0 %3316
  %v3318 = vrot.slane %v3317, 4
  %v3319 = vadd.f32 %v3317, %v3318
  %v3320 = vrot.slane %v3319, 2
  %v3321 = vadd.f32 %v3319, %v3320
  %v3322 = vrot.slane %v3321, 1
  %v3323 = vadd.f32 %v3321, %v3322
  %s3324 = vtos %v3323
  %s3325 = sadd.f32 %s3296, %s3324
  %v3326 = vsub.f32 %v3158, %v3196
  %v3327 = vsub.f32 %v3163, %v3197
  %v3328 = vsub.f32 %v3168, %v3198
  %v3329 = vsub.f32 %v3173, %v3199
  %v3330 = vsub.f32 %v3178, %v3200
  %v3331 = vmul.f32 %v3326, %v3326
  %v3332 = vmul.f32 %v3327, %v3327
  %v3333 = vmul.f32 %v3328, %v3328
  %v3334 = vmul.f32 %v3329, %v3329
  %v3335 = vmul.f32 %v3330, %v3330
  %v3336 = vsel %vm2278, %v3331, 0.0
  %v3337 = vsel %vm2278, %v3332, 0.0
  %v3338 = vadd.f32 %v3336, %v3337
  %v3339 = vsel %vm2278, %v3333, 0.0
  %v3340 = vadd.f32 %v3338, %v3339
  %v3341 = vsel %vm2278, %v3334, 0.0
  %v3342 = vadd.f32 %v3340, %v3341
  %v3343 = vsel %vm2278, %v3335, 0.0
  %v3344 = vadd.f32 %v3342, %v3343
  %3345 = vadd.xlane.f32.xlu0 %v3344
  %v3346 = vpop.xlane.xlu0 %3345
  %v3347 = vrot.slane %v3346, 4
  %v3348 = vadd.f32 %v3346, %v3347
  %v3349 = vrot.slane %v3348, 2
  %v3350 = vadd.f32 %v3348, %v3349
  %v3351 = vrot.slane %v3350, 1
  %v3352 = vadd.f32 %v3350, %v3351
  %s3353 = vtos %v3352
  %s3354 = sadd.f32 %s3325, %s3353
  %s3355 = sadd.f32 %s685, %s2309
  %s3356 = sadd.f32 %s3355, %s3238
  %v3357 = vlaneseq
  %v3358 = vand.u32 %v3357, 127
  %vm3359 = vcmp.eq.s32.totalorder %v3358, 0
  %vm3360 = vcmp.eq.s32.totalorder %v3358, 1
  %v3361 = vstv %s3354
  %v3362 = vsel %vm3360, %v3361, 0.0
  %v3363 = vstv %s3356
  %v3364 = vsel %vm3359, %v3363, %v3362
  %3365 = vst [vmem:[%s22] sm:$0x1] %v3364
  // Predicated region
  $region86: #{run.1} parent=0 // pred_check
    _
  $region87: #{run.1} parent=0 // pred_check_branch
    %3367 = sbr.rel (0) target = $region89
  $region88: #{run.1} parent=0 // pred_region
    _
  $region89: #{run.1} parent=0 // pred_fallthru
    _
  // Predicated region
  $region90: #{run.1} parent=0 // pred_check
    _
  $region91: #{run.1} parent=0 // pred_check_branch
    %3369 = sbr.rel (0) target = $region93
  $region92: #{run.1} parent=0 // pred_region
    _
  $region93: #{run.1} parent=0 // pred_fallthru
    _
  // Predicated region
  $region94: #{run.1} parent=0 // pred_check
    _
  $region95: #{run.1} parent=0 // pred_check_branch
    %3371 = sbr.rel (0) target = $region97
  $region96: #{run.1} parent=0 // pred_region
    _
  $region97: #{run.1} parent=0 // pred_fallthru
    _
  // Predicated region
  $region98: #{run.1} parent=0 // pred_check
    _
  $region99: #{run.1} parent=0 // pred_check_branch
    %3373 = sbr.rel (0) target = $region101
  $region100: #{run.1} parent=0 // pred_region
    _
  $region101: #{run.1} parent=0 // pred_fallthru
    _

</llo_original>
